<compile_context>
chip_gen: v7x
topology: tpu7x:2x2x1
jax: 0.10.0
libtpu: 0.0.40
codegen_flags: <defaults>
</compile_context>

<pallas_src>
import math

import jax
import jax.numpy as jnp
from jax import lax
from jax.experimental import pallas as pl
from jax.experimental.pallas import tpu as pltpu

BN_EPS = 1e-5
# Tap order == kh*3 + kw (matches the (O, KH, KW, I) weight flattening).
_OFFSETS = tuple((dy, dx) for dy in (-1, 0, 1) for dx in (-1, 0, 1))


def _make_stem_kernel(N, Ho, Wo, Cin, C1, C2):
    NHW = N * Ho * Wo
    INV_NHW = 1.0 / NHW

    def lane_shift(slab, off):
        # result[:, p] = slab[:, p + off] (cyclic).  Static-shift roll lowers
        # to lane shifts on the XLU slot; wrapped values are always masked by
        # the boundary predicates below.  (pltpu.roll(slab, -off, axis=1) is
        # the direct single-rotate hardware op.)
        if off == 0:
            return slab
        return jnp.roll(slab, shift=-off, axis=1)

    def kernel(x_ph_ref, pos_ref, w1_ref, w2_ref, w3_ref, wd1_ref, wd2_ref,
               bnp_ref, o_ref):
        # ---- hoisted per-pixel boundary masks, (1, NHW), computed once ----
        ypos = pos_ref[0:1, :]
        xpos = pos_ref[1:2, :]
        not_top = ypos > 0
        not_bot = ypos < Ho - 1
        not_left = xpos > 0
        not_right = xpos < Wo - 1

        def combine(a, b):
            if a is None:
                return b
            if b is None:
                return a
            return jnp.logical_and(a, b)

        tap_mask = {}
        for dy, dx in _OFFSETS:
            my = {-1: not_top, 0: None, 1: not_bot}[dy]
            mx = {-1: not_left, 0: None, 1: not_right}[dx]
            tap_mask[(dy, dx)] = combine(my, mx)

        def masked(slab, m):
            return slab if m is None else jnp.where(m, slab, 0.0)

        def bn_relu(y, g, b):
            # Train-mode BN (biased variance) + ReLU.  Two-pass (centered)
            # variance avoids E[x^2]-E[x]^2 cancellation.  The lane-axis sums
            # could be offloaded to the MXU (dot with a ones column) if the
            # XLU ever becomes the saturating slot.
            mean = jnp.sum(y, axis=1, keepdims=True) * INV_NHW      # (C, 1)
            c = y - mean
            var = jnp.sum(c * c, axis=1, keepdims=True) * INV_NHW
            scale = g * lax.rsqrt(var + BN_EPS)
            return jnp.maximum(c * scale + b, 0.0)

        def conv3x3(src, w, g, b):
            # One big-K f32 matmul: (Cout, 9*Cin) @ (9*Cin, NHW).
            slabs = [masked(lane_shift(src, dy * Wo + dx), tap_mask[(dy, dx)])
                     for dy, dx in _OFFSETS]
            cols = jnp.concatenate(slabs, axis=0)
            y = jnp.dot(w, cols, preferred_element_type=jnp.float32,
                        precision=lax.Precision.HIGHEST)
            return bn_relu(y, g, b)

        def dwconv3x3(src, wd, g, b):
            # Depthwise 3x3: 9 masked lane-shifted slabs, per-channel FMA (VPU).
            acc = None
            for k, (dy, dx) in enumerate(_OFFSETS):
                slab = masked(lane_shift(src, dy * Wo + dx), tap_mask[(dy, dx)])
                term = slab * wd[:, k:k + 1]
                acc = term if acc is None else acc + term
            return bn_relu(acc, g, b)

        # ---- packed BN params (C2, 10) = [g1 b1 g2 b2 g3 b3 gd1 bd1 gd2 bd2]
        bnp = bnp_ref[...]
        g1, b1 = bnp[:C1, 0:1], bnp[:C1, 1:2]
        g2, b2 = bnp[:, 2:3], bnp[:, 3:4]
        g3, b3 = bnp[:, 4:5], bnp[:, 5:6]
        gd1, bd1 = bnp[:, 6:7], bnp[:, 7:8]
        gd2, bd2 = bnp[:, 8:9], bnp[:, 9:10]

        # ---- conv1 (3x3, stride 2): in-kernel im2col from the 4-phase input.
        # Phase (py, px) holds x[.., 2*yo+py, 2*xo+px]; tap (dy, dx) is a
        # lane shift of one phase slab by {0, -1, -Wo, -Wo-1}.
        x_ph = x_ph_ref[...]                                 # (4*Cin, NHW)
        slabs = []
        for dy, dx in _OFFSETS:
            py = 0 if dy == 0 else 1
            px = 0 if dx == 0 else 1
            oy = -1 if dy == -1 else 0
            ox = -1 if dx == -1 else 0
            ph = py * 2 + px
            slab = lane_shift(x_ph[ph * Cin:(ph + 1) * Cin, :], oy * Wo + ox)
            m = combine(not_top if oy == -1 else None,
                        not_left if ox == -1 else None)
            slabs.append(masked(slab, m))
        cols1 = jnp.concatenate(slabs, axis=0)               # (9*Cin, NHW)
        y1 = bn_relu(jnp.dot(w1_ref[...], cols1,
                             preferred_element_type=jnp.float32,
                             precision=lax.Precision.HIGHEST), g1, b1)

        # ---- conv2, conv3 (stride 1) ----
        y2 = conv3x3(y1, w2_ref[...], g2, b2)
        y3 = conv3x3(y2, w3_ref[...], g3, b3)                # identity

        # ---- depthwise 1 & 2 + residual ----
        y4 = dwconv3x3(y3, wd1_ref[...], gd1, bd1)
        y5 = dwconv3x3(y4, wd2_ref[...], gd2, bd2)

        # Lane-dense writeback: (C2, NHW), pixels on the lane axis.
        o_ref[...] = y5 + y3

    return kernel


def _derive_vmem_limit_bytes():
    # Per-generation VMEM budget (v5e/v6e: 128 MiB, v7x: 64 MiB) with headroom
    # for double-buffered I/O tiles once the kernel is gridded.
    try:
        cap = getattr(pltpu.get_tpu_info(), "vmem_capacity_bytes", 64 * 2**20)
    except Exception:  # e.g. interpret mode on a non-TPU host
        cap = 64 * 2**20
    return int(min(max(cap * 3 // 4, 32 * 2**20), 96 * 2**20))


@jax.jit
def stem_forward(x_nchw, params):
    N, Cin, H, W = x_nchw.shape
    C1 = params["w1"].shape[0]
    C2 = params["w2"].shape[0]
    assert H % 2 == 0 and W % 2 == 0, "stride-2 phase decomposition needs even H, W"
    Ho, Wo = H // 2, W // 2
    NHW = N * Ho * Wo

    x = x_nchw.astype(jnp.float32)
    # 4-phase repack (even/odd row x even/odd col) -> (4*Cin, NHW).
    # Same total bytes as the input: no 9x im2col expansion in HBM.
    phases = []
    for py in (0, 1):
        for px in (0, 1):
            ph = x[:, :, py::2, px::2]                       # (N, Cin, Ho, Wo)
            phases.append(jnp.transpose(ph, (1, 0, 2, 3)).reshape(Cin, NHW))
    x_ph = jnp.concatenate(phases, axis=0)                   # (4*Cin, NHW)

    # Per-pixel (y, x) indices for boundary masks, lane-dense (2, NHW) int32.
    pidx = jnp.arange(NHW, dtype=jnp.int32)
    pos = jnp.stack([(pidx // Wo) % Ho, pidx % Wo], axis=0)

    # Weights: OIHW -> (O, 9*I), tap-major / channel-minor columns (matches the
    # in-kernel sublane concat order).  Depthwise weights -> (C2, 9).
    w1f = jnp.transpose(params["w1"], (0, 2, 3, 1)).reshape(C1, 9 * Cin).astype(jnp.float32)
    w2f = jnp.transpose(params["w2"], (0, 2, 3, 1)).reshape(C2, 9 * C1).astype(jnp.float32)
    w3f = jnp.transpose(params["w3"], (0, 2, 3, 1)).reshape(C2, 9 * C2).astype(jnp.float32)
    wd1f = params["wd1"].reshape(C2, 9).astype(jnp.float32)
    wd2f = params["wd2"].reshape(C2, 9).astype(jnp.float32)

    # Pack the ten BN gamma/beta vectors into one (C2, 10) array (single DMA).
    def col(p):
        v = p.astype(jnp.float32).reshape(-1, 1)
        return jnp.pad(v, ((0, C2 - v.shape[0]), (0, 0)))
    bnp = jnp.concatenate(
        [col(params[k]) for k in ("g1", "b1", "g2", "b2", "g3", "b3",
                                  "gd1", "bd1", "gd2", "bd2")], axis=1)

    kernel = _make_stem_kernel(N, Ho, Wo, Cin, C1, C2)
    out_t = pl.pallas_call(
        kernel,
        out_shape=jax.ShapeDtypeStruct((C2, NHW), jnp.float32),
        in_specs=[pl.BlockSpec(memory_space=pltpu.MemorySpace.VMEM)] * 8,
        out_specs=pl.BlockSpec(memory_space=pltpu.MemorySpace.VMEM),
        compiler_params=pltpu.CompilerParams(
            vmem_limit_bytes=_derive_vmem_limit_bytes()),
    )(x_ph, pos, w1f, w2f, w3f, wd1f, wd2f, bnp)

    # (C2, N*Ho*Wo) -> NCHW
    return jnp.transpose(out_t.reshape(C2, N, Ho, Wo), (1, 0, 2, 3))


def init_stem_params(key, in_channels=3, out_channels=32):
    """Deterministic synthetic parameters, shapes matching the PyTorch module."""
    c1, c2 = out_channels // 2, out_channels
    keys = jax.random.split(key, 16)

    def conv_w(k, co, ci):
        bound = 1.0 / math.sqrt(ci * 9)
        return jax.random.uniform(k, (co, ci, 3, 3), jnp.float32, -bound, bound)

    p = {
        "w1": conv_w(keys[0], c1, in_channels),
        "w2": conv_w(keys[1], c2, c1),
        "w3": conv_w(keys[2], c2, c2),
        "wd1": conv_w(keys[3], c2, 1),
        "wd2": conv_w(keys[4], c2, 1),
    }
    for i, (n, c) in enumerate(zip(["1", "2", "3", "d1", "d2"],
                                   [c1, c2, c2, c2, c2])):
        p["g" + n] = 1.0 + 0.1 * jax.random.normal(keys[5 + 2 * i], (c,), jnp.float32)
        p["b" + n] = 0.1 * jax.random.normal(keys[6 + 2 * i], (c,), jnp.float32)
    return p


def stem_reference(x_nchw, params):
    """Pure-JAX reference (lax conv, f32/HIGHEST) with train-mode BN semantics."""
    x = jnp.transpose(x_nchw, (0, 2, 3, 1)).astype(jnp.float32)

    def conv(x, w, stride, groups=1):
        return lax.conv_general_dilated(
            x, jnp.transpose(w, (2, 3, 1, 0)),
            window_strides=(stride, stride), padding=((1, 1), (1, 1)),
            dimension_numbers=("NHWC", "HWIO", "NHWC"),
            feature_group_count=groups,
            precision=lax.Precision.HIGHEST)

    def bn_relu(x, g, b):
        mean = jnp.mean(x, axis=(0, 1, 2), keepdims=True)
        var = jnp.mean((x - mean) ** 2, axis=(0, 1, 2), keepdims=True)
        return jnp.maximum((x - mean) * lax.rsqrt(var + BN_EPS) * g + b, 0.0)

    x = bn_relu(conv(x, params["w1"], 2), params["g1"], params["b1"])
    x = bn_relu(conv(x, params["w2"], 1), params["g2"], params["b2"])
    x = bn_relu(conv(x, params["w3"], 1), params["g3"], params["b3"])
    identity = x
    C = x.shape[-1]
    x = bn_relu(conv(x, params["wd1"], 1, groups=C), params["gd1"], params["bd1"])
    x = bn_relu(conv(x, params["wd2"], 1, groups=C), params["gd2"], params["bd2"])
    return jnp.transpose(x + identity, (0, 3, 1, 2))


if __name__ == "__main__":
    key = jax.random.PRNGKey(0)
    kx, kp = jax.random.split(key)
    # Small shapes: batch=2, in_channels=3, spatial=16x16, out_channels=32.
    x = jax.random.normal(kx, (2, 3, 16, 16), jnp.float32)
    params = init_stem_params(kp, in_channels=3, out_channels=32)

    out = jax.block_until_ready(stem_forward(x, params))
    assert out.shape == (2, 32, 8, 8), out.shape

    ref = stem_reference(x, params)
    max_err = float(jnp.max(jnp.abs(out - ref)))
    if not jnp.allclose(out, ref, atol=2e-2, rtol=2e-2):
        raise AssertionError(f"kernel/reference mismatch, max_err={max_err}")

    print("KERNEL_OK")
</pallas_src>

<mosaic_0001>
module attributes {stable_mosaic.version = 11 : i64} {
  func.func @kernel(%arg0: memref<12x128xf32, #tpu.memory_space<vmem>>, %arg1: memref<2x128xi32, #tpu.memory_space<vmem>>, %arg2: memref<16x27xf32, #tpu.memory_space<vmem>>, %arg3: memref<32x144xf32, #tpu.memory_space<vmem>>, %arg4: memref<32x288xf32, #tpu.memory_space<vmem>>, %arg5: memref<32x9xf32, #tpu.memory_space<vmem>>, %arg6: memref<32x9xf32, #tpu.memory_space<vmem>>, %arg7: memref<32x10xf32, #tpu.memory_space<vmem>>, %arg8: memref<32x128xf32, #tpu.memory_space<vmem>>) attributes {dimension_semantics = [], scalar_prefetch = 0 : i64, scratch_operands = 0 : i64, tpu.core_type = #tpu.core_type<tc>} {
    %c0 = arith.constant 0 : index
    %c0_0 = arith.constant 0 : index
    %0 = vector.load %arg1[%c0, %c0_0] : memref<2x128xi32, #tpu.memory_space<vmem>>, vector<1x128xi32>
    %c1 = arith.constant 1 : index
    %c0_1 = arith.constant 0 : index
    %1 = vector.load %arg1[%c1, %c0_1] : memref<2x128xi32, #tpu.memory_space<vmem>>, vector<1x128xi32>
    %c0_i32 = arith.constant 0 : i32
    %2 = vector.broadcast %c0_i32 : i32 to vector<1x128xi32>
    %3 = arith.cmpi sgt, %0, %2 : vector<1x128xi32>
    %c7_i32 = arith.constant 7 : i32
    %4 = vector.broadcast %c7_i32 : i32 to vector<1x128xi32>
    %5 = arith.cmpi slt, %0, %4 : vector<1x128xi32>
    %c0_i32_2 = arith.constant 0 : i32
    %6 = vector.broadcast %c0_i32_2 : i32 to vector<1x128xi32>
    %7 = arith.cmpi sgt, %1, %6 : vector<1x128xi32>
    %c7_i32_3 = arith.constant 7 : i32
    %8 = vector.broadcast %c7_i32_3 : i32 to vector<1x128xi32>
    %9 = arith.cmpi slt, %1, %8 : vector<1x128xi32>
    %10 = arith.andi %3, %7 : vector<1x128xi1>
    %11 = arith.andi %3, %9 : vector<1x128xi1>
    %12 = arith.andi %5, %7 : vector<1x128xi1>
    %13 = arith.andi %5, %9 : vector<1x128xi1>
    %c0_4 = arith.constant 0 : index
    %c0_5 = arith.constant 0 : index
    %14 = vector.load %arg7[%c0_4, %c0_5] : memref<32x10xf32, #tpu.memory_space<vmem>>, vector<32x10xf32>
    %15 = vector.extract_strided_slice %14 {offsets = [0, 0], sizes = [16, 1], strides = [1, 1]} : vector<32x10xf32> to vector<16x1xf32>
    %16 = vector.extract_strided_slice %14 {offsets = [0, 1], sizes = [16, 1], strides = [1, 1]} : vector<32x10xf32> to vector<16x1xf32>
    %17 = vector.extract_strided_slice %14 {offsets = [0, 2], sizes = [32, 1], strides = [1, 1]} : vector<32x10xf32> to vector<32x1xf32>
    %18 = vector.extract_strided_slice %14 {offsets = [0, 3], sizes = [32, 1], strides = [1, 1]} : vector<32x10xf32> to vector<32x1xf32>
    %19 = vector.extract_strided_slice %14 {offsets = [0, 4], sizes = [32, 1], strides = [1, 1]} : vector<32x10xf32> to vector<32x1xf32>
    %20 = vector.extract_strided_slice %14 {offsets = [0, 5], sizes = [32, 1], strides = [1, 1]} : vector<32x10xf32> to vector<32x1xf32>
    %21 = vector.extract_strided_slice %14 {offsets = [0, 6], sizes = [32, 1], strides = [1, 1]} : vector<32x10xf32> to vector<32x1xf32>
    %22 = vector.extract_strided_slice %14 {offsets = [0, 7], sizes = [32, 1], strides = [1, 1]} : vector<32x10xf32> to vector<32x1xf32>
    %23 = vector.extract_strided_slice %14 {offsets = [0, 8], sizes = [32, 1], strides = [1, 1]} : vector<32x10xf32> to vector<32x1xf32>
    %24 = vector.extract_strided_slice %14 {offsets = [0, 9], sizes = [32, 1], strides = [1, 1]} : vector<32x10xf32> to vector<32x1xf32>
    %c0_6 = arith.constant 0 : index
    %c0_7 = arith.constant 0 : index
    %25 = vector.load %arg0[%c0_6, %c0_7] : memref<12x128xf32, #tpu.memory_space<vmem>>, vector<12x128xf32>
    %26 = vector.extract_strided_slice %25 {offsets = [9, 0], sizes = [3, 128], strides = [1, 1]} : vector<12x128xf32> to vector<3x128xf32>
    %27 = vector.extract_strided_slice %26 {offsets = [0, 119], sizes = [3, 9], strides = [1, 1]} : vector<3x128xf32> to vector<3x9xf32>
    %28 = vector.extract_strided_slice %26 {offsets = [0, 0], sizes = [3, 119], strides = [1, 1]} : vector<3x128xf32> to vector<3x119xf32>
    %29 = tpu.concatenate %27, %28 in 1 : vector<3x9xf32>, vector<3x119xf32> -> vector<3x128xf32>
    %30 = arith.andi %3, %7 : vector<1x128xi1>
    %cst = arith.constant 0.000000e+00 : f32
    %31 = vector.shape_cast %30 : vector<1x128xi1> to vector<1x128xi1>
    %32 = vector.broadcast %31 : vector<1x128xi1> to vector<3x128xi1>
    %33 = vector.broadcast %cst : f32 to vector<3x128xf32>
    %34 = arith.select %32, %29, %33 : vector<3x128xi1>, vector<3x128xf32>
    %35 = vector.extract_strided_slice %25 {offsets = [6, 0], sizes = [3, 128], strides = [1, 1]} : vector<12x128xf32> to vector<3x128xf32>
    %36 = vector.extract_strided_slice %35 {offsets = [0, 120], sizes = [3, 8], strides = [1, 1]} : vector<3x128xf32> to vector<3x8xf32>
    %37 = vector.extract_strided_slice %35 {offsets = [0, 0], sizes = [3, 120], strides = [1, 1]} : vector<3x128xf32> to vector<3x120xf32>
    %38 = tpu.concatenate %36, %37 in 1 : vector<3x8xf32>, vector<3x120xf32> -> vector<3x128xf32>
    %cst_8 = arith.constant 0.000000e+00 : f32
    %39 = vector.shape_cast %3 : vector<1x128xi1> to vector<1x128xi1>
    %40 = vector.broadcast %39 : vector<1x128xi1> to vector<3x128xi1>
    %41 = vector.broadcast %cst_8 : f32 to vector<3x128xf32>
    %42 = arith.select %40, %38, %41 : vector<3x128xi1>, vector<3x128xf32>
    %43 = vector.extract_strided_slice %25 {offsets = [9, 0], sizes = [3, 128], strides = [1, 1]} : vector<12x128xf32> to vector<3x128xf32>
    %44 = vector.extract_strided_slice %43 {offsets = [0, 120], sizes = [3, 8], strides = [1, 1]} : vector<3x128xf32> to vector<3x8xf32>
    %45 = vector.extract_strided_slice %43 {offsets = [0, 0], sizes = [3, 120], strides = [1, 1]} : vector<3x128xf32> to vector<3x120xf32>
    %46 = tpu.concatenate %44, %45 in 1 : vector<3x8xf32>, vector<3x120xf32> -> vector<3x128xf32>
    %cst_9 = arith.constant 0.000000e+00 : f32
    %47 = vector.shape_cast %3 : vector<1x128xi1> to vector<1x128xi1>
    %48 = vector.broadcast %47 : vector<1x128xi1> to vector<3x128xi1>
    %49 = vector.broadcast %cst_9 : f32 to vector<3x128xf32>
    %50 = arith.select %48, %46, %49 : vector<3x128xi1>, vector<3x128xf32>
    %51 = vector.extract_strided_slice %25 {offsets = [3, 0], sizes = [3, 128], strides = [1, 1]} : vector<12x128xf32> to vector<3x128xf32>
    %52 = vector.extract_strided_slice %51 {offsets = [0, 127], sizes = [3, 1], strides = [1, 1]} : vector<3x128xf32> to vector<3x1xf32>
    %53 = vector.extract_strided_slice %51 {offsets = [0, 0], sizes = [3, 127], strides = [1, 1]} : vector<3x128xf32> to vector<3x127xf32>
    %54 = tpu.concatenate %52, %53 in 1 : vector<3x1xf32>, vector<3x127xf32> -> vector<3x128xf32>
    %cst_10 = arith.constant 0.000000e+00 : f32
    %55 = vector.shape_cast %7 : vector<1x128xi1> to vector<1x128xi1>
    %56 = vector.broadcast %55 : vector<1x128xi1> to vector<3x128xi1>
    %57 = vector.broadcast %cst_10 : f32 to vector<3x128xf32>
    %58 = arith.select %56, %54, %57 : vector<3x128xi1>, vector<3x128xf32>
    %59 = vector.extract_strided_slice %25 {offsets = [0, 0], sizes = [3, 128], strides = [1, 1]} : vector<12x128xf32> to vector<3x128xf32>
    %60 = vector.extract_strided_slice %25 {offsets = [3, 0], sizes = [3, 128], strides = [1, 1]} : vector<12x128xf32> to vector<3x128xf32>
    %61 = vector.extract_strided_slice %25 {offsets = [9, 0], sizes = [3, 128], strides = [1, 1]} : vector<12x128xf32> to vector<3x128xf32>
    %62 = vector.extract_strided_slice %61 {offsets = [0, 127], sizes = [3, 1], strides = [1, 1]} : vector<3x128xf32> to vector<3x1xf32>
    %63 = vector.extract_strided_slice %61 {offsets = [0, 0], sizes = [3, 127], strides = [1, 1]} : vector<3x128xf32> to vector<3x127xf32>
    %64 = tpu.concatenate %62, %63 in 1 : vector<3x1xf32>, vector<3x127xf32> -> vector<3x128xf32>
    %cst_11 = arith.constant 0.000000e+00 : f32
    %65 = vector.shape_cast %7 : vector<1x128xi1> to vector<1x128xi1>
    %66 = vector.broadcast %65 : vector<1x128xi1> to vector<3x128xi1>
    %67 = vector.broadcast %cst_11 : f32 to vector<3x128xf32>
    %68 = arith.select %66, %64, %67 : vector<3x128xi1>, vector<3x128xf32>
    %69 = vector.extract_strided_slice %25 {offsets = [6, 0], sizes = [3, 128], strides = [1, 1]} : vector<12x128xf32> to vector<3x128xf32>
    %70 = vector.extract_strided_slice %25 {offsets = [9, 0], sizes = [3, 128], strides = [1, 1]} : vector<12x128xf32> to vector<3x128xf32>
    %71 = tpu.concatenate %34, %42, %50, %58, %59, %60, %68, %69, %70 in 0 : vector<3x128xf32>, vector<3x128xf32>, vector<3x128xf32>, vector<3x128xf32>, vector<3x128xf32>, vector<3x128xf32>, vector<3x128xf32>, vector<3x128xf32>, vector<3x128xf32> -> vector<27x128xf32>
    %c0_12 = arith.constant 0 : index
    %c0_13 = arith.constant 0 : index
    %72 = vector.load %arg2[%c0_12, %c0_13] : memref<16x27xf32, #tpu.memory_space<vmem>>, vector<16x27xf32>
    %cst_14 = arith.constant dense<0.000000e+00> : vector<16x128xf32>
    %73 = tpu.matmul %72, %71, %cst_14 {dimension_numbers = #tpu.dot_dimension_numbers<[1], [0], [0], [1], [0, 0, 1, 1], [], []>, precision = #tpu.contract_precision<fp32>} : vector<16x27xf32>, vector<27x128xf32>, vector<16x128xf32> -> vector<16x128xf32>
    %cst_15 = arith.constant dense<0.000000e+00> : vector<16xf32>
    %74 = vector.multi_reduction <add>, %73, %cst_15 [1] : vector<16x128xf32> to vector<16xf32>
    %75 = vector.shape_cast %74 : vector<16xf32> to vector<16x1xf32>
    %cst_16 = arith.constant 7.812500e-03 : f32
    %76 = vector.broadcast %cst_16 : f32 to vector<16x1xf32>
    %77 = arith.mulf %75, %76 : vector<16x1xf32>
    %78 = vector.broadcast %77 : vector<16x1xf32> to vector<16x128xf32>
    %79 = arith.subf %73, %78 : vector<16x128xf32>
    %80 = arith.mulf %79, %79 : vector<16x128xf32>
    %cst_17 = arith.constant dense<0.000000e+00> : vector<16xf32>
    %81 = vector.multi_reduction <add>, %80, %cst_17 [1] : vector<16x128xf32> to vector<16xf32>
    %82 = vector.shape_cast %81 : vector<16xf32> to vector<16x1xf32>
    %cst_18 = arith.constant 7.812500e-03 : f32
    %83 = vector.broadcast %cst_18 : f32 to vector<16x1xf32>
    %84 = arith.mulf %82, %83 : vector<16x1xf32>
    %cst_19 = arith.constant 9.99999974E-6 : f32
    %85 = vector.broadcast %cst_19 : f32 to vector<16x1xf32>
    %86 = arith.addf %84, %85 : vector<16x1xf32>
    %87 = math.rsqrt %86 : vector<16x1xf32>
    %88 = arith.mulf %15, %87 : vector<16x1xf32>
    %89 = vector.broadcast %88 : vector<16x1xf32> to vector<16x128xf32>
    %90 = arith.mulf %79, %89 : vector<16x128xf32>
    %91 = vector.broadcast %16 : vector<16x1xf32> to vector<16x128xf32>
    %92 = arith.addf %90, %91 : vector<16x128xf32>
    %cst_20 = arith.constant 0.000000e+00 : f32
    %93 = vector.broadcast %cst_20 : f32 to vector<16x128xf32>
    %94 = arith.maximumf %92, %93 : vector<16x128xf32>
    %c0_21 = arith.constant 0 : index
    %c0_22 = arith.constant 0 : index
    %95 = vector.load %arg3[%c0_21, %c0_22] : memref<32x144xf32, #tpu.memory_space<vmem>>, vector<32x144xf32>
    %96 = vector.extract_strided_slice %94 {offsets = [0, 119], sizes = [16, 9], strides = [1, 1]} : vector<16x128xf32> to vector<16x9xf32>
    %97 = vector.extract_strided_slice %94 {offsets = [0, 0], sizes = [16, 119], strides = [1, 1]} : vector<16x128xf32> to vector<16x119xf32>
    %98 = tpu.concatenate %96, %97 in 1 : vector<16x9xf32>, vector<16x119xf32> -> vector<16x128xf32>
    %cst_23 = arith.constant 0.000000e+00 : f32
    %99 = vector.shape_cast %10 : vector<1x128xi1> to vector<1x128xi1>
    %100 = vector.broadcast %99 : vector<1x128xi1> to vector<16x128xi1>
    %101 = vector.broadcast %cst_23 : f32 to vector<16x128xf32>
    %102 = arith.select %100, %98, %101 : vector<16x128xi1>, vector<16x128xf32>
    %103 = vector.extract_strided_slice %94 {offsets = [0, 120], sizes = [16, 8], strides = [1, 1]} : vector<16x128xf32> to vector<16x8xf32>
    %104 = vector.extract_strided_slice %94 {offsets = [0, 0], sizes = [16, 120], strides = [1, 1]} : vector<16x128xf32> to vector<16x120xf32>
    %105 = tpu.concatenate %103, %104 in 1 : vector<16x8xf32>, vector<16x120xf32> -> vector<16x128xf32>
    %cst_24 = arith.constant 0.000000e+00 : f32
    %106 = vector.shape_cast %3 : vector<1x128xi1> to vector<1x128xi1>
    %107 = vector.broadcast %106 : vector<1x128xi1> to vector<16x128xi1>
    %108 = vector.broadcast %cst_24 : f32 to vector<16x128xf32>
    %109 = arith.select %107, %105, %108 : vector<16x128xi1>, vector<16x128xf32>
    %110 = vector.extract_strided_slice %94 {offsets = [0, 121], sizes = [16, 7], strides = [1, 1]} : vector<16x128xf32> to vector<16x7xf32>
    %111 = vector.extract_strided_slice %94 {offsets = [0, 0], sizes = [16, 121], strides = [1, 1]} : vector<16x128xf32> to vector<16x121xf32>
    %112 = tpu.concatenate %110, %111 in 1 : vector<16x7xf32>, vector<16x121xf32> -> vector<16x128xf32>
    %cst_25 = arith.constant 0.000000e+00 : f32
    %113 = vector.shape_cast %11 : vector<1x128xi1> to vector<1x128xi1>
    %114 = vector.broadcast %113 : vector<1x128xi1> to vector<16x128xi1>
    %115 = vector.broadcast %cst_25 : f32 to vector<16x128xf32>
    %116 = arith.select %114, %112, %115 : vector<16x128xi1>, vector<16x128xf32>
    %117 = vector.extract_strided_slice %94 {offsets = [0, 127], sizes = [16, 1], strides = [1, 1]} : vector<16x128xf32> to vector<16x1xf32>
    %118 = vector.extract_strided_slice %94 {offsets = [0, 0], sizes = [16, 127], strides = [1, 1]} : vector<16x128xf32> to vector<16x127xf32>
    %119 = tpu.concatenate %117, %118 in 1 : vector<16x1xf32>, vector<16x127xf32> -> vector<16x128xf32>
    %cst_26 = arith.constant 0.000000e+00 : f32
    %120 = vector.shape_cast %7 : vector<1x128xi1> to vector<1x128xi1>
    %121 = vector.broadcast %120 : vector<1x128xi1> to vector<16x128xi1>
    %122 = vector.broadcast %cst_26 : f32 to vector<16x128xf32>
    %123 = arith.select %121, %119, %122 : vector<16x128xi1>, vector<16x128xf32>
    %124 = vector.extract_strided_slice %94 {offsets = [0, 1], sizes = [16, 127], strides = [1, 1]} : vector<16x128xf32> to vector<16x127xf32>
    %125 = vector.extract_strided_slice %94 {offsets = [0, 0], sizes = [16, 1], strides = [1, 1]} : vector<16x128xf32> to vector<16x1xf32>
    %126 = tpu.concatenate %124, %125 in 1 : vector<16x127xf32>, vector<16x1xf32> -> vector<16x128xf32>
    %cst_27 = arith.constant 0.000000e+00 : f32
    %127 = vector.shape_cast %9 : vector<1x128xi1> to vector<1x128xi1>
    %128 = vector.broadcast %127 : vector<1x128xi1> to vector<16x128xi1>
    %129 = vector.broadcast %cst_27 : f32 to vector<16x128xf32>
    %130 = arith.select %128, %126, %129 : vector<16x128xi1>, vector<16x128xf32>
    %131 = vector.extract_strided_slice %94 {offsets = [0, 7], sizes = [16, 121], strides = [1, 1]} : vector<16x128xf32> to vector<16x121xf32>
    %132 = vector.extract_strided_slice %94 {offsets = [0, 0], sizes = [16, 7], strides = [1, 1]} : vector<16x128xf32> to vector<16x7xf32>
    %133 = tpu.concatenate %131, %132 in 1 : vector<16x121xf32>, vector<16x7xf32> -> vector<16x128xf32>
    %cst_28 = arith.constant 0.000000e+00 : f32
    %134 = vector.shape_cast %12 : vector<1x128xi1> to vector<1x128xi1>
    %135 = vector.broadcast %134 : vector<1x128xi1> to vector<16x128xi1>
    %136 = vector.broadcast %cst_28 : f32 to vector<16x128xf32>
    %137 = arith.select %135, %133, %136 : vector<16x128xi1>, vector<16x128xf32>
    %138 = vector.extract_strided_slice %94 {offsets = [0, 8], sizes = [16, 120], strides = [1, 1]} : vector<16x128xf32> to vector<16x120xf32>
    %139 = vector.extract_strided_slice %94 {offsets = [0, 0], sizes = [16, 8], strides = [1, 1]} : vector<16x128xf32> to vector<16x8xf32>
    %140 = tpu.concatenate %138, %139 in 1 : vector<16x120xf32>, vector<16x8xf32> -> vector<16x128xf32>
    %cst_29 = arith.constant 0.000000e+00 : f32
    %141 = vector.shape_cast %5 : vector<1x128xi1> to vector<1x128xi1>
    %142 = vector.broadcast %141 : vector<1x128xi1> to vector<16x128xi1>
    %143 = vector.broadcast %cst_29 : f32 to vector<16x128xf32>
    %144 = arith.select %142, %140, %143 : vector<16x128xi1>, vector<16x128xf32>
    %145 = vector.extract_strided_slice %94 {offsets = [0, 9], sizes = [16, 119], strides = [1, 1]} : vector<16x128xf32> to vector<16x119xf32>
    %146 = vector.extract_strided_slice %94 {offsets = [0, 0], sizes = [16, 9], strides = [1, 1]} : vector<16x128xf32> to vector<16x9xf32>
    %147 = tpu.concatenate %145, %146 in 1 : vector<16x119xf32>, vector<16x9xf32> -> vector<16x128xf32>
    %cst_30 = arith.constant 0.000000e+00 : f32
    %148 = vector.shape_cast %13 : vector<1x128xi1> to vector<1x128xi1>
    %149 = vector.broadcast %148 : vector<1x128xi1> to vector<16x128xi1>
    %150 = vector.broadcast %cst_30 : f32 to vector<16x128xf32>
    %151 = arith.select %149, %147, %150 : vector<16x128xi1>, vector<16x128xf32>
    %152 = tpu.concatenate %102, %109, %116, %123, %94, %130, %137, %144, %151 in 0 : vector<16x128xf32>, vector<16x128xf32>, vector<16x128xf32>, vector<16x128xf32>, vector<16x128xf32>, vector<16x128xf32>, vector<16x128xf32>, vector<16x128xf32>, vector<16x128xf32> -> vector<144x128xf32>
    %cst_31 = arith.constant dense<0.000000e+00> : vector<32x128xf32>
    %153 = tpu.matmul %95, %152, %cst_31 {dimension_numbers = #tpu.dot_dimension_numbers<[1], [0], [0], [1], [0, 0, 1, 1], [], []>, precision = #tpu.contract_precision<fp32>} : vector<32x144xf32>, vector<144x128xf32>, vector<32x128xf32> -> vector<32x128xf32>
    %cst_32 = arith.constant dense<0.000000e+00> : vector<32xf32>
    %154 = vector.multi_reduction <add>, %153, %cst_32 [1] : vector<32x128xf32> to vector<32xf32>
    %155 = vector.shape_cast %154 : vector<32xf32> to vector<32x1xf32>
    %cst_33 = arith.constant 7.812500e-03 : f32
    %156 = vector.broadcast %cst_33 : f32 to vector<32x1xf32>
    %157 = arith.mulf %155, %156 : vector<32x1xf32>
    %158 = vector.broadcast %157 : vector<32x1xf32> to vector<32x128xf32>
    %159 = arith.subf %153, %158 : vector<32x128xf32>
    %160 = arith.mulf %159, %159 : vector<32x128xf32>
    %cst_34 = arith.constant dense<0.000000e+00> : vector<32xf32>
    %161 = vector.multi_reduction <add>, %160, %cst_34 [1] : vector<32x128xf32> to vector<32xf32>
    %162 = vector.shape_cast %161 : vector<32xf32> to vector<32x1xf32>
    %cst_35 = arith.constant 7.812500e-03 : f32
    %163 = vector.broadcast %cst_35 : f32 to vector<32x1xf32>
    %164 = arith.mulf %162, %163 : vector<32x1xf32>
    %cst_36 = arith.constant 9.99999974E-6 : f32
    %165 = vector.broadcast %cst_36 : f32 to vector<32x1xf32>
    %166 = arith.addf %164, %165 : vector<32x1xf32>
    %167 = math.rsqrt %166 : vector<32x1xf32>
    %168 = arith.mulf %17, %167 : vector<32x1xf32>
    %169 = vector.broadcast %168 : vector<32x1xf32> to vector<32x128xf32>
    %170 = arith.mulf %159, %169 : vector<32x128xf32>
    %171 = vector.broadcast %18 : vector<32x1xf32> to vector<32x128xf32>
    %172 = arith.addf %170, %171 : vector<32x128xf32>
    %cst_37 = arith.constant 0.000000e+00 : f32
    %173 = vector.broadcast %cst_37 : f32 to vector<32x128xf32>
    %174 = arith.maximumf %172, %173 : vector<32x128xf32>
    %c0_38 = arith.constant 0 : index
    %c0_39 = arith.constant 0 : index
    %175 = vector.load %arg4[%c0_38, %c0_39] : memref<32x288xf32, #tpu.memory_space<vmem>>, vector<32x288xf32>
    %176 = vector.extract_strided_slice %174 {offsets = [0, 119], sizes = [32, 9], strides = [1, 1]} : vector<32x128xf32> to vector<32x9xf32>
    %177 = vector.extract_strided_slice %174 {offsets = [0, 0], sizes = [32, 119], strides = [1, 1]} : vector<32x128xf32> to vector<32x119xf32>
    %178 = tpu.concatenate %176, %177 in 1 : vector<32x9xf32>, vector<32x119xf32> -> vector<32x128xf32>
    %cst_40 = arith.constant 0.000000e+00 : f32
    %179 = vector.shape_cast %10 : vector<1x128xi1> to vector<1x128xi1>
    %180 = vector.broadcast %179 : vector<1x128xi1> to vector<32x128xi1>
    %181 = vector.broadcast %cst_40 : f32 to vector<32x128xf32>
    %182 = arith.select %180, %178, %181 : vector<32x128xi1>, vector<32x128xf32>
    %183 = vector.extract_strided_slice %174 {offsets = [0, 120], sizes = [32, 8], strides = [1, 1]} : vector<32x128xf32> to vector<32x8xf32>
    %184 = vector.extract_strided_slice %174 {offsets = [0, 0], sizes = [32, 120], strides = [1, 1]} : vector<32x128xf32> to vector<32x120xf32>
    %185 = tpu.concatenate %183, %184 in 1 : vector<32x8xf32>, vector<32x120xf32> -> vector<32x128xf32>
    %cst_41 = arith.constant 0.000000e+00 : f32
    %186 = vector.shape_cast %3 : vector<1x128xi1> to vector<1x128xi1>
    %187 = vector.broadcast %186 : vector<1x128xi1> to vector<32x128xi1>
    %188 = vector.broadcast %cst_41 : f32 to vector<32x128xf32>
    %189 = arith.select %187, %185, %188 : vector<32x128xi1>, vector<32x128xf32>
    %190 = vector.extract_strided_slice %174 {offsets = [0, 121], sizes = [32, 7], strides = [1, 1]} : vector<32x128xf32> to vector<32x7xf32>
    %191 = vector.extract_strided_slice %174 {offsets = [0, 0], sizes = [32, 121], strides = [1, 1]} : vector<32x128xf32> to vector<32x121xf32>
    %192 = tpu.concatenate %190, %191 in 1 : vector<32x7xf32>, vector<32x121xf32> -> vector<32x128xf32>
    %cst_42 = arith.constant 0.000000e+00 : f32
    %193 = vector.shape_cast %11 : vector<1x128xi1> to vector<1x128xi1>
    %194 = vector.broadcast %193 : vector<1x128xi1> to vector<32x128xi1>
    %195 = vector.broadcast %cst_42 : f32 to vector<32x128xf32>
    %196 = arith.select %194, %192, %195 : vector<32x128xi1>, vector<32x128xf32>
    %197 = vector.extract_strided_slice %174 {offsets = [0, 127], sizes = [32, 1], strides = [1, 1]} : vector<32x128xf32> to vector<32x1xf32>
    %198 = vector.extract_strided_slice %174 {offsets = [0, 0], sizes = [32, 127], strides = [1, 1]} : vector<32x128xf32> to vector<32x127xf32>
    %199 = tpu.concatenate %197, %198 in 1 : vector<32x1xf32>, vector<32x127xf32> -> vector<32x128xf32>
    %cst_43 = arith.constant 0.000000e+00 : f32
    %200 = vector.shape_cast %7 : vector<1x128xi1> to vector<1x128xi1>
    %201 = vector.broadcast %200 : vector<1x128xi1> to vector<32x128xi1>
    %202 = vector.broadcast %cst_43 : f32 to vector<32x128xf32>
    %203 = arith.select %201, %199, %202 : vector<32x128xi1>, vector<32x128xf32>
    %204 = vector.extract_strided_slice %174 {offsets = [0, 1], sizes = [32, 127], strides = [1, 1]} : vector<32x128xf32> to vector<32x127xf32>
    %205 = vector.extract_strided_slice %174 {offsets = [0, 0], sizes = [32, 1], strides = [1, 1]} : vector<32x128xf32> to vector<32x1xf32>
    %206 = tpu.concatenate %204, %205 in 1 : vector<32x127xf32>, vector<32x1xf32> -> vector<32x128xf32>
    %cst_44 = arith.constant 0.000000e+00 : f32
    %207 = vector.shape_cast %9 : vector<1x128xi1> to vector<1x128xi1>
    %208 = vector.broadcast %207 : vector<1x128xi1> to vector<32x128xi1>
    %209 = vector.broadcast %cst_44 : f32 to vector<32x128xf32>
    %210 = arith.select %208, %206, %209 : vector<32x128xi1>, vector<32x128xf32>
    %211 = vector.extract_strided_slice %174 {offsets = [0, 7], sizes = [32, 121], strides = [1, 1]} : vector<32x128xf32> to vector<32x121xf32>
    %212 = vector.extract_strided_slice %174 {offsets = [0, 0], sizes = [32, 7], strides = [1, 1]} : vector<32x128xf32> to vector<32x7xf32>
    %213 = tpu.concatenate %211, %212 in 1 : vector<32x121xf32>, vector<32x7xf32> -> vector<32x128xf32>
    %cst_45 = arith.constant 0.000000e+00 : f32
    %214 = vector.shape_cast %12 : vector<1x128xi1> to vector<1x128xi1>
    %215 = vector.broadcast %214 : vector<1x128xi1> to vector<32x128xi1>
    %216 = vector.broadcast %cst_45 : f32 to vector<32x128xf32>
    %217 = arith.select %215, %213, %216 : vector<32x128xi1>, vector<32x128xf32>
    %218 = vector.extract_strided_slice %174 {offsets = [0, 8], sizes = [32, 120], strides = [1, 1]} : vector<32x128xf32> to vector<32x120xf32>
    %219 = vector.extract_strided_slice %174 {offsets = [0, 0], sizes = [32, 8], strides = [1, 1]} : vector<32x128xf32> to vector<32x8xf32>
    %220 = tpu.concatenate %218, %219 in 1 : vector<32x120xf32>, vector<32x8xf32> -> vector<32x128xf32>
    %cst_46 = arith.constant 0.000000e+00 : f32
    %221 = vector.shape_cast %5 : vector<1x128xi1> to vector<1x128xi1>
    %222 = vector.broadcast %221 : vector<1x128xi1> to vector<32x128xi1>
    %223 = vector.broadcast %cst_46 : f32 to vector<32x128xf32>
    %224 = arith.select %222, %220, %223 : vector<32x128xi1>, vector<32x128xf32>
    %225 = vector.extract_strided_slice %174 {offsets = [0, 9], sizes = [32, 119], strides = [1, 1]} : vector<32x128xf32> to vector<32x119xf32>
    %226 = vector.extract_strided_slice %174 {offsets = [0, 0], sizes = [32, 9], strides = [1, 1]} : vector<32x128xf32> to vector<32x9xf32>
    %227 = tpu.concatenate %225, %226 in 1 : vector<32x119xf32>, vector<32x9xf32> -> vector<32x128xf32>
    %cst_47 = arith.constant 0.000000e+00 : f32
    %228 = vector.shape_cast %13 : vector<1x128xi1> to vector<1x128xi1>
    %229 = vector.broadcast %228 : vector<1x128xi1> to vector<32x128xi1>
    %230 = vector.broadcast %cst_47 : f32 to vector<32x128xf32>
    %231 = arith.select %229, %227, %230 : vector<32x128xi1>, vector<32x128xf32>
    %232 = tpu.concatenate %182, %189, %196, %203, %174, %210, %217, %224, %231 in 0 : vector<32x128xf32>, vector<32x128xf32>, vector<32x128xf32>, vector<32x128xf32>, vector<32x128xf32>, vector<32x128xf32>, vector<32x128xf32>, vector<32x128xf32>, vector<32x128xf32> -> vector<288x128xf32>
    %cst_48 = arith.constant dense<0.000000e+00> : vector<32x128xf32>
    %233 = tpu.matmul %175, %232, %cst_48 {dimension_numbers = #tpu.dot_dimension_numbers<[1], [0], [0], [1], [0, 0, 1, 1], [], []>, precision = #tpu.contract_precision<fp32>} : vector<32x288xf32>, vector<288x128xf32>, vector<32x128xf32> -> vector<32x128xf32>
    %cst_49 = arith.constant dense<0.000000e+00> : vector<32xf32>
    %234 = vector.multi_reduction <add>, %233, %cst_49 [1] : vector<32x128xf32> to vector<32xf32>
    %235 = vector.shape_cast %234 : vector<32xf32> to vector<32x1xf32>
    %cst_50 = arith.constant 7.812500e-03 : f32
    %236 = vector.broadcast %cst_50 : f32 to vector<32x1xf32>
    %237 = arith.mulf %235, %236 : vector<32x1xf32>
    %238 = vector.broadcast %237 : vector<32x1xf32> to vector<32x128xf32>
    %239 = arith.subf %233, %238 : vector<32x128xf32>
    %240 = arith.mulf %239, %239 : vector<32x128xf32>
    %cst_51 = arith.constant dense<0.000000e+00> : vector<32xf32>
    %241 = vector.multi_reduction <add>, %240, %cst_51 [1] : vector<32x128xf32> to vector<32xf32>
    %242 = vector.shape_cast %241 : vector<32xf32> to vector<32x1xf32>
    %cst_52 = arith.constant 7.812500e-03 : f32
    %243 = vector.broadcast %cst_52 : f32 to vector<32x1xf32>
    %244 = arith.mulf %242, %243 : vector<32x1xf32>
    %cst_53 = arith.constant 9.99999974E-6 : f32
    %245 = vector.broadcast %cst_53 : f32 to vector<32x1xf32>
    %246 = arith.addf %244, %245 : vector<32x1xf32>
    %247 = math.rsqrt %246 : vector<32x1xf32>
    %248 = arith.mulf %19, %247 : vector<32x1xf32>
    %249 = vector.broadcast %248 : vector<32x1xf32> to vector<32x128xf32>
    %250 = arith.mulf %239, %249 : vector<32x128xf32>
    %251 = vector.broadcast %20 : vector<32x1xf32> to vector<32x128xf32>
    %252 = arith.addf %250, %251 : vector<32x128xf32>
    %cst_54 = arith.constant 0.000000e+00 : f32
    %253 = vector.broadcast %cst_54 : f32 to vector<32x128xf32>
    %254 = arith.maximumf %252, %253 : vector<32x128xf32>
    %c0_55 = arith.constant 0 : index
    %c0_56 = arith.constant 0 : index
    %255 = vector.load %arg5[%c0_55, %c0_56] : memref<32x9xf32, #tpu.memory_space<vmem>>, vector<32x9xf32>
    %256 = vector.extract_strided_slice %254 {offsets = [0, 119], sizes = [32, 9], strides = [1, 1]} : vector<32x128xf32> to vector<32x9xf32>
    %257 = vector.extract_strided_slice %254 {offsets = [0, 0], sizes = [32, 119], strides = [1, 1]} : vector<32x128xf32> to vector<32x119xf32>
    %258 = tpu.concatenate %256, %257 in 1 : vector<32x9xf32>, vector<32x119xf32> -> vector<32x128xf32>
    %cst_57 = arith.constant 0.000000e+00 : f32
    %259 = vector.shape_cast %10 : vector<1x128xi1> to vector<1x128xi1>
    %260 = vector.broadcast %259 : vector<1x128xi1> to vector<32x128xi1>
    %261 = vector.broadcast %cst_57 : f32 to vector<32x128xf32>
    %262 = arith.select %260, %258, %261 : vector<32x128xi1>, vector<32x128xf32>
    %263 = vector.extract_strided_slice %255 {offsets = [0, 0], sizes = [32, 1], strides = [1, 1]} : vector<32x9xf32> to vector<32x1xf32>
    %264 = vector.broadcast %263 : vector<32x1xf32> to vector<32x128xf32>
    %265 = arith.mulf %262, %264 : vector<32x128xf32>
    %266 = vector.extract_strided_slice %254 {offsets = [0, 120], sizes = [32, 8], strides = [1, 1]} : vector<32x128xf32> to vector<32x8xf32>
    %267 = vector.extract_strided_slice %254 {offsets = [0, 0], sizes = [32, 120], strides = [1, 1]} : vector<32x128xf32> to vector<32x120xf32>
    %268 = tpu.concatenate %266, %267 in 1 : vector<32x8xf32>, vector<32x120xf32> -> vector<32x128xf32>
    %cst_58 = arith.constant 0.000000e+00 : f32
    %269 = vector.shape_cast %3 : vector<1x128xi1> to vector<1x128xi1>
    %270 = vector.broadcast %269 : vector<1x128xi1> to vector<32x128xi1>
    %271 = vector.broadcast %cst_58 : f32 to vector<32x128xf32>
    %272 = arith.select %270, %268, %271 : vector<32x128xi1>, vector<32x128xf32>
    %273 = vector.extract_strided_slice %255 {offsets = [0, 1], sizes = [32, 1], strides = [1, 1]} : vector<32x9xf32> to vector<32x1xf32>
    %274 = vector.broadcast %273 : vector<32x1xf32> to vector<32x128xf32>
    %275 = arith.mulf %272, %274 : vector<32x128xf32>
    %276 = arith.addf %265, %275 : vector<32x128xf32>
    %277 = vector.extract_strided_slice %254 {offsets = [0, 121], sizes = [32, 7], strides = [1, 1]} : vector<32x128xf32> to vector<32x7xf32>
    %278 = vector.extract_strided_slice %254 {offsets = [0, 0], sizes = [32, 121], strides = [1, 1]} : vector<32x128xf32> to vector<32x121xf32>
    %279 = tpu.concatenate %277, %278 in 1 : vector<32x7xf32>, vector<32x121xf32> -> vector<32x128xf32>
    %cst_59 = arith.constant 0.000000e+00 : f32
    %280 = vector.shape_cast %11 : vector<1x128xi1> to vector<1x128xi1>
    %281 = vector.broadcast %280 : vector<1x128xi1> to vector<32x128xi1>
    %282 = vector.broadcast %cst_59 : f32 to vector<32x128xf32>
    %283 = arith.select %281, %279, %282 : vector<32x128xi1>, vector<32x128xf32>
    %284 = vector.extract_strided_slice %255 {offsets = [0, 2], sizes = [32, 1], strides = [1, 1]} : vector<32x9xf32> to vector<32x1xf32>
    %285 = vector.broadcast %284 : vector<32x1xf32> to vector<32x128xf32>
    %286 = arith.mulf %283, %285 : vector<32x128xf32>
    %287 = arith.addf %276, %286 : vector<32x128xf32>
    %288 = vector.extract_strided_slice %254 {offsets = [0, 127], sizes = [32, 1], strides = [1, 1]} : vector<32x128xf32> to vector<32x1xf32>
    %289 = vector.extract_strided_slice %254 {offsets = [0, 0], sizes = [32, 127], strides = [1, 1]} : vector<32x128xf32> to vector<32x127xf32>
    %290 = tpu.concatenate %288, %289 in 1 : vector<32x1xf32>, vector<32x127xf32> -> vector<32x128xf32>
    %cst_60 = arith.constant 0.000000e+00 : f32
    %291 = vector.shape_cast %7 : vector<1x128xi1> to vector<1x128xi1>
    %292 = vector.broadcast %291 : vector<1x128xi1> to vector<32x128xi1>
    %293 = vector.broadcast %cst_60 : f32 to vector<32x128xf32>
    %294 = arith.select %292, %290, %293 : vector<32x128xi1>, vector<32x128xf32>
    %295 = vector.extract_strided_slice %255 {offsets = [0, 3], sizes = [32, 1], strides = [1, 1]} : vector<32x9xf32> to vector<32x1xf32>
    %296 = vector.broadcast %295 : vector<32x1xf32> to vector<32x128xf32>
    %297 = arith.mulf %294, %296 : vector<32x128xf32>
    %298 = arith.addf %287, %297 : vector<32x128xf32>
    %299 = vector.extract_strided_slice %255 {offsets = [0, 4], sizes = [32, 1], strides = [1, 1]} : vector<32x9xf32> to vector<32x1xf32>
    %300 = vector.broadcast %299 : vector<32x1xf32> to vector<32x128xf32>
    %301 = arith.mulf %254, %300 : vector<32x128xf32>
    %302 = arith.addf %298, %301 : vector<32x128xf32>
    %303 = vector.extract_strided_slice %254 {offsets = [0, 1], sizes = [32, 127], strides = [1, 1]} : vector<32x128xf32> to vector<32x127xf32>
    %304 = vector.extract_strided_slice %254 {offsets = [0, 0], sizes = [32, 1], strides = [1, 1]} : vector<32x128xf32> to vector<32x1xf32>
    %305 = tpu.concatenate %303, %304 in 1 : vector<32x127xf32>, vector<32x1xf32> -> vector<32x128xf32>
    %cst_61 = arith.constant 0.000000e+00 : f32
    %306 = vector.shape_cast %9 : vector<1x128xi1> to vector<1x128xi1>
    %307 = vector.broadcast %306 : vector<1x128xi1> to vector<32x128xi1>
    %308 = vector.broadcast %cst_61 : f32 to vector<32x128xf32>
    %309 = arith.select %307, %305, %308 : vector<32x128xi1>, vector<32x128xf32>
    %310 = vector.extract_strided_slice %255 {offsets = [0, 5], sizes = [32, 1], strides = [1, 1]} : vector<32x9xf32> to vector<32x1xf32>
    %311 = vector.broadcast %310 : vector<32x1xf32> to vector<32x128xf32>
    %312 = arith.mulf %309, %311 : vector<32x128xf32>
    %313 = arith.addf %302, %312 : vector<32x128xf32>
    %314 = vector.extract_strided_slice %254 {offsets = [0, 7], sizes = [32, 121], strides = [1, 1]} : vector<32x128xf32> to vector<32x121xf32>
    %315 = vector.extract_strided_slice %254 {offsets = [0, 0], sizes = [32, 7], strides = [1, 1]} : vector<32x128xf32> to vector<32x7xf32>
    %316 = tpu.concatenate %314, %315 in 1 : vector<32x121xf32>, vector<32x7xf32> -> vector<32x128xf32>
    %cst_62 = arith.constant 0.000000e+00 : f32
    %317 = vector.shape_cast %12 : vector<1x128xi1> to vector<1x128xi1>
    %318 = vector.broadcast %317 : vector<1x128xi1> to vector<32x128xi1>
    %319 = vector.broadcast %cst_62 : f32 to vector<32x128xf32>
    %320 = arith.select %318, %316, %319 : vector<32x128xi1>, vector<32x128xf32>
    %321 = vector.extract_strided_slice %255 {offsets = [0, 6], sizes = [32, 1], strides = [1, 1]} : vector<32x9xf32> to vector<32x1xf32>
    %322 = vector.broadcast %321 : vector<32x1xf32> to vector<32x128xf32>
    %323 = arith.mulf %320, %322 : vector<32x128xf32>
    %324 = arith.addf %313, %323 : vector<32x128xf32>
    %325 = vector.extract_strided_slice %254 {offsets = [0, 8], sizes = [32, 120], strides = [1, 1]} : vector<32x128xf32> to vector<32x120xf32>
    %326 = vector.extract_strided_slice %254 {offsets = [0, 0], sizes = [32, 8], strides = [1, 1]} : vector<32x128xf32> to vector<32x8xf32>
    %327 = tpu.concatenate %325, %326 in 1 : vector<32x120xf32>, vector<32x8xf32> -> vector<32x128xf32>
    %cst_63 = arith.constant 0.000000e+00 : f32
    %328 = vector.shape_cast %5 : vector<1x128xi1> to vector<1x128xi1>
    %329 = vector.broadcast %328 : vector<1x128xi1> to vector<32x128xi1>
    %330 = vector.broadcast %cst_63 : f32 to vector<32x128xf32>
    %331 = arith.select %329, %327, %330 : vector<32x128xi1>, vector<32x128xf32>
    %332 = vector.extract_strided_slice %255 {offsets = [0, 7], sizes = [32, 1], strides = [1, 1]} : vector<32x9xf32> to vector<32x1xf32>
    %333 = vector.broadcast %332 : vector<32x1xf32> to vector<32x128xf32>
    %334 = arith.mulf %331, %333 : vector<32x128xf32>
    %335 = arith.addf %324, %334 : vector<32x128xf32>
    %336 = vector.extract_strided_slice %254 {offsets = [0, 9], sizes = [32, 119], strides = [1, 1]} : vector<32x128xf32> to vector<32x119xf32>
    %337 = vector.extract_strided_slice %254 {offsets = [0, 0], sizes = [32, 9], strides = [1, 1]} : vector<32x128xf32> to vector<32x9xf32>
    %338 = tpu.concatenate %336, %337 in 1 : vector<32x119xf32>, vector<32x9xf32> -> vector<32x128xf32>
    %cst_64 = arith.constant 0.000000e+00 : f32
    %339 = vector.shape_cast %13 : vector<1x128xi1> to vector<1x128xi1>
    %340 = vector.broadcast %339 : vector<1x128xi1> to vector<32x128xi1>
    %341 = vector.broadcast %cst_64 : f32 to vector<32x128xf32>
    %342 = arith.select %340, %338, %341 : vector<32x128xi1>, vector<32x128xf32>
    %343 = vector.extract_strided_slice %255 {offsets = [0, 8], sizes = [32, 1], strides = [1, 1]} : vector<32x9xf32> to vector<32x1xf32>
    %344 = vector.broadcast %343 : vector<32x1xf32> to vector<32x128xf32>
    %345 = arith.mulf %342, %344 : vector<32x128xf32>
    %346 = arith.addf %335, %345 : vector<32x128xf32>
    %cst_65 = arith.constant dense<0.000000e+00> : vector<32xf32>
    %347 = vector.multi_reduction <add>, %346, %cst_65 [1] : vector<32x128xf32> to vector<32xf32>
    %348 = vector.shape_cast %347 : vector<32xf32> to vector<32x1xf32>
    %cst_66 = arith.constant 7.812500e-03 : f32
    %349 = vector.broadcast %cst_66 : f32 to vector<32x1xf32>
    %350 = arith.mulf %348, %349 : vector<32x1xf32>
    %351 = vector.broadcast %350 : vector<32x1xf32> to vector<32x128xf32>
    %352 = arith.subf %346, %351 : vector<32x128xf32>
    %353 = arith.mulf %352, %352 : vector<32x128xf32>
    %cst_67 = arith.constant dense<0.000000e+00> : vector<32xf32>
    %354 = vector.multi_reduction <add>, %353, %cst_67 [1] : vector<32x128xf32> to vector<32xf32>
    %355 = vector.shape_cast %354 : vector<32xf32> to vector<32x1xf32>
    %cst_68 = arith.constant 7.812500e-03 : f32
    %356 = vector.broadcast %cst_68 : f32 to vector<32x1xf32>
    %357 = arith.mulf %355, %356 : vector<32x1xf32>
    %cst_69 = arith.constant 9.99999974E-6 : f32
    %358 = vector.broadcast %cst_69 : f32 to vector<32x1xf32>
    %359 = arith.addf %357, %358 : vector<32x1xf32>
    %360 = math.rsqrt %359 : vector<32x1xf32>
    %361 = arith.mulf %21, %360 : vector<32x1xf32>
    %362 = vector.broadcast %361 : vector<32x1xf32> to vector<32x128xf32>
    %363 = arith.mulf %352, %362 : vector<32x128xf32>
    %364 = vector.broadcast %22 : vector<32x1xf32> to vector<32x128xf32>
    %365 = arith.addf %363, %364 : vector<32x128xf32>
    %cst_70 = arith.constant 0.000000e+00 : f32
    %366 = vector.broadcast %cst_70 : f32 to vector<32x128xf32>
    %367 = arith.maximumf %365, %366 : vector<32x128xf32>
    %c0_71 = arith.constant 0 : index
    %c0_72 = arith.constant 0 : index
    %368 = vector.load %arg6[%c0_71, %c0_72] : memref<32x9xf32, #tpu.memory_space<vmem>>, vector<32x9xf32>
    %369 = vector.extract_strided_slice %367 {offsets = [0, 119], sizes = [32, 9], strides = [1, 1]} : vector<32x128xf32> to vector<32x9xf32>
    %370 = vector.extract_strided_slice %367 {offsets = [0, 0], sizes = [32, 119], strides = [1, 1]} : vector<32x128xf32> to vector<32x119xf32>
    %371 = tpu.concatenate %369, %370 in 1 : vector<32x9xf32>, vector<32x119xf32> -> vector<32x128xf32>
    %cst_73 = arith.constant 0.000000e+00 : f32
    %372 = vector.shape_cast %10 : vector<1x128xi1> to vector<1x128xi1>
    %373 = vector.broadcast %372 : vector<1x128xi1> to vector<32x128xi1>
    %374 = vector.broadcast %cst_73 : f32 to vector<32x128xf32>
    %375 = arith.select %373, %371, %374 : vector<32x128xi1>, vector<32x128xf32>
    %376 = vector.extract_strided_slice %368 {offsets = [0, 0], sizes = [32, 1], strides = [1, 1]} : vector<32x9xf32> to vector<32x1xf32>
    %377 = vector.broadcast %376 : vector<32x1xf32> to vector<32x128xf32>
    %378 = arith.mulf %375, %377 : vector<32x128xf32>
    %379 = vector.extract_strided_slice %367 {offsets = [0, 120], sizes = [32, 8], strides = [1, 1]} : vector<32x128xf32> to vector<32x8xf32>
    %380 = vector.extract_strided_slice %367 {offsets = [0, 0], sizes = [32, 120], strides = [1, 1]} : vector<32x128xf32> to vector<32x120xf32>
    %381 = tpu.concatenate %379, %380 in 1 : vector<32x8xf32>, vector<32x120xf32> -> vector<32x128xf32>
    %cst_74 = arith.constant 0.000000e+00 : f32
    %382 = vector.shape_cast %3 : vector<1x128xi1> to vector<1x128xi1>
    %383 = vector.broadcast %382 : vector<1x128xi1> to vector<32x128xi1>
    %384 = vector.broadcast %cst_74 : f32 to vector<32x128xf32>
    %385 = arith.select %383, %381, %384 : vector<32x128xi1>, vector<32x128xf32>
    %386 = vector.extract_strided_slice %368 {offsets = [0, 1], sizes = [32, 1], strides = [1, 1]} : vector<32x9xf32> to vector<32x1xf32>
    %387 = vector.broadcast %386 : vector<32x1xf32> to vector<32x128xf32>
    %388 = arith.mulf %385, %387 : vector<32x128xf32>
    %389 = arith.addf %378, %388 : vector<32x128xf32>
    %390 = vector.extract_strided_slice %367 {offsets = [0, 121], sizes = [32, 7], strides = [1, 1]} : vector<32x128xf32> to vector<32x7xf32>
    %391 = vector.extract_strided_slice %367 {offsets = [0, 0], sizes = [32, 121], strides = [1, 1]} : vector<32x128xf32> to vector<32x121xf32>
    %392 = tpu.concatenate %390, %391 in 1 : vector<32x7xf32>, vector<32x121xf32> -> vector<32x128xf32>
    %cst_75 = arith.constant 0.000000e+00 : f32
    %393 = vector.shape_cast %11 : vector<1x128xi1> to vector<1x128xi1>
    %394 = vector.broadcast %393 : vector<1x128xi1> to vector<32x128xi1>
    %395 = vector.broadcast %cst_75 : f32 to vector<32x128xf32>
    %396 = arith.select %394, %392, %395 : vector<32x128xi1>, vector<32x128xf32>
    %397 = vector.extract_strided_slice %368 {offsets = [0, 2], sizes = [32, 1], strides = [1, 1]} : vector<32x9xf32> to vector<32x1xf32>
    %398 = vector.broadcast %397 : vector<32x1xf32> to vector<32x128xf32>
    %399 = arith.mulf %396, %398 : vector<32x128xf32>
    %400 = arith.addf %389, %399 : vector<32x128xf32>
    %401 = vector.extract_strided_slice %367 {offsets = [0, 127], sizes = [32, 1], strides = [1, 1]} : vector<32x128xf32> to vector<32x1xf32>
    %402 = vector.extract_strided_slice %367 {offsets = [0, 0], sizes = [32, 127], strides = [1, 1]} : vector<32x128xf32> to vector<32x127xf32>
    %403 = tpu.concatenate %401, %402 in 1 : vector<32x1xf32>, vector<32x127xf32> -> vector<32x128xf32>
    %cst_76 = arith.constant 0.000000e+00 : f32
    %404 = vector.shape_cast %7 : vector<1x128xi1> to vector<1x128xi1>
    %405 = vector.broadcast %404 : vector<1x128xi1> to vector<32x128xi1>
    %406 = vector.broadcast %cst_76 : f32 to vector<32x128xf32>
    %407 = arith.select %405, %403, %406 : vector<32x128xi1>, vector<32x128xf32>
    %408 = vector.extract_strided_slice %368 {offsets = [0, 3], sizes = [32, 1], strides = [1, 1]} : vector<32x9xf32> to vector<32x1xf32>
    %409 = vector.broadcast %408 : vector<32x1xf32> to vector<32x128xf32>
    %410 = arith.mulf %407, %409 : vector<32x128xf32>
    %411 = arith.addf %400, %410 : vector<32x128xf32>
    %412 = vector.extract_strided_slice %368 {offsets = [0, 4], sizes = [32, 1], strides = [1, 1]} : vector<32x9xf32> to vector<32x1xf32>
    %413 = vector.broadcast %412 : vector<32x1xf32> to vector<32x128xf32>
    %414 = arith.mulf %367, %413 : vector<32x128xf32>
    %415 = arith.addf %411, %414 : vector<32x128xf32>
    %416 = vector.extract_strided_slice %367 {offsets = [0, 1], sizes = [32, 127], strides = [1, 1]} : vector<32x128xf32> to vector<32x127xf32>
    %417 = vector.extract_strided_slice %367 {offsets = [0, 0], sizes = [32, 1], strides = [1, 1]} : vector<32x128xf32> to vector<32x1xf32>
    %418 = tpu.concatenate %416, %417 in 1 : vector<32x127xf32>, vector<32x1xf32> -> vector<32x128xf32>
    %cst_77 = arith.constant 0.000000e+00 : f32
    %419 = vector.shape_cast %9 : vector<1x128xi1> to vector<1x128xi1>
    %420 = vector.broadcast %419 : vector<1x128xi1> to vector<32x128xi1>
    %421 = vector.broadcast %cst_77 : f32 to vector<32x128xf32>
    %422 = arith.select %420, %418, %421 : vector<32x128xi1>, vector<32x128xf32>
    %423 = vector.extract_strided_slice %368 {offsets = [0, 5], sizes = [32, 1], strides = [1, 1]} : vector<32x9xf32> to vector<32x1xf32>
    %424 = vector.broadcast %423 : vector<32x1xf32> to vector<32x128xf32>
    %425 = arith.mulf %422, %424 : vector<32x128xf32>
    %426 = arith.addf %415, %425 : vector<32x128xf32>
    %427 = vector.extract_strided_slice %367 {offsets = [0, 7], sizes = [32, 121], strides = [1, 1]} : vector<32x128xf32> to vector<32x121xf32>
    %428 = vector.extract_strided_slice %367 {offsets = [0, 0], sizes = [32, 7], strides = [1, 1]} : vector<32x128xf32> to vector<32x7xf32>
    %429 = tpu.concatenate %427, %428 in 1 : vector<32x121xf32>, vector<32x7xf32> -> vector<32x128xf32>
    %cst_78 = arith.constant 0.000000e+00 : f32
    %430 = vector.shape_cast %12 : vector<1x128xi1> to vector<1x128xi1>
    %431 = vector.broadcast %430 : vector<1x128xi1> to vector<32x128xi1>
    %432 = vector.broadcast %cst_78 : f32 to vector<32x128xf32>
    %433 = arith.select %431, %429, %432 : vector<32x128xi1>, vector<32x128xf32>
    %434 = vector.extract_strided_slice %368 {offsets = [0, 6], sizes = [32, 1], strides = [1, 1]} : vector<32x9xf32> to vector<32x1xf32>
    %435 = vector.broadcast %434 : vector<32x1xf32> to vector<32x128xf32>
    %436 = arith.mulf %433, %435 : vector<32x128xf32>
    %437 = arith.addf %426, %436 : vector<32x128xf32>
    %438 = vector.extract_strided_slice %367 {offsets = [0, 8], sizes = [32, 120], strides = [1, 1]} : vector<32x128xf32> to vector<32x120xf32>
    %439 = vector.extract_strided_slice %367 {offsets = [0, 0], sizes = [32, 8], strides = [1, 1]} : vector<32x128xf32> to vector<32x8xf32>
    %440 = tpu.concatenate %438, %439 in 1 : vector<32x120xf32>, vector<32x8xf32> -> vector<32x128xf32>
    %cst_79 = arith.constant 0.000000e+00 : f32
    %441 = vector.shape_cast %5 : vector<1x128xi1> to vector<1x128xi1>
    %442 = vector.broadcast %441 : vector<1x128xi1> to vector<32x128xi1>
    %443 = vector.broadcast %cst_79 : f32 to vector<32x128xf32>
    %444 = arith.select %442, %440, %443 : vector<32x128xi1>, vector<32x128xf32>
    %445 = vector.extract_strided_slice %368 {offsets = [0, 7], sizes = [32, 1], strides = [1, 1]} : vector<32x9xf32> to vector<32x1xf32>
    %446 = vector.broadcast %445 : vector<32x1xf32> to vector<32x128xf32>
    %447 = arith.mulf %444, %446 : vector<32x128xf32>
    %448 = arith.addf %437, %447 : vector<32x128xf32>
    %449 = vector.extract_strided_slice %367 {offsets = [0, 9], sizes = [32, 119], strides = [1, 1]} : vector<32x128xf32> to vector<32x119xf32>
    %450 = vector.extract_strided_slice %367 {offsets = [0, 0], sizes = [32, 9], strides = [1, 1]} : vector<32x128xf32> to vector<32x9xf32>
    %451 = tpu.concatenate %449, %450 in 1 : vector<32x119xf32>, vector<32x9xf32> -> vector<32x128xf32>
    %cst_80 = arith.constant 0.000000e+00 : f32
    %452 = vector.shape_cast %13 : vector<1x128xi1> to vector<1x128xi1>
    %453 = vector.broadcast %452 : vector<1x128xi1> to vector<32x128xi1>
    %454 = vector.broadcast %cst_80 : f32 to vector<32x128xf32>
    %455 = arith.select %453, %451, %454 : vector<32x128xi1>, vector<32x128xf32>
    %456 = vector.extract_strided_slice %368 {offsets = [0, 8], sizes = [32, 1], strides = [1, 1]} : vector<32x9xf32> to vector<32x1xf32>
    %457 = vector.broadcast %456 : vector<32x1xf32> to vector<32x128xf32>
    %458 = arith.mulf %455, %457 : vector<32x128xf32>
    %459 = arith.addf %448, %458 : vector<32x128xf32>
    %cst_81 = arith.constant dense<0.000000e+00> : vector<32xf32>
    %460 = vector.multi_reduction <add>, %459, %cst_81 [1] : vector<32x128xf32> to vector<32xf32>
    %461 = vector.shape_cast %460 : vector<32xf32> to vector<32x1xf32>
    %cst_82 = arith.constant 7.812500e-03 : f32
    %462 = vector.broadcast %cst_82 : f32 to vector<32x1xf32>
    %463 = arith.mulf %461, %462 : vector<32x1xf32>
    %464 = vector.broadcast %463 : vector<32x1xf32> to vector<32x128xf32>
    %465 = arith.subf %459, %464 : vector<32x128xf32>
    %466 = arith.mulf %465, %465 : vector<32x128xf32>
    %cst_83 = arith.constant dense<0.000000e+00> : vector<32xf32>
    %467 = vector.multi_reduction <add>, %466, %cst_83 [1] : vector<32x128xf32> to vector<32xf32>
    %468 = vector.shape_cast %467 : vector<32xf32> to vector<32x1xf32>
    %cst_84 = arith.constant 7.812500e-03 : f32
    %469 = vector.broadcast %cst_84 : f32 to vector<32x1xf32>
    %470 = arith.mulf %468, %469 : vector<32x1xf32>
    %cst_85 = arith.constant 9.99999974E-6 : f32
    %471 = vector.broadcast %cst_85 : f32 to vector<32x1xf32>
    %472 = arith.addf %470, %471 : vector<32x1xf32>
    %473 = math.rsqrt %472 : vector<32x1xf32>
    %474 = arith.mulf %23, %473 : vector<32x1xf32>
    %475 = vector.broadcast %474 : vector<32x1xf32> to vector<32x128xf32>
    %476 = arith.mulf %465, %475 : vector<32x128xf32>
    %477 = vector.broadcast %24 : vector<32x1xf32> to vector<32x128xf32>
    %478 = arith.addf %476, %477 : vector<32x128xf32>
    %cst_86 = arith.constant 0.000000e+00 : f32
    %479 = vector.broadcast %cst_86 : f32 to vector<32x128xf32>
    %480 = arith.maximumf %478, %479 : vector<32x128xf32>
    %481 = arith.addf %480, %254 : vector<32x128xf32>
    %c0_87 = arith.constant 0 : index
    %c0_88 = arith.constant 0 : index
    %482 = vector.load %arg8[%c0_87, %c0_88] : memref<32x128xf32, #tpu.memory_space<vmem>>, vector<32x128xf32>
    tpu.vector_store %arg8[%c0_87, %c0_88], %481 {strides = array<i32>} : memref<32x128xf32, #tpu.memory_space<vmem>>, vector<32x128xf32>,
    return
  }
}

</mosaic_0001>

<llo_original>
// kernel: stem_forward.1
$region0: #{stem_forward.1}
  #allocation0 [shape = 'u32[]', space=smem, size = 0x4, offset = 0x4, fixed_abs, tag = 'smem constant byte address 0x4 - core index']
  #allocation1 [shape = 'u32[144,128]{1,0:T(1,128)}', space=vmem, size = 0x12000, scoped, tag = 'internal scratch']
  %s0 = inlined_call_operand.vmem [shape: f32[12,128], index: 0, kind: input, shape index: {}]
  %s1 = inlined_call_operand.vmem [shape: s32[2,128], index: 1, kind: input, shape index: {}]
  %s2 = inlined_call_operand.vmem [shape: f32[16,27], index: 2, kind: input, shape index: {}]
  %s3 = inlined_call_operand.vmem [shape: f32[32,144], index: 3, kind: input, shape index: {}]
  %s4 = inlined_call_operand.vmem [shape: f32[32,288], index: 4, kind: input, shape index: {}]
  %s5 = inlined_call_operand.vmem [shape: f32[32,9], index: 5, kind: input, shape index: {}]
  %s6 = inlined_call_operand.vmem [shape: f32[32,9], index: 6, kind: input, shape index: {}]
  %s7 = inlined_call_operand.vmem [shape: f32[32,10], index: 7, kind: input, shape index: {}]
  %s8 = inlined_call_operand.vmem [shape: f32[32,128], index: 8, kind: output, shape index: {}]
  %s9 = sld [smem:[#allocation0]]
  $region42: #{stem_forward.1} parent=0
    _
  %s11 = ssub.s32 1, %s9
  %s12 = scalar_select 0, %s11, %s9
  // Predicated region
  $region2: #{stem_forward.1} parent=0 // pred_check
    _
  $region3: #{stem_forward.1} parent=0 // pred_check_branch
    %14 = sbr.rel (0) target = $region5
  $region4: #{stem_forward.1} parent=0 // pred_region
    _
  $region5: #{stem_forward.1} parent=0 // pred_fallthru
    _
  // Predicated region
  $region6: #{stem_forward.1} parent=0 // pred_check
    _
  $region7: #{stem_forward.1} parent=0 // pred_check_branch
    %16 = sbr.rel (0) target = $region9
  $region8: #{stem_forward.1} parent=0 // pred_region
    _
  $region9: #{stem_forward.1} parent=0 // pred_fallthru
    _
  // Predicated region
  $region10: #{stem_forward.1} parent=0 // pred_check
    _
  $region11: #{stem_forward.1} parent=0 // pred_check_branch
    %18 = sbr.rel (0) target = $region13
  $region12: #{stem_forward.1} parent=0 // pred_region
    _
  $region13: #{stem_forward.1} parent=0 // pred_fallthru
    _
  // Predicated region
  $region14: #{stem_forward.1} parent=0 // pred_check
    _
  $region15: #{stem_forward.1} parent=0 // pred_check_branch
    %20 = sbr.rel (0) target = $region17
  $region16: #{stem_forward.1} parent=0 // pred_region
    _
  $region17: #{stem_forward.1} parent=0 // pred_fallthru
    _
  // Predicated region
  $region18: #{stem_forward.1} parent=0 // pred_check
    _
  $region19: #{stem_forward.1} parent=0 // pred_check_branch
    %22 = sbr.rel (0) target = $region21
  $region20: #{stem_forward.1} parent=0 // pred_region
    _
  $region21: #{stem_forward.1} parent=0 // pred_fallthru
    _
  // Predicated region
  $region22: #{stem_forward.1} parent=0 // pred_check
    _
  $region23: #{stem_forward.1} parent=0 // pred_check_branch
    %24 = sbr.rel (0) target = $region25
  $region24: #{stem_forward.1} parent=0 // pred_region
    _
  $region25: #{stem_forward.1} parent=0 // pred_fallthru
    _
  // Predicated region
  $region26: #{stem_forward.1} parent=0 // pred_check
    _
  $region27: #{stem_forward.1} parent=0 // pred_check_branch
    %26 = sbr.rel (0) target = $region29
  $region28: #{stem_forward.1} parent=0 // pred_region
    _
  $region29: #{stem_forward.1} parent=0 // pred_fallthru
    _
  // Predicated region
  $region30: #{stem_forward.1} parent=0 // pred_check
    _
  $region31: #{stem_forward.1} parent=0 // pred_check_branch
    %28 = sbr.rel (0) target = $region33
  $region32: #{stem_forward.1} parent=0 // pred_region
    _
  $region33: #{stem_forward.1} parent=0 // pred_fallthru
    _
  %v29 = vld [vmem:[%s1] sm:$0x1]
  %v30 = vld [vmem:[%s1 + $0x1] sm:$0x1]
  %vm31 = vcmp.gt.s32.totalorder %v29, 0
  %vm32 = vcmp.lt.s32.totalorder %v29, 7
  %vm33 = vcmp.gt.s32.totalorder %v30, 0
  %vm34 = vcmp.lt.s32.totalorder %v30, 7
  %vm35 = vmand %vm31, %vm33
  %vm36 = vmand %vm31, %vm34
  %vm37 = vmand %vm32, %vm33
  %vm38 = vmand %vm32, %vm34
  %v39 = vld [vmem:[%s7] sm:$0xff]
  %v40 = vld [vmem:[%s7 + $0x8] sm:$0xff]
  %v41 = vld [vmem:[%s7 + $0x10] sm:$0xff]
  %v42 = vld [vmem:[%s7 + $0x18] sm:$0xff]
  %v43 = vld [vmem:[%s0] sm:$0xff]
  %v44 = vld [vmem:[%s0 + $0x8] sm:$0xf]
  %46 = vrot.lane.b32.xlu0 %v44, 9
  %v47 = vpop.permute.xlu0 %46
  %v49 = vsel %vm35, 1, 0
  %v50 = vlaneseq
  %v51 = vshrl.u32 %v50, 7
  %v52 = vsub.s32 0, %v51
  %v53 = vrot.slane %v49, %v52
  %vm54 = vcmp.eq.s32.totalorder %v53, 1
  %v55 = vsel %vm54, %v47, 0.0
  %57 = vrot.lane.b32.xlu0 %v43, 8
  %v58 = vpop.permute.xlu0 %57
  %59 = vrot.lane.b32.xlu0 %v44, 8
  %v60 = vpop.permute.xlu0 %59
  %v63 = vsel %vm31, 1, 0
  %v64 = vlaneseq
  %v65 = vshrl.u32 %v64, 7
  %v66 = vsub.s32 0, %v65
  %v67 = vrot.slane %v63, %v66
  %vm68 = vcmp.eq.s32.totalorder %v67, 1
  %v69 = vsel %vm68, %v58, 0.0
  %v70 = vsel %vm68, %v60, 0.0
  %71 = vrot.lane.b32.xlu0 %v43, 1
  %v72 = vpop.permute.xlu0 %71
  %v74 = vsel %vm33, 1, 0
  %v75 = vlaneseq
  %v76 = vshrl.u32 %v75, 7
  %v77 = vsub.s32 0, %v76
  %v78 = vrot.slane %v74, %v77
  %vm79 = vcmp.eq.s32.totalorder %v78, 1
  %v80 = vsel %vm79, %v72, 0.0
  %81 = vrot.lane.b32.xlu0 %v44, 1
  %v82 = vpop.permute.xlu0 %81
  %v84 = vsel %vm79, %v82, 0.0
  %v86 = vrot.slane %v55, 1
  %vm90 = vcmask 1044480
  %v91 = vrot.slane %v69, 3
  %v92 = vrot.slane %v70, 3
  %v93 = vsel %vm90, %v91, %v92
  %v97 = vrot.slane %v80, 2
  %v99 = vrot.slane %v43, 4
  %v102 = vrot.slane %v84, 7
  %vm104 = vcmask 1046528
  %v105 = vrot.slane %v43, 1
  %v106 = vrot.slane %v44, 1
  %v107 = vsel %vm104, %v105, %v106
  %vm109 = vcmask 1042432
  %v110 = vsel %vm109, %v86, %v93
  %vm111 = vcmask 1045504
  %v112 = vsel %vm111, %v110, %v92
  %vm113 = vcmask 1040384
  %v114 = vsel %vm113, %v92, %v97
  %vm115 = vcmask 1043456
  %v116 = vsel %vm115, %v114, %v99
  %v117 = vsel %vm104, %v116, %v99
  %vm118 = vcmask 1041408
  %v119 = vsel %vm118, %v99, %v102
  %v120 = vsel %vm90, %v119, %v107
  %v121 = vld [vmem:[%s2] sm:$0xff]
  %v122 = vld [vmem:[%s2 + $0x8] sm:$0xff]
  %vm123 = vcmask 220160
  %v125 = vsel %vm123, %v121, 0
  %v128 = vsel %vm123, %v122, 0
  %v130 = vsel %vm109, %v106, 0
  %132 = vmatprep.subr.mxu0 0.0
  %v133 = vand.u32 %v112, 4294901760
  %134 = vmatpush1.msra.mxu0 %v133
  %135 = vmatprep.subr.mxu0 0.0
  %v136 = vand.u32 %v117, 4294901760
  %137 = vmatpush1.msra.mxu0 %v136
  %138 = vmatprep.subr.mxu0 0.0
  %v139 = vand.u32 %v120, 4294901760
  %140 = vmatpush1.msra.mxu0 %v139
  %141 = vmatprep.subr.mxu0 0.0
  %v142 = vand.u32 %v130, 4294901760
  %143 = vmatpush1.msra.mxu0 %v142
  %144 = vmatprep.subr.mxu0 0.0
  %145 = vmatpush1.msra.mxu0 0.0
  %146 = vmatprep.subr.mxu0 0.0
  %147 = vmatpush1.msra.mxu0 0.0
  %148 = vmatprep.subr.mxu0 0.0
  %149 = vmatpush1.msra.mxu0 0.0
  %150 = vmatprep.subr.mxu0 0.0
  %151 = vmatpush1.msra.mxu0 0.0
  %152 = vmatprep.subr.mxu0 0.0
  %153 = vmatpush1.msra.mxu0 0.0
  %154 = vmatprep.subr.mxu0 0.0
  %155 = vmatpush1.msra.mxu0 0.0
  %156 = vmatprep.subr.mxu0 0.0
  %157 = vmatpush1.msra.mxu0 0.0
  %158 = vmatprep.subr.mxu0 0.0
  %159 = vmatpush1.msra.mxu0 0.0
  %160 = vmatprep.subr.mxu0 0.0
  %161 = vmatpush1.msra.mxu0 0.0
  %162 = vmatprep.subr.mxu0 0.0
  %163 = vmatpush1.msra.mxu0 0.0
  %164 = vmatprep.subr.mxu0 0.0
  %165 = vmatpush1.msra.mxu0 0.0
  %166 = vmatprep.subr.mxu0 0.0
  %167 = vmatpush1.msra.mxu0 0.0
  %168 = vmatprep.subr.mxu0 0.0
  %169 = vmatpush1.msra.mxu0 0.0
  %170 = vmatprep.subr.mxu0 0.0
  %171 = vmatpush1.msra.mxu0 0.0
  %172 = vmatprep.subr.mxu0 0.0
  %173 = vmatpush1.msra.mxu0 0.0
  %174 = vmatprep.subr.mxu0 0.0
  %175 = vmatpush1.msra.mxu0 0.0
  %176 = vmatprep.subr.mxu0 0.0
  %177 = vmatpush1.msra.mxu0 0.0
  %178 = vmatprep.subr.mxu0 0.0
  %179 = vmatpush1.msra.mxu0 0.0
  %180 = vmatprep.subr.mxu0 0.0
  %181 = vmatpush1.msra.mxu0 0.0
  %182 = vmatprep.subr.mxu0 0.0
  %183 = vmatpush1.msra.mxu0 0.0
  %184 = vmatprep.subr.mxu0 0.0
  %185 = vmatpush1.msra.mxu0 0.0
  %186 = vmatprep.subr.mxu0 0.0
  %187 = vmatpush1.msra.mxu0 0.0
  %188 = vmatprep.subr.mxu0 0.0
  %189 = vmatpush1.msra.mxu0 0.0
  %190 = vmatprep.subr.mxu0 0.0
  %191 = vmatpush1.msra.mxu0 0.0
  %192 = vmatprep.subr.mxu0 0.0
  %193 = vmatpush1.msra.mxu0 0.0
  %194 = vmatprep.subr.mxu0 0.0
  %195 = vmatpush1.msra.mxu0 0.0
  %196 = vmatprep.subr.mxu0 0.0
  %197 = vmatpush1.msra.mxu0 0.0
  %198 = vmatprep.subr.mxu0 0.0
  %199 = vmatpush1.msra.mxu0 0.0
  %200 = vmatprep.mubr.f32.mxu0 0.0
  %v201 = vand.u32 %v125, 4294901760
  %v202 = vsub.f32 %v125, %v201
  %v203 = vand.u32 %v202, 4294901760
  %v204 = vsub.f32 %v202, %v203
  %v205 = vand.u32 %v204, 4294901760
  %206 = vmatmul.mubr.f32.gmra.mrb[0].mxu0 %v205
  %v207 = vpop.f32.mrb[0].mxu0
  %v208 = vadd.f32 0.0, %v207
  %v209 = vpop.f32.mrb[0].mxu0
  %210 = vmatprep.mubr.f32.mxu0 0.0
  %v211 = vand.u32 %v128, 4294901760
  %v212 = vsub.f32 %v128, %v211
  %v213 = vand.u32 %v212, 4294901760
  %v214 = vsub.f32 %v212, %v213
  %v215 = vand.u32 %v214, 4294901760
  %216 = vmatmul.mubr.f32.gmra.mrb[0].mxu0 %v215
  %v217 = vpop.f32.mrb[0].mxu0
  %v218 = vadd.f32 0.0, %v217
  %v219 = vpop.f32.mrb[0].mxu0
  %220 = vdwg.mxu0
  %221 = vmatprep.subr.mxu0 0.0
  %v222 = vand.u32 %v112, 4294901760
  %v223 = vsub.f32 %v112, %v222
  %v224 = vand.u32 %v223, 4294901760
  %v225 = vsub.f32 %v223, %v224
  %v226 = vand.u32 %v225, 4294901760
  %227 = vmatpush1.msra.mxu0 %v226
  %228 = vmatprep.subr.mxu0 0.0
  %v229 = vand.u32 %v117, 4294901760
  %v230 = vsub.f32 %v117, %v229
  %v231 = vand.u32 %v230, 4294901760
  %v232 = vsub.f32 %v230, %v231
  %v233 = vand.u32 %v232, 4294901760
  %234 = vmatpush1.msra.mxu0 %v233
  %235 = vmatprep.subr.mxu0 0.0
  %v236 = vand.u32 %v120, 4294901760
  %v237 = vsub.f32 %v120, %v236
  %v238 = vand.u32 %v237, 4294901760
  %v239 = vsub.f32 %v237, %v238
  %v240 = vand.u32 %v239, 4294901760
  %241 = vmatpush1.msra.mxu0 %v240
  %242 = vmatprep.subr.mxu0 0.0
  %v243 = vand.u32 %v130, 4294901760
  %v244 = vsub.f32 %v130, %v243
  %v245 = vand.u32 %v244, 4294901760
  %v246 = vsub.f32 %v244, %v245
  %v247 = vand.u32 %v246, 4294901760
  %248 = vmatpush1.msra.mxu0 %v247
  %249 = vmatprep.subr.mxu0 0.0
  %250 = vmatpush1.msra.mxu0 0.0
  %251 = vmatprep.subr.mxu0 0.0
  %252 = vmatpush1.msra.mxu0 0.0
  %253 = vmatprep.subr.mxu0 0.0
  %254 = vmatpush1.msra.mxu0 0.0
  %255 = vmatprep.subr.mxu0 0.0
  %256 = vmatpush1.msra.mxu0 0.0
  %257 = vmatprep.subr.mxu0 0.0
  %258 = vmatpush1.msra.mxu0 0.0
  %259 = vmatprep.subr.mxu0 0.0
  %260 = vmatpush1.msra.mxu0 0.0
  %261 = vmatprep.subr.mxu0 0.0
  %262 = vmatpush1.msra.mxu0 0.0
  %263 = vmatprep.subr.mxu0 0.0
  %264 = vmatpush1.msra.mxu0 0.0
  %265 = vmatprep.subr.mxu0 0.0
  %266 = vmatpush1.msra.mxu0 0.0
  %267 = vmatprep.subr.mxu0 0.0
  %268 = vmatpush1.msra.mxu0 0.0
  %269 = vmatprep.subr.mxu0 0.0
  %270 = vmatpush1.msra.mxu0 0.0
  %271 = vmatprep.subr.mxu0 0.0
  %272 = vmatpush1.msra.mxu0 0.0
  %273 = vmatprep.subr.mxu0 0.0
  %274 = vmatpush1.msra.mxu0 0.0
  %275 = vmatprep.subr.mxu0 0.0
  %276 = vmatpush1.msra.mxu0 0.0
  %277 = vmatprep.subr.mxu0 0.0
  %278 = vmatpush1.msra.mxu0 0.0
  %279 = vmatprep.subr.mxu0 0.0
  %280 = vmatpush1.msra.mxu0 0.0
  %281 = vmatprep.subr.mxu0 0.0
  %282 = vmatpush1.msra.mxu0 0.0
  %283 = vmatprep.subr.mxu0 0.0
  %284 = vmatpush1.msra.mxu0 0.0
  %285 = vmatprep.subr.mxu0 0.0
  %286 = vmatpush1.msra.mxu0 0.0
  %287 = vmatprep.subr.mxu0 0.0
  %288 = vmatpush1.msra.mxu0 0.0
  %289 = vmatprep.subr.mxu0 0.0
  %290 = vmatpush1.msra.mxu0 0.0
  %291 = vmatprep.subr.mxu0 0.0
  %292 = vmatpush1.msra.mxu0 0.0
  %293 = vmatprep.subr.mxu0 0.0
  %294 = vmatpush1.msra.mxu0 0.0
  %295 = vmatprep.subr.mxu0 0.0
  %296 = vmatpush1.msra.mxu0 0.0
  %297 = vmatprep.subr.mxu0 0.0
  %298 = vmatpush1.msra.mxu0 0.0
  %299 = vmatprep.subr.mxu0 0.0
  %300 = vmatpush1.msra.mxu0 0.0
  %301 = vmatprep.subr.mxu0 0.0
  %302 = vmatpush1.msra.mxu0 0.0
  %303 = vmatprep.subr.mxu0 0.0
  %304 = vmatpush1.msra.mxu0 0.0
  %305 = vmatprep.mubr.f32.mxu0 0.0
  %v306 = vand.u32 %v125, 4294901760
  %307 = vmatmul.mubr.f32.gmra.mrb[0].mxu0 %v306
  %v308 = vpop.f32.mrb[0].mxu0
  %v309 = vadd.f32 %v208, %v308
  %v310 = vpop.f32.mrb[0].mxu0
  %311 = vmatprep.mubr.f32.mxu0 0.0
  %v312 = vand.u32 %v128, 4294901760
  %313 = vmatmul.mubr.f32.gmra.mrb[0].mxu0 %v312
  %v314 = vpop.f32.mrb[0].mxu0
  %v315 = vadd.f32 %v218, %v314
  %v316 = vpop.f32.mrb[0].mxu0
  %317 = vdwg.mxu0
  %318 = vmatprep.subr.mxu0 0.0
  %v319 = vand.u32 %v112, 4294901760
  %v320 = vsub.f32 %v112, %v319
  %321 = vmatpush1.msra.mxu0 %v320
  %322 = vmatprep.subr.mxu0 0.0
  %v323 = vand.u32 %v117, 4294901760
  %v324 = vsub.f32 %v117, %v323
  %325 = vmatpush1.msra.mxu0 %v324
  %326 = vmatprep.subr.mxu0 0.0
  %v327 = vand.u32 %v120, 4294901760
  %v328 = vsub.f32 %v120, %v327
  %329 = vmatpush1.msra.mxu0 %v328
  %330 = vmatprep.subr.mxu0 0.0
  %v331 = vand.u32 %v130, 4294901760
  %v332 = vsub.f32 %v130, %v331
  %333 = vmatpush1.msra.mxu0 %v332
  %334 = vmatprep.subr.mxu0 0.0
  %335 = vmatpush1.msra.mxu0 0.0
  %336 = vmatprep.subr.mxu0 0.0
  %337 = vmatpush1.msra.mxu0 0.0
  %338 = vmatprep.subr.mxu0 0.0
  %339 = vmatpush1.msra.mxu0 0.0
  %340 = vmatprep.subr.mxu0 0.0
  %341 = vmatpush1.msra.mxu0 0.0
  %342 = vmatprep.subr.mxu0 0.0
  %343 = vmatpush1.msra.mxu0 0.0
  %344 = vmatprep.subr.mxu0 0.0
  %345 = vmatpush1.msra.mxu0 0.0
  %346 = vmatprep.subr.mxu0 0.0
  %347 = vmatpush1.msra.mxu0 0.0
  %348 = vmatprep.subr.mxu0 0.0
  %349 = vmatpush1.msra.mxu0 0.0
  %350 = vmatprep.subr.mxu0 0.0
  %351 = vmatpush1.msra.mxu0 0.0
  %352 = vmatprep.subr.mxu0 0.0
  %353 = vmatpush1.msra.mxu0 0.0
  %354 = vmatprep.subr.mxu0 0.0
  %355 = vmatpush1.msra.mxu0 0.0
  %356 = vmatprep.subr.mxu0 0.0
  %357 = vmatpush1.msra.mxu0 0.0
  %358 = vmatprep.subr.mxu0 0.0
  %359 = vmatpush1.msra.mxu0 0.0
  %360 = vmatprep.subr.mxu0 0.0
  %361 = vmatpush1.msra.mxu0 0.0
  %362 = vmatprep.subr.mxu0 0.0
  %363 = vmatpush1.msra.mxu0 0.0
  %364 = vmatprep.subr.mxu0 0.0
  %365 = vmatpush1.msra.mxu0 0.0
  %366 = vmatprep.subr.mxu0 0.0
  %367 = vmatpush1.msra.mxu0 0.0
  %368 = vmatprep.subr.mxu0 0.0
  %369 = vmatpush1.msra.mxu0 0.0
  %370 = vmatprep.subr.mxu0 0.0
  %371 = vmatpush1.msra.mxu0 0.0
  %372 = vmatprep.subr.mxu0 0.0
  %373 = vmatpush1.msra.mxu0 0.0
  %374 = vmatprep.subr.mxu0 0.0
  %375 = vmatpush1.msra.mxu0 0.0
  %376 = vmatprep.subr.mxu0 0.0
  %377 = vmatpush1.msra.mxu0 0.0
  %378 = vmatprep.subr.mxu0 0.0
  %379 = vmatpush1.msra.mxu0 0.0
  %380 = vmatprep.subr.mxu0 0.0
  %381 = vmatpush1.msra.mxu0 0.0
  %382 = vmatprep.subr.mxu0 0.0
  %383 = vmatpush1.msra.mxu0 0.0
  %384 = vmatprep.subr.mxu0 0.0
  %385 = vmatpush1.msra.mxu0 0.0
  %386 = vmatprep.subr.mxu0 0.0
  %387 = vmatpush1.msra.mxu0 0.0
  %388 = vmatprep.subr.mxu0 0.0
  %389 = vmatpush1.msra.mxu0 0.0
  %390 = vmatprep.mubr.f32.mxu0 0.0
  %v391 = vand.u32 %v125, 4294901760
  %v392 = vsub.f32 %v125, %v391
  %393 = vmatmul.mubr.f32.gmra.mrb[0].mxu0 %v392
  %v394 = vpop.f32.mrb[0].mxu0
  %v395 = vadd.f32 %v309, %v394
  %v396 = vpop.f32.mrb[0].mxu0
  %397 = vmatprep.mubr.f32.mxu0 0.0
  %v398 = vand.u32 %v128, 4294901760
  %v399 = vsub.f32 %v128, %v398
  %400 = vmatmul.mubr.f32.gmra.mrb[0].mxu0 %v399
  %v401 = vpop.f32.mrb[0].mxu0
  %v402 = vadd.f32 %v315, %v401
  %v403 = vpop.f32.mrb[0].mxu0
  %404 = vdwg.mxu0
  %405 = vmatprep.subr.mxu0 0.0
  %v406 = vand.u32 %v112, 4294901760
  %407 = vmatpush1.msra.mxu0 %v406
  %408 = vmatprep.subr.mxu0 0.0
  %v409 = vand.u32 %v117, 4294901760
  %410 = vmatpush1.msra.mxu0 %v409
  %411 = vmatprep.subr.mxu0 0.0
  %v412 = vand.u32 %v120, 4294901760
  %413 = vmatpush1.msra.mxu0 %v412
  %414 = vmatprep.subr.mxu0 0.0
  %v415 = vand.u32 %v130, 4294901760
  %416 = vmatpush1.msra.mxu0 %v415
  %417 = vmatprep.subr.mxu0 0.0
  %418 = vmatpush1.msra.mxu0 0.0
  %419 = vmatprep.subr.mxu0 0.0
  %420 = vmatpush1.msra.mxu0 0.0
  %421 = vmatprep.subr.mxu0 0.0
  %422 = vmatpush1.msra.mxu0 0.0
  %423 = vmatprep.subr.mxu0 0.0
  %424 = vmatpush1.msra.mxu0 0.0
  %425 = vmatprep.subr.mxu0 0.0
  %426 = vmatpush1.msra.mxu0 0.0
  %427 = vmatprep.subr.mxu0 0.0
  %428 = vmatpush1.msra.mxu0 0.0
  %429 = vmatprep.subr.mxu0 0.0
  %430 = vmatpush1.msra.mxu0 0.0
  %431 = vmatprep.subr.mxu0 0.0
  %432 = vmatpush1.msra.mxu0 0.0
  %433 = vmatprep.subr.mxu0 0.0
  %434 = vmatpush1.msra.mxu0 0.0
  %435 = vmatprep.subr.mxu0 0.0
  %436 = vmatpush1.msra.mxu0 0.0
  %437 = vmatprep.subr.mxu0 0.0
  %438 = vmatpush1.msra.mxu0 0.0
  %439 = vmatprep.subr.mxu0 0.0
  %440 = vmatpush1.msra.mxu0 0.0
  %441 = vmatprep.subr.mxu0 0.0
  %442 = vmatpush1.msra.mxu0 0.0
  %443 = vmatprep.subr.mxu0 0.0
  %444 = vmatpush1.msra.mxu0 0.0
  %445 = vmatprep.subr.mxu0 0.0
  %446 = vmatpush1.msra.mxu0 0.0
  %447 = vmatprep.subr.mxu0 0.0
  %448 = vmatpush1.msra.mxu0 0.0
  %449 = vmatprep.subr.mxu0 0.0
  %450 = vmatpush1.msra.mxu0 0.0
  %451 = vmatprep.subr.mxu0 0.0
  %452 = vmatpush1.msra.mxu0 0.0
  %453 = vmatprep.subr.mxu0 0.0
  %454 = vmatpush1.msra.mxu0 0.0
  %455 = vmatprep.subr.mxu0 0.0
  %456 = vmatpush1.msra.mxu0 0.0
  %457 = vmatprep.subr.mxu0 0.0
  %458 = vmatpush1.msra.mxu0 0.0
  %459 = vmatprep.subr.mxu0 0.0
  %460 = vmatpush1.msra.mxu0 0.0
  %461 = vmatprep.subr.mxu0 0.0
  %462 = vmatpush1.msra.mxu0 0.0
  %463 = vmatprep.subr.mxu0 0.0
  %464 = vmatpush1.msra.mxu0 0.0
  %465 = vmatprep.subr.mxu0 0.0
  %466 = vmatpush1.msra.mxu0 0.0
  %467 = vmatprep.subr.mxu0 0.0
  %468 = vmatpush1.msra.mxu0 0.0
  %469 = vmatprep.subr.mxu0 0.0
  %470 = vmatpush1.msra.mxu0 0.0
  %471 = vmatprep.subr.mxu0 0.0
  %472 = vmatpush1.msra.mxu0 0.0
  %473 = vmatprep.mubr.f32.mxu0 0.0
  %v474 = vand.u32 %v125, 4294901760
  %v475 = vsub.f32 %v125, %v474
  %v476 = vand.u32 %v475, 4294901760
  %477 = vmatmul.mubr.f32.gmra.mrb[0].mxu0 %v476
  %v478 = vpop.f32.mrb[0].mxu0
  %v479 = vadd.f32 %v395, %v478
  %v480 = vpop.f32.mrb[0].mxu0
  %481 = vmatprep.mubr.f32.mxu0 0.0
  %v482 = vand.u32 %v128, 4294901760
  %v483 = vsub.f32 %v128, %v482
  %v484 = vand.u32 %v483, 4294901760
  %485 = vmatmul.mubr.f32.gmra.mrb[0].mxu0 %v484
  %v486 = vpop.f32.mrb[0].mxu0
  %v487 = vadd.f32 %v402, %v486
  %v488 = vpop.f32.mrb[0].mxu0
  %489 = vdwg.mxu0
  %490 = vmatprep.subr.mxu0 0.0
  %v491 = vand.u32 %v112, 4294901760
  %v492 = vsub.f32 %v112, %v491
  %v493 = vand.u32 %v492, 4294901760
  %494 = vmatpush1.msra.mxu0 %v493
  %495 = vmatprep.subr.mxu0 0.0
  %v496 = vand.u32 %v117, 4294901760
  %v497 = vsub.f32 %v117, %v496
  %v498 = vand.u32 %v497, 4294901760
  %499 = vmatpush1.msra.mxu0 %v498
  %500 = vmatprep.subr.mxu0 0.0
  %v501 = vand.u32 %v120, 4294901760
  %v502 = vsub.f32 %v120, %v501
  %v503 = vand.u32 %v502, 4294901760
  %504 = vmatpush1.msra.mxu0 %v503
  %505 = vmatprep.subr.mxu0 0.0
  %v506 = vand.u32 %v130, 4294901760
  %v507 = vsub.f32 %v130, %v506
  %v508 = vand.u32 %v507, 4294901760
  %509 = vmatpush1.msra.mxu0 %v508
  %510 = vmatprep.subr.mxu0 0.0
  %511 = vmatpush1.msra.mxu0 0.0
  %512 = vmatprep.subr.mxu0 0.0
  %513 = vmatpush1.msra.mxu0 0.0
  %514 = vmatprep.subr.mxu0 0.0
  %515 = vmatpush1.msra.mxu0 0.0
  %516 = vmatprep.subr.mxu0 0.0
  %517 = vmatpush1.msra.mxu0 0.0
  %518 = vmatprep.subr.mxu0 0.0
  %519 = vmatpush1.msra.mxu0 0.0
  %520 = vmatprep.subr.mxu0 0.0
  %521 = vmatpush1.msra.mxu0 0.0
  %522 = vmatprep.subr.mxu0 0.0
  %523 = vmatpush1.msra.mxu0 0.0
  %524 = vmatprep.subr.mxu0 0.0
  %525 = vmatpush1.msra.mxu0 0.0
  %526 = vmatprep.subr.mxu0 0.0
  %527 = vmatpush1.msra.mxu0 0.0
  %528 = vmatprep.subr.mxu0 0.0
  %529 = vmatpush1.msra.mxu0 0.0
  %530 = vmatprep.subr.mxu0 0.0
  %531 = vmatpush1.msra.mxu0 0.0
  %532 = vmatprep.subr.mxu0 0.0
  %533 = vmatpush1.msra.mxu0 0.0
  %534 = vmatprep.subr.mxu0 0.0
  %535 = vmatpush1.msra.mxu0 0.0
  %536 = vmatprep.subr.mxu0 0.0
  %537 = vmatpush1.msra.mxu0 0.0
  %538 = vmatprep.subr.mxu0 0.0
  %539 = vmatpush1.msra.mxu0 0.0
  %540 = vmatprep.subr.mxu0 0.0
  %541 = vmatpush1.msra.mxu0 0.0
  %542 = vmatprep.subr.mxu0 0.0
  %543 = vmatpush1.msra.mxu0 0.0
  %544 = vmatprep.subr.mxu0 0.0
  %545 = vmatpush1.msra.mxu0 0.0
  %546 = vmatprep.subr.mxu0 0.0
  %547 = vmatpush1.msra.mxu0 0.0
  %548 = vmatprep.subr.mxu0 0.0
  %549 = vmatpush1.msra.mxu0 0.0
  %550 = vmatprep.subr.mxu0 0.0
  %551 = vmatpush1.msra.mxu0 0.0
  %552 = vmatprep.subr.mxu0 0.0
  %553 = vmatpush1.msra.mxu0 0.0
  %554 = vmatprep.subr.mxu0 0.0
  %555 = vmatpush1.msra.mxu0 0.0
  %556 = vmatprep.subr.mxu0 0.0
  %557 = vmatpush1.msra.mxu0 0.0
  %558 = vmatprep.subr.mxu0 0.0
  %559 = vmatpush1.msra.mxu0 0.0
  %560 = vmatprep.subr.mxu0 0.0
  %561 = vmatpush1.msra.mxu0 0.0
  %562 = vmatprep.subr.mxu0 0.0
  %563 = vmatpush1.msra.mxu0 0.0
  %564 = vmatprep.subr.mxu0 0.0
  %565 = vmatpush1.msra.mxu0 0.0
  %566 = vmatprep.mubr.f32.mxu0 0.0
  %v567 = vand.u32 %v125, 4294901760
  %568 = vmatmul.mubr.f32.gmra.mrb[0].mxu0 %v567
  %v569 = vpop.f32.mrb[0].mxu0
  %v570 = vadd.f32 %v479, %v569
  %v571 = vpop.f32.mrb[0].mxu0
  %572 = vmatprep.mubr.f32.mxu0 0.0
  %v573 = vand.u32 %v128, 4294901760
  %574 = vmatmul.mubr.f32.gmra.mrb[0].mxu0 %v573
  %v575 = vpop.f32.mrb[0].mxu0
  %v576 = vadd.f32 %v487, %v575
  %v577 = vpop.f32.mrb[0].mxu0
  %578 = vdwg.mxu0
  %579 = vmatprep.subr.mxu0 0.0
  %v580 = vand.u32 %v112, 4294901760
  %581 = vmatpush1.msra.mxu0 %v580
  %582 = vmatprep.subr.mxu0 0.0
  %v583 = vand.u32 %v117, 4294901760
  %584 = vmatpush1.msra.mxu0 %v583
  %585 = vmatprep.subr.mxu0 0.0
  %v586 = vand.u32 %v120, 4294901760
  %587 = vmatpush1.msra.mxu0 %v586
  %588 = vmatprep.subr.mxu0 0.0
  %v589 = vand.u32 %v130, 4294901760
  %590 = vmatpush1.msra.mxu0 %v589
  %591 = vmatprep.subr.mxu0 0.0
  %592 = vmatpush1.msra.mxu0 0.0
  %593 = vmatprep.subr.mxu0 0.0
  %594 = vmatpush1.msra.mxu0 0.0
  %595 = vmatprep.subr.mxu0 0.0
  %596 = vmatpush1.msra.mxu0 0.0
  %597 = vmatprep.subr.mxu0 0.0
  %598 = vmatpush1.msra.mxu0 0.0
  %599 = vmatprep.subr.mxu0 0.0
  %600 = vmatpush1.msra.mxu0 0.0
  %601 = vmatprep.subr.mxu0 0.0
  %602 = vmatpush1.msra.mxu0 0.0
  %603 = vmatprep.subr.mxu0 0.0
  %604 = vmatpush1.msra.mxu0 0.0
  %605 = vmatprep.subr.mxu0 0.0
  %606 = vmatpush1.msra.mxu0 0.0
  %607 = vmatprep.subr.mxu0 0.0
  %608 = vmatpush1.msra.mxu0 0.0
  %609 = vmatprep.subr.mxu0 0.0
  %610 = vmatpush1.msra.mxu0 0.0
  %611 = vmatprep.subr.mxu0 0.0
  %612 = vmatpush1.msra.mxu0 0.0
  %613 = vmatprep.subr.mxu0 0.0
  %614 = vmatpush1.msra.mxu0 0.0
  %615 = vmatprep.subr.mxu0 0.0
  %616 = vmatpush1.msra.mxu0 0.0
  %617 = vmatprep.subr.mxu0 0.0
  %618 = vmatpush1.msra.mxu0 0.0
  %619 = vmatprep.subr.mxu0 0.0
  %620 = vmatpush1.msra.mxu0 0.0
  %621 = vmatprep.subr.mxu0 0.0
  %622 = vmatpush1.msra.mxu0 0.0
  %623 = vmatprep.subr.mxu0 0.0
  %624 = vmatpush1.msra.mxu0 0.0
  %625 = vmatprep.subr.mxu0 0.0
  %626 = vmatpush1.msra.mxu0 0.0
  %627 = vmatprep.subr.mxu0 0.0
  %628 = vmatpush1.msra.mxu0 0.0
  %629 = vmatprep.subr.mxu0 0.0
  %630 = vmatpush1.msra.mxu0 0.0
  %631 = vmatprep.subr.mxu0 0.0
  %632 = vmatpush1.msra.mxu0 0.0
  %633 = vmatprep.subr.mxu0 0.0
  %634 = vmatpush1.msra.mxu0 0.0
  %635 = vmatprep.subr.mxu0 0.0
  %636 = vmatpush1.msra.mxu0 0.0
  %637 = vmatprep.subr.mxu0 0.0
  %638 = vmatpush1.msra.mxu0 0.0
  %639 = vmatprep.subr.mxu0 0.0
  %640 = vmatpush1.msra.mxu0 0.0
  %641 = vmatprep.subr.mxu0 0.0
  %642 = vmatpush1.msra.mxu0 0.0
  %643 = vmatprep.subr.mxu0 0.0
  %644 = vmatpush1.msra.mxu0 0.0
  %645 = vmatprep.subr.mxu0 0.0
  %646 = vmatpush1.msra.mxu0 0.0
  %647 = vmatprep.mubr.f32.mxu0 0.0
  %v648 = vand.u32 %v125, 4294901760
  %649 = vmatmul.mubr.f32.gmra.mrb[0].mxu0 %v648
  %v650 = vpop.f32.mrb[0].mxu0
  %v651 = vadd.f32 %v570, %v650
  %v652 = vpop.f32.mrb[0].mxu0
  %653 = vmatprep.mubr.f32.mxu0 0.0
  %v654 = vand.u32 %v128, 4294901760
  %655 = vmatmul.mubr.f32.gmra.mrb[0].mxu0 %v654
  %v656 = vpop.f32.mrb[0].mxu0
  %v657 = vadd.f32 %v576, %v656
  %v658 = vpop.f32.mrb[0].mxu0
  %659 = vdwg.mxu0
  %660 = vadd.xlane.f32.xlu0 %v651
  %v661 = vpop.xlane.xlu0 %660
  %662 = vadd.xlane.f32.xlu0 %v657
  %v663 = vpop.xlane.xlu0 %662
  %v664 = vmul.f32 %v661, 0.0078125
  %v665 = vmul.f32 %v663, 0.0078125
  %v666 = vsub.f32 %v651, %v664
  %v667 = vsub.f32 %v657, %v665
  %v668 = vmul.f32 %v666, %v666
  %v669 = vmul.f32 %v667, %v667
  %670 = vadd.xlane.f32.xlu0 %v668
  %v671 = vpop.xlane.xlu0 %670
  %672 = vadd.xlane.f32.xlu0 %v669
  %v673 = vpop.xlane.xlu0 %672
  %v674 = vmul.f32 %v671, 0.0078125
  %v675 = vmul.f32 %v673, 0.0078125
  %v676 = vadd.f32 %v674, 1e-05
  %v677 = vadd.f32 %v675, 1e-05
  %v678 = vrsqrt.pop %v676
  %v679 = vrsqrt.pop %v677
  %v680 = vmul.f32 %v39, %v678
  %v681 = vmul.f32 %v40, %v679
  %683 = vset.pattern.permute.xlu0 0
  %684 = vperm.xlu0 %683, %v680
  %v685 = vpop.permute.xlu0 %684
  %688 = vset.pattern.permute.xlu0 0
  %689 = vperm.xlu0 %688, %v681
  %v690 = vpop.permute.xlu0 %689
  %v692 = vmul.f32 %v666, %v685
  %v693 = vmul.f32 %v667, %v690
  %695 = vset.pattern.permute.xlu0 1
  %696 = vperm.xlu0 %695, %v39
  %v697 = vpop.permute.xlu0 %696
  %700 = vset.pattern.permute.xlu0 1
  %701 = vperm.xlu0 %700, %v40
  %v702 = vpop.permute.xlu0 %701
  %v704 = vadd.f32 %v692, %v697
  %v705 = vadd.f32 %v693, %v702
  %v706 = vmax.f32 %v704, 0.0
  %v707 = vmax.f32 %v705, 0.0
  %v708 = vld [vmem:[%s3] sm:$0xff]
  %v709 = vld [vmem:[%s3 + $0x8] sm:$0xff]
  %v710 = vld [vmem:[%s3 + $0x10] sm:$0xff]
  %v711 = vld [vmem:[%s3 + $0x18] sm:$0xff]
  %v712 = vld [vmem:[%s3 + $0x20] sm:$0xff]
  %v713 = vld [vmem:[%s3 + $0x28] sm:$0xff]
  %v714 = vld [vmem:[%s3 + $0x30] sm:$0xff]
  %v715 = vld [vmem:[%s3 + $0x38] sm:$0xff]
  %718 = vrot.lane.b32.xlu0 %v706, 9
  %v719 = vpop.permute.xlu0 %718
  %720 = vrot.lane.b32.xlu0 %v707, 9
  %v721 = vpop.permute.xlu0 %720
  %v724 = vsel %vm54, %v719, 0.0
  %v725 = vsel %vm54, %v721, 0.0
  %726 = vrot.lane.b32.xlu0 %v706, 8
  %v727 = vpop.permute.xlu0 %726
  %728 = vrot.lane.b32.xlu0 %v707, 8
  %v729 = vpop.permute.xlu0 %728
  %v732 = vsel %vm68, %v727, 0.0
  %v733 = vsel %vm68, %v729, 0.0
  %734 = vrot.lane.b32.xlu0 %v706, 7
  %v735 = vpop.permute.xlu0 %734
  %736 = vrot.lane.b32.xlu0 %v707, 7
  %v737 = vpop.permute.xlu0 %736
  %v740 = vsel %vm36, 1, 0
  %v741 = vlaneseq
  %v742 = vshrl.u32 %v741, 7
  %v743 = vsub.s32 0, %v742
  %v744 = vrot.slane %v740, %v743
  %vm745 = vcmp.eq.s32.totalorder %v744, 1
  %v746 = vsel %vm745, %v735, 0.0
  %v747 = vsel %vm745, %v737, 0.0
  %748 = vrot.lane.b32.xlu0 %v706, 1
  %v749 = vpop.permute.xlu0 %748
  %750 = vrot.lane.b32.xlu0 %v707, 1
  %v751 = vpop.permute.xlu0 %750
  %v754 = vsel %vm79, %v749, 0.0
  %v755 = vsel %vm79, %v751, 0.0
  %756 = vrot.lane.b32.xlu0 %v706, 127
  %v757 = vpop.permute.xlu0 %756
  %758 = vrot.lane.b32.xlu0 %v707, 127
  %v759 = vpop.permute.xlu0 %758
  %v762 = vsel %vm34, 1, 0
  %v763 = vlaneseq
  %v764 = vshrl.u32 %v763, 7
  %v765 = vsub.s32 0, %v764
  %v766 = vrot.slane %v762, %v765
  %vm767 = vcmp.eq.s32.totalorder %v766, 1
  %v768 = vsel %vm767, %v757, 0.0
  %v769 = vsel %vm767, %v759, 0.0
  %770 = vrot.lane.b32.xlu0 %v706, 121
  %v771 = vpop.permute.xlu0 %770
  %772 = vrot.lane.b32.xlu0 %v707, 121
  %v773 = vpop.permute.xlu0 %772
  %v776 = vsel %vm37, 1, 0
  %v777 = vlaneseq
  %v778 = vshrl.u32 %v777, 7
  %v779 = vsub.s32 0, %v778
  %v780 = vrot.slane %v776, %v779
  %vm781 = vcmp.eq.s32.totalorder %v780, 1
  %v782 = vsel %vm781, %v771, 0.0
  %v783 = vsel %vm781, %v773, 0.0
  %784 = vrot.lane.b32.xlu0 %v706, 120
  %v785 = vpop.permute.xlu0 %784
  %786 = vrot.lane.b32.xlu0 %v707, 120
  %v787 = vpop.permute.xlu0 %786
  %v790 = vsel %vm32, 1, 0
  %v791 = vlaneseq
  %v792 = vshrl.u32 %v791, 7
  %v793 = vsub.s32 0, %v792
  %v794 = vrot.slane %v790, %v793
  %vm795 = vcmp.eq.s32.totalorder %v794, 1
  %v796 = vsel %vm795, %v785, 0.0
  %v797 = vsel %vm795, %v787, 0.0
  %798 = vrot.lane.b32.xlu0 %v706, 119
  %v799 = vpop.permute.xlu0 %798
  %800 = vrot.lane.b32.xlu0 %v707, 119
  %v801 = vpop.permute.xlu0 %800
  %v804 = vsel %vm38, 1, 0
  %v805 = vlaneseq
  %v806 = vshrl.u32 %v805, 7
  %v807 = vsub.s32 0, %v806
  %v808 = vrot.slane %v804, %v807
  %vm809 = vcmp.eq.s32.totalorder %v808, 1
  %v810 = vsel %vm809, %v799, 0.0
  %v811 = vsel %vm809, %v801, 0.0
  %vm812 = vcmask 130048
  %v814 = vsel %vm812, %v709, 0
  %v817 = vsel %vm812, %v711, 0
  %v820 = vsel %vm812, %v713, 0
  %v823 = vsel %vm812, %v715, 0
  %825 = vmatprep.subr.mxu0 0.0
  %v826 = vand.u32 %v724, 4294901760
  %827 = vmatpush1.msra.mxu0 %v826
  %828 = vmatprep.subr.mxu0 0.0
  %v829 = vand.u32 %v725, 4294901760
  %830 = vmatpush1.msra.mxu0 %v829
  %831 = vmatprep.subr.mxu0 0.0
  %v832 = vand.u32 %v732, 4294901760
  %833 = vmatpush1.msra.mxu0 %v832
  %834 = vmatprep.subr.mxu0 0.0
  %v835 = vand.u32 %v733, 4294901760
  %836 = vmatpush1.msra.mxu0 %v835
  %837 = vmatprep.subr.mxu0 0.0
  %v838 = vand.u32 %v746, 4294901760
  %839 = vmatpush1.msra.mxu0 %v838
  %840 = vmatprep.subr.mxu0 0.0
  %v841 = vand.u32 %v747, 4294901760
  %842 = vmatpush1.msra.mxu0 %v841
  %843 = vmatprep.subr.mxu0 0.0
  %v844 = vand.u32 %v754, 4294901760
  %845 = vmatpush1.msra.mxu0 %v844
  %846 = vmatprep.subr.mxu0 0.0
  %v847 = vand.u32 %v755, 4294901760
  %848 = vmatpush1.msra.mxu0 %v847
  %849 = vmatprep.subr.mxu0 0.0
  %v850 = vand.u32 %v706, 4294901760
  %851 = vmatpush1.msra.mxu0 %v850
  %852 = vmatprep.subr.mxu0 0.0
  %v853 = vand.u32 %v707, 4294901760
  %854 = vmatpush1.msra.mxu0 %v853
  %855 = vmatprep.subr.mxu0 0.0
  %v856 = vand.u32 %v768, 4294901760
  %857 = vmatpush1.msra.mxu0 %v856
  %858 = vmatprep.subr.mxu0 0.0
  %v859 = vand.u32 %v769, 4294901760
  %860 = vmatpush1.msra.mxu0 %v859
  %861 = vmatprep.subr.mxu0 0.0
  %v862 = vand.u32 %v782, 4294901760
  %863 = vmatpush1.msra.mxu0 %v862
  %864 = vmatprep.subr.mxu0 0.0
  %v865 = vand.u32 %v783, 4294901760
  %866 = vmatpush1.msra.mxu0 %v865
  %867 = vmatprep.subr.mxu0 0.0
  %v868 = vand.u32 %v796, 4294901760
  %869 = vmatpush1.msra.mxu0 %v868
  %870 = vmatprep.subr.mxu0 0.0
  %v871 = vand.u32 %v797, 4294901760
  %872 = vmatpush1.msra.mxu0 %v871
  %873 = vmatprep.subr.mxu0 0.0
  %v874 = vand.u32 %v810, 4294901760
  %875 = vmatpush1.msra.mxu0 %v874
  %876 = vmatprep.subr.mxu0 0.0
  %v877 = vand.u32 %v811, 4294901760
  %878 = vmatpush1.msra.mxu0 %v877
  %879 = vmatprep.subr.mxu0 0.0
  %880 = vmatpush1.msra.mxu0 0.0
  %881 = vmatprep.subr.mxu0 0.0
  %882 = vmatpush1.msra.mxu0 0.0
  %883 = vmatprep.subr.mxu0 0.0
  %884 = vmatpush1.msra.mxu0 0.0
  %885 = vmatprep.subr.mxu0 0.0
  %886 = vmatpush1.msra.mxu0 0.0
  %887 = vmatprep.subr.mxu0 0.0
  %888 = vmatpush1.msra.mxu0 0.0
  %889 = vmatprep.subr.mxu0 0.0
  %890 = vmatpush1.msra.mxu0 0.0
  %891 = vmatprep.subr.mxu0 0.0
  %892 = vmatpush1.msra.mxu0 0.0
  %893 = vmatprep.subr.mxu0 0.0
  %894 = vmatpush1.msra.mxu0 0.0
  %895 = vmatprep.subr.mxu0 0.0
  %896 = vmatpush1.msra.mxu0 0.0
  %897 = vmatprep.subr.mxu0 0.0
  %898 = vmatpush1.msra.mxu0 0.0
  %899 = vmatprep.subr.mxu0 0.0
  %900 = vmatpush1.msra.mxu0 0.0
  %901 = vmatprep.subr.mxu0 0.0
  %902 = vmatpush1.msra.mxu0 0.0
  %903 = vmatprep.subr.mxu0 0.0
  %904 = vmatpush1.msra.mxu0 0.0
  %905 = vmatprep.subr.mxu0 0.0
  %906 = vmatpush1.msra.mxu0 0.0
  %v907 = vand.u32 %v814, 4294901760
  %v908 = vsub.f32 %v814, %v907
  %v909 = vand.u32 %v908, 4294901760
  %v910 = vsub.f32 %v908, %v909
  %v911 = vand.u32 %v910, 4294901760
  %912 = vmatprep.mubr.f32.mxu0 %v911
  %v913 = vand.u32 %v708, 4294901760
  %v914 = vsub.f32 %v708, %v913
  %v915 = vand.u32 %v914, 4294901760
  %v916 = vsub.f32 %v914, %v915
  %v917 = vand.u32 %v916, 4294901760
  %918 = vmatmul.mubr.f32.gmra.mrb[0].mxu0 %v917
  %v919 = vpop.f32.mrb[0].mxu0
  %v920 = vadd.f32 0.0, %v919
  %v921 = vpop.f32.mrb[0].mxu0
  %v922 = vand.u32 %v817, 4294901760
  %v923 = vsub.f32 %v817, %v922
  %v924 = vand.u32 %v923, 4294901760
  %v925 = vsub.f32 %v923, %v924
  %v926 = vand.u32 %v925, 4294901760
  %927 = vmatprep.mubr.f32.mxu0 %v926
  %v928 = vand.u32 %v710, 4294901760
  %v929 = vsub.f32 %v710, %v928
  %v930 = vand.u32 %v929, 4294901760
  %v931 = vsub.f32 %v929, %v930
  %v932 = vand.u32 %v931, 4294901760
  %933 = vmatmul.mubr.f32.gmra.mrb[0].mxu0 %v932
  %v934 = vpop.f32.mrb[0].mxu0
  %v935 = vadd.f32 0.0, %v934
  %v936 = vpop.f32.mrb[0].mxu0
  %v937 = vand.u32 %v820, 4294901760
  %v938 = vsub.f32 %v820, %v937
  %v939 = vand.u32 %v938, 4294901760
  %v940 = vsub.f32 %v938, %v939
  %v941 = vand.u32 %v940, 4294901760
  %942 = vmatprep.mubr.f32.mxu0 %v941
  %v943 = vand.u32 %v712, 4294901760
  %v944 = vsub.f32 %v712, %v943
  %v945 = vand.u32 %v944, 4294901760
  %v946 = vsub.f32 %v944, %v945
  %v947 = vand.u32 %v946, 4294901760
  %948 = vmatmul.mubr.f32.gmra.mrb[0].mxu0 %v947
  %v949 = vpop.f32.mrb[0].mxu0
  %v950 = vadd.f32 0.0, %v949
  %v951 = vpop.f32.mrb[0].mxu0
  %v952 = vand.u32 %v823, 4294901760
  %v953 = vsub.f32 %v823, %v952
  %v954 = vand.u32 %v953, 4294901760
  %v955 = vsub.f32 %v953, %v954
  %v956 = vand.u32 %v955, 4294901760
  %957 = vmatprep.mubr.f32.mxu0 %v956
  %v958 = vand.u32 %v714, 4294901760
  %v959 = vsub.f32 %v714, %v958
  %v960 = vand.u32 %v959, 4294901760
  %v961 = vsub.f32 %v959, %v960
  %v962 = vand.u32 %v961, 4294901760
  %963 = vmatmul.mubr.f32.gmra.mrb[0].mxu0 %v962
  %v964 = vpop.f32.mrb[0].mxu0
  %v965 = vadd.f32 0.0, %v964
  %v966 = vpop.f32.mrb[0].mxu0
  %967 = vdwg.mxu0
  %968 = vmatprep.subr.mxu0 0.0
  %v969 = vand.u32 %v724, 4294901760
  %v970 = vsub.f32 %v724, %v969
  %v971 = vand.u32 %v970, 4294901760
  %v972 = vsub.f32 %v970, %v971
  %v973 = vand.u32 %v972, 4294901760
  %974 = vmatpush1.msra.mxu0 %v973
  %975 = vmatprep.subr.mxu0 0.0
  %v976 = vand.u32 %v725, 4294901760
  %v977 = vsub.f32 %v725, %v976
  %v978 = vand.u32 %v977, 4294901760
  %v979 = vsub.f32 %v977, %v978
  %v980 = vand.u32 %v979, 4294901760
  %981 = vmatpush1.msra.mxu0 %v980
  %982 = vmatprep.subr.mxu0 0.0
  %v983 = vand.u32 %v732, 4294901760
  %v984 = vsub.f32 %v732, %v983
  %v985 = vand.u32 %v984, 4294901760
  %v986 = vsub.f32 %v984, %v985
  %v987 = vand.u32 %v986, 4294901760
  %988 = vmatpush1.msra.mxu0 %v987
  %989 = vmatprep.subr.mxu0 0.0
  %v990 = vand.u32 %v733, 4294901760
  %v991 = vsub.f32 %v733, %v990
  %v992 = vand.u32 %v991, 4294901760
  %v993 = vsub.f32 %v991, %v992
  %v994 = vand.u32 %v993, 4294901760
  %995 = vmatpush1.msra.mxu0 %v994
  %996 = vmatprep.subr.mxu0 0.0
  %v997 = vand.u32 %v746, 4294901760
  %v998 = vsub.f32 %v746, %v997
  %v999 = vand.u32 %v998, 4294901760
  %v1000 = vsub.f32 %v998, %v999
  %v1001 = vand.u32 %v1000, 4294901760
  %1002 = vmatpush1.msra.mxu0 %v1001
  %1003 = vmatprep.subr.mxu0 0.0
  %v1004 = vand.u32 %v747, 4294901760
  %v1005 = vsub.f32 %v747, %v1004
  %v1006 = vand.u32 %v1005, 4294901760
  %v1007 = vsub.f32 %v1005, %v1006
  %v1008 = vand.u32 %v1007, 4294901760
  %1009 = vmatpush1.msra.mxu0 %v1008
  %1010 = vmatprep.subr.mxu0 0.0
  %v1011 = vand.u32 %v754, 4294901760
  %v1012 = vsub.f32 %v754, %v1011
  %v1013 = vand.u32 %v1012, 4294901760
  %v1014 = vsub.f32 %v1012, %v1013
  %v1015 = vand.u32 %v1014, 4294901760
  %1016 = vmatpush1.msra.mxu0 %v1015
  %1017 = vmatprep.subr.mxu0 0.0
  %v1018 = vand.u32 %v755, 4294901760
  %v1019 = vsub.f32 %v755, %v1018
  %v1020 = vand.u32 %v1019, 4294901760
  %v1021 = vsub.f32 %v1019, %v1020
  %v1022 = vand.u32 %v1021, 4294901760
  %1023 = vmatpush1.msra.mxu0 %v1022
  %1024 = vmatprep.subr.mxu0 0.0
  %v1025 = vand.u32 %v706, 4294901760
  %v1026 = vsub.f32 %v706, %v1025
  %v1027 = vand.u32 %v1026, 4294901760
  %v1028 = vsub.f32 %v1026, %v1027
  %v1029 = vand.u32 %v1028, 4294901760
  %1030 = vmatpush1.msra.mxu0 %v1029
  %1031 = vmatprep.subr.mxu0 0.0
  %v1032 = vand.u32 %v707, 4294901760
  %v1033 = vsub.f32 %v707, %v1032
  %v1034 = vand.u32 %v1033, 4294901760
  %v1035 = vsub.f32 %v1033, %v1034
  %v1036 = vand.u32 %v1035, 4294901760
  %1037 = vmatpush1.msra.mxu0 %v1036
  %1038 = vmatprep.subr.mxu0 0.0
  %v1039 = vand.u32 %v768, 4294901760
  %v1040 = vsub.f32 %v768, %v1039
  %v1041 = vand.u32 %v1040, 4294901760
  %v1042 = vsub.f32 %v1040, %v1041
  %v1043 = vand.u32 %v1042, 4294901760
  %1044 = vmatpush1.msra.mxu0 %v1043
  %1045 = vmatprep.subr.mxu0 0.0
  %v1046 = vand.u32 %v769, 4294901760
  %v1047 = vsub.f32 %v769, %v1046
  %v1048 = vand.u32 %v1047, 4294901760
  %v1049 = vsub.f32 %v1047, %v1048
  %v1050 = vand.u32 %v1049, 4294901760
  %1051 = vmatpush1.msra.mxu0 %v1050
  %1052 = vmatprep.subr.mxu0 0.0
  %v1053 = vand.u32 %v782, 4294901760
  %v1054 = vsub.f32 %v782, %v1053
  %v1055 = vand.u32 %v1054, 4294901760
  %v1056 = vsub.f32 %v1054, %v1055
  %v1057 = vand.u32 %v1056, 4294901760
  %1058 = vmatpush1.msra.mxu0 %v1057
  %1059 = vmatprep.subr.mxu0 0.0
  %v1060 = vand.u32 %v783, 4294901760
  %v1061 = vsub.f32 %v783, %v1060
  %v1062 = vand.u32 %v1061, 4294901760
  %v1063 = vsub.f32 %v1061, %v1062
  %v1064 = vand.u32 %v1063, 4294901760
  %1065 = vmatpush1.msra.mxu0 %v1064
  %1066 = vmatprep.subr.mxu0 0.0
  %v1067 = vand.u32 %v796, 4294901760
  %v1068 = vsub.f32 %v796, %v1067
  %v1069 = vand.u32 %v1068, 4294901760
  %v1070 = vsub.f32 %v1068, %v1069
  %v1071 = vand.u32 %v1070, 4294901760
  %1072 = vmatpush1.msra.mxu0 %v1071
  %1073 = vmatprep.subr.mxu0 0.0
  %v1074 = vand.u32 %v797, 4294901760
  %v1075 = vsub.f32 %v797, %v1074
  %v1076 = vand.u32 %v1075, 4294901760
  %v1077 = vsub.f32 %v1075, %v1076
  %v1078 = vand.u32 %v1077, 4294901760
  %1079 = vmatpush1.msra.mxu0 %v1078
  %1080 = vmatprep.subr.mxu0 0.0
  %v1081 = vand.u32 %v810, 4294901760
  %v1082 = vsub.f32 %v810, %v1081
  %v1083 = vand.u32 %v1082, 4294901760
  %v1084 = vsub.f32 %v1082, %v1083
  %v1085 = vand.u32 %v1084, 4294901760
  %1086 = vmatpush1.msra.mxu0 %v1085
  %1087 = vmatprep.subr.mxu0 0.0
  %v1088 = vand.u32 %v811, 4294901760
  %v1089 = vsub.f32 %v811, %v1088
  %v1090 = vand.u32 %v1089, 4294901760
  %v1091 = vsub.f32 %v1089, %v1090
  %v1092 = vand.u32 %v1091, 4294901760
  %1093 = vmatpush1.msra.mxu0 %v1092
  %1094 = vmatprep.subr.mxu0 0.0
  %1095 = vmatpush1.msra.mxu0 0.0
  %1096 = vmatprep.subr.mxu0 0.0
  %1097 = vmatpush1.msra.mxu0 0.0
  %1098 = vmatprep.subr.mxu0 0.0
  %1099 = vmatpush1.msra.mxu0 0.0
  %1100 = vmatprep.subr.mxu0 0.0
  %1101 = vmatpush1.msra.mxu0 0.0
  %1102 = vmatprep.subr.mxu0 0.0
  %1103 = vmatpush1.msra.mxu0 0.0
  %1104 = vmatprep.subr.mxu0 0.0
  %1105 = vmatpush1.msra.mxu0 0.0
  %1106 = vmatprep.subr.mxu0 0.0
  %1107 = vmatpush1.msra.mxu0 0.0
  %1108 = vmatprep.subr.mxu0 0.0
  %1109 = vmatpush1.msra.mxu0 0.0
  %1110 = vmatprep.subr.mxu0 0.0
  %1111 = vmatpush1.msra.mxu0 0.0
  %1112 = vmatprep.subr.mxu0 0.0
  %1113 = vmatpush1.msra.mxu0 0.0
  %1114 = vmatprep.subr.mxu0 0.0
  %1115 = vmatpush1.msra.mxu0 0.0
  %1116 = vmatprep.subr.mxu0 0.0
  %1117 = vmatpush1.msra.mxu0 0.0
  %1118 = vmatprep.subr.mxu0 0.0
  %1119 = vmatpush1.msra.mxu0 0.0
  %1120 = vmatprep.subr.mxu0 0.0
  %1121 = vmatpush1.msra.mxu0 0.0
  %v1122 = vand.u32 %v814, 4294901760
  %1123 = vmatprep.mubr.f32.mxu0 %v1122
  %v1124 = vand.u32 %v708, 4294901760
  %1125 = vmatmul.mubr.f32.gmra.mrb[0].mxu0 %v1124
  %v1126 = vpop.f32.mrb[0].mxu0
  %v1127 = vadd.f32 %v920, %v1126
  %v1128 = vpop.f32.mrb[0].mxu0
  %v1129 = vand.u32 %v817, 4294901760
  %1130 = vmatprep.mubr.f32.mxu0 %v1129
  %v1131 = vand.u32 %v710, 4294901760
  %1132 = vmatmul.mubr.f32.gmra.mrb[0].mxu0 %v1131
  %v1133 = vpop.f32.mrb[0].mxu0
  %v1134 = vadd.f32 %v935, %v1133
  %v1135 = vpop.f32.mrb[0].mxu0
  %v1136 = vand.u32 %v820, 4294901760
  %1137 = vmatprep.mubr.f32.mxu0 %v1136
  %v1138 = vand.u32 %v712, 4294901760
  %1139 = vmatmul.mubr.f32.gmra.mrb[0].mxu0 %v1138
  %v1140 = vpop.f32.mrb[0].mxu0
  %v1141 = vadd.f32 %v950, %v1140
  %v1142 = vpop.f32.mrb[0].mxu0
  %v1143 = vand.u32 %v823, 4294901760
  %1144 = vmatprep.mubr.f32.mxu0 %v1143
  %v1145 = vand.u32 %v714, 4294901760
  %1146 = vmatmul.mubr.f32.gmra.mrb[0].mxu0 %v1145
  %v1147 = vpop.f32.mrb[0].mxu0
  %v1148 = vadd.f32 %v965, %v1147
  %v1149 = vpop.f32.mrb[0].mxu0
  %1150 = vdwg.mxu0
  %1151 = vmatprep.subr.mxu0 0.0
  %v1152 = vand.u32 %v724, 4294901760
  %v1153 = vsub.f32 %v724, %v1152
  %1154 = vmatpush1.msra.mxu0 %v1153
  %1155 = vmatprep.subr.mxu0 0.0
  %v1156 = vand.u32 %v725, 4294901760
  %v1157 = vsub.f32 %v725, %v1156
  %1158 = vmatpush1.msra.mxu0 %v1157
  %1159 = vmatprep.subr.mxu0 0.0
  %v1160 = vand.u32 %v732, 4294901760
  %v1161 = vsub.f32 %v732, %v1160
  %1162 = vmatpush1.msra.mxu0 %v1161
  %1163 = vmatprep.subr.mxu0 0.0
  %v1164 = vand.u32 %v733, 4294901760
  %v1165 = vsub.f32 %v733, %v1164
  %1166 = vmatpush1.msra.mxu0 %v1165
  %1167 = vmatprep.subr.mxu0 0.0
  %v1168 = vand.u32 %v746, 4294901760
  %v1169 = vsub.f32 %v746, %v1168
  %1170 = vmatpush1.msra.mxu0 %v1169
  %1171 = vmatprep.subr.mxu0 0.0
  %v1172 = vand.u32 %v747, 4294901760
  %v1173 = vsub.f32 %v747, %v1172
  %1174 = vmatpush1.msra.mxu0 %v1173
  %1175 = vmatprep.subr.mxu0 0.0
  %v1176 = vand.u32 %v754, 4294901760
  %v1177 = vsub.f32 %v754, %v1176
  %1178 = vmatpush1.msra.mxu0 %v1177
  %1179 = vmatprep.subr.mxu0 0.0
  %v1180 = vand.u32 %v755, 4294901760
  %v1181 = vsub.f32 %v755, %v1180
  %1182 = vmatpush1.msra.mxu0 %v1181
  %1183 = vmatprep.subr.mxu0 0.0
  %v1184 = vand.u32 %v706, 4294901760
  %v1185 = vsub.f32 %v706, %v1184
  %1186 = vmatpush1.msra.mxu0 %v1185
  %1187 = vmatprep.subr.mxu0 0.0
  %v1188 = vand.u32 %v707, 4294901760
  %v1189 = vsub.f32 %v707, %v1188
  %1190 = vmatpush1.msra.mxu0 %v1189
  %1191 = vmatprep.subr.mxu0 0.0
  %v1192 = vand.u32 %v768, 4294901760
  %v1193 = vsub.f32 %v768, %v1192
  %1194 = vmatpush1.msra.mxu0 %v1193
  %1195 = vmatprep.subr.mxu0 0.0
  %v1196 = vand.u32 %v769, 4294901760
  %v1197 = vsub.f32 %v769, %v1196
  %1198 = vmatpush1.msra.mxu0 %v1197
  %1199 = vmatprep.subr.mxu0 0.0
  %v1200 = vand.u32 %v782, 4294901760
  %v1201 = vsub.f32 %v782, %v1200
  %1202 = vmatpush1.msra.mxu0 %v1201
  %1203 = vmatprep.subr.mxu0 0.0
  %v1204 = vand.u32 %v783, 4294901760
  %v1205 = vsub.f32 %v783, %v1204
  %1206 = vmatpush1.msra.mxu0 %v1205
  %1207 = vmatprep.subr.mxu0 0.0
  %v1208 = vand.u32 %v796, 4294901760
  %v1209 = vsub.f32 %v796, %v1208
  %1210 = vmatpush1.msra.mxu0 %v1209
  %1211 = vmatprep.subr.mxu0 0.0
  %v1212 = vand.u32 %v797, 4294901760
  %v1213 = vsub.f32 %v797, %v1212
  %1214 = vmatpush1.msra.mxu0 %v1213
  %1215 = vmatprep.subr.mxu0 0.0
  %v1216 = vand.u32 %v810, 4294901760
  %v1217 = vsub.f32 %v810, %v1216
  %1218 = vmatpush1.msra.mxu0 %v1217
  %1219 = vmatprep.subr.mxu0 0.0
  %v1220 = vand.u32 %v811, 4294901760
  %v1221 = vsub.f32 %v811, %v1220
  %1222 = vmatpush1.msra.mxu0 %v1221
  %1223 = vmatprep.subr.mxu0 0.0
  %1224 = vmatpush1.msra.mxu0 0.0
  %1225 = vmatprep.subr.mxu0 0.0
  %1226 = vmatpush1.msra.mxu0 0.0
  %1227 = vmatprep.subr.mxu0 0.0
  %1228 = vmatpush1.msra.mxu0 0.0
  %1229 = vmatprep.subr.mxu0 0.0
  %1230 = vmatpush1.msra.mxu0 0.0
  %1231 = vmatprep.subr.mxu0 0.0
  %1232 = vmatpush1.msra.mxu0 0.0
  %1233 = vmatprep.subr.mxu0 0.0
  %1234 = vmatpush1.msra.mxu0 0.0
  %1235 = vmatprep.subr.mxu0 0.0
  %1236 = vmatpush1.msra.mxu0 0.0
  %1237 = vmatprep.subr.mxu0 0.0
  %1238 = vmatpush1.msra.mxu0 0.0
  %1239 = vmatprep.subr.mxu0 0.0
  %1240 = vmatpush1.msra.mxu0 0.0
  %1241 = vmatprep.subr.mxu0 0.0
  %1242 = vmatpush1.msra.mxu0 0.0
  %1243 = vmatprep.subr.mxu0 0.0
  %1244 = vmatpush1.msra.mxu0 0.0
  %1245 = vmatprep.subr.mxu0 0.0
  %1246 = vmatpush1.msra.mxu0 0.0
  %1247 = vmatprep.subr.mxu0 0.0
  %1248 = vmatpush1.msra.mxu0 0.0
  %1249 = vmatprep.subr.mxu0 0.0
  %1250 = vmatpush1.msra.mxu0 0.0
  %v1251 = vand.u32 %v814, 4294901760
  %v1252 = vsub.f32 %v814, %v1251
  %1253 = vmatprep.mubr.f32.mxu0 %v1252
  %v1254 = vand.u32 %v708, 4294901760
  %v1255 = vsub.f32 %v708, %v1254
  %1256 = vmatmul.mubr.f32.gmra.mrb[0].mxu0 %v1255
  %v1257 = vpop.f32.mrb[0].mxu0
  %v1258 = vadd.f32 %v1127, %v1257
  %v1259 = vpop.f32.mrb[0].mxu0
  %v1260 = vand.u32 %v817, 4294901760
  %v1261 = vsub.f32 %v817, %v1260
  %1262 = vmatprep.mubr.f32.mxu0 %v1261
  %v1263 = vand.u32 %v710, 4294901760
  %v1264 = vsub.f32 %v710, %v1263
  %1265 = vmatmul.mubr.f32.gmra.mrb[0].mxu0 %v1264
  %v1266 = vpop.f32.mrb[0].mxu0
  %v1267 = vadd.f32 %v1134, %v1266
  %v1268 = vpop.f32.mrb[0].mxu0
  %v1269 = vand.u32 %v820, 4294901760
  %v1270 = vsub.f32 %v820, %v1269
  %1271 = vmatprep.mubr.f32.mxu0 %v1270
  %v1272 = vand.u32 %v712, 4294901760
  %v1273 = vsub.f32 %v712, %v1272
  %1274 = vmatmul.mubr.f32.gmra.mrb[0].mxu0 %v1273
  %v1275 = vpop.f32.mrb[0].mxu0
  %v1276 = vadd.f32 %v1141, %v1275
  %v1277 = vpop.f32.mrb[0].mxu0
  %v1278 = vand.u32 %v823, 4294901760
  %v1279 = vsub.f32 %v823, %v1278
  %1280 = vmatprep.mubr.f32.mxu0 %v1279
  %v1281 = vand.u32 %v714, 4294901760
  %v1282 = vsub.f32 %v714, %v1281
  %1283 = vmatmul.mubr.f32.gmra.mrb[0].mxu0 %v1282
  %v1284 = vpop.f32.mrb[0].mxu0
  %v1285 = vadd.f32 %v1148, %v1284
  %v1286 = vpop.f32.mrb[0].mxu0
  %1287 = vdwg.mxu0
  %1288 = vmatprep.subr.mxu0 0.0
  %v1289 = vand.u32 %v724, 4294901760
  %1290 = vmatpush1.msra.mxu0 %v1289
  %1291 = vmatprep.subr.mxu0 0.0
  %v1292 = vand.u32 %v725, 4294901760
  %1293 = vmatpush1.msra.mxu0 %v1292
  %1294 = vmatprep.subr.mxu0 0.0
  %v1295 = vand.u32 %v732, 4294901760
  %1296 = vmatpush1.msra.mxu0 %v1295
  %1297 = vmatprep.subr.mxu0 0.0
  %v1298 = vand.u32 %v733, 4294901760
  %1299 = vmatpush1.msra.mxu0 %v1298
  %1300 = vmatprep.subr.mxu0 0.0
  %v1301 = vand.u32 %v746, 4294901760
  %1302 = vmatpush1.msra.mxu0 %v1301
  %1303 = vmatprep.subr.mxu0 0.0
  %v1304 = vand.u32 %v747, 4294901760
  %1305 = vmatpush1.msra.mxu0 %v1304
  %1306 = vmatprep.subr.mxu0 0.0
  %v1307 = vand.u32 %v754, 4294901760
  %1308 = vmatpush1.msra.mxu0 %v1307
  %1309 = vmatprep.subr.mxu0 0.0
  %v1310 = vand.u32 %v755, 4294901760
  %1311 = vmatpush1.msra.mxu0 %v1310
  %1312 = vmatprep.subr.mxu0 0.0
  %v1313 = vand.u32 %v706, 4294901760
  %1314 = vmatpush1.msra.mxu0 %v1313
  %1315 = vmatprep.subr.mxu0 0.0
  %v1316 = vand.u32 %v707, 4294901760
  %1317 = vmatpush1.msra.mxu0 %v1316
  %1318 = vmatprep.subr.mxu0 0.0
  %v1319 = vand.u32 %v768, 4294901760
  %1320 = vmatpush1.msra.mxu0 %v1319
  %1321 = vmatprep.subr.mxu0 0.0
  %v1322 = vand.u32 %v769, 4294901760
  %1323 = vmatpush1.msra.mxu0 %v1322
  %1324 = vmatprep.subr.mxu0 0.0
  %v1325 = vand.u32 %v782, 4294901760
  %1326 = vmatpush1.msra.mxu0 %v1325
  %1327 = vmatprep.subr.mxu0 0.0
  %v1328 = vand.u32 %v783, 4294901760
  %1329 = vmatpush1.msra.mxu0 %v1328
  %1330 = vmatprep.subr.mxu0 0.0
  %v1331 = vand.u32 %v796, 4294901760
  %1332 = vmatpush1.msra.mxu0 %v1331
  %1333 = vmatprep.subr.mxu0 0.0
  %v1334 = vand.u32 %v797, 4294901760
  %1335 = vmatpush1.msra.mxu0 %v1334
  %1336 = vmatprep.subr.mxu0 0.0
  %v1337 = vand.u32 %v810, 4294901760
  %1338 = vmatpush1.msra.mxu0 %v1337
  %1339 = vmatprep.subr.mxu0 0.0
  %v1340 = vand.u32 %v811, 4294901760
  %1341 = vmatpush1.msra.mxu0 %v1340
  %1342 = vmatprep.subr.mxu0 0.0
  %1343 = vmatpush1.msra.mxu0 0.0
  %1344 = vmatprep.subr.mxu0 0.0
  %1345 = vmatpush1.msra.mxu0 0.0
  %1346 = vmatprep.subr.mxu0 0.0
  %1347 = vmatpush1.msra.mxu0 0.0
  %1348 = vmatprep.subr.mxu0 0.0
  %1349 = vmatpush1.msra.mxu0 0.0
  %1350 = vmatprep.subr.mxu0 0.0
  %1351 = vmatpush1.msra.mxu0 0.0
  %1352 = vmatprep.subr.mxu0 0.0
  %1353 = vmatpush1.msra.mxu0 0.0
  %1354 = vmatprep.subr.mxu0 0.0
  %1355 = vmatpush1.msra.mxu0 0.0
  %1356 = vmatprep.subr.mxu0 0.0
  %1357 = vmatpush1.msra.mxu0 0.0
  %1358 = vmatprep.subr.mxu0 0.0
  %1359 = vmatpush1.msra.mxu0 0.0
  %1360 = vmatprep.subr.mxu0 0.0
  %1361 = vmatpush1.msra.mxu0 0.0
  %1362 = vmatprep.subr.mxu0 0.0
  %1363 = vmatpush1.msra.mxu0 0.0
  %1364 = vmatprep.subr.mxu0 0.0
  %1365 = vmatpush1.msra.mxu0 0.0
  %1366 = vmatprep.subr.mxu0 0.0
  %1367 = vmatpush1.msra.mxu0 0.0
  %1368 = vmatprep.subr.mxu0 0.0
  %1369 = vmatpush1.msra.mxu0 0.0
  %v1370 = vand.u32 %v814, 4294901760
  %v1371 = vsub.f32 %v814, %v1370
  %v1372 = vand.u32 %v1371, 4294901760
  %1373 = vmatprep.mubr.f32.mxu0 %v1372
  %v1374 = vand.u32 %v708, 4294901760
  %v1375 = vsub.f32 %v708, %v1374
  %v1376 = vand.u32 %v1375, 4294901760
  %1377 = vmatmul.mubr.f32.gmra.mrb[0].mxu0 %v1376
  %v1378 = vpop.f32.mrb[0].mxu0
  %v1379 = vadd.f32 %v1258, %v1378
  %v1380 = vpop.f32.mrb[0].mxu0
  %v1381 = vand.u32 %v817, 4294901760
  %v1382 = vsub.f32 %v817, %v1381
  %v1383 = vand.u32 %v1382, 4294901760
  %1384 = vmatprep.mubr.f32.mxu0 %v1383
  %v1385 = vand.u32 %v710, 4294901760
  %v1386 = vsub.f32 %v710, %v1385
  %v1387 = vand.u32 %v1386, 4294901760
  %1388 = vmatmul.mubr.f32.gmra.mrb[0].mxu0 %v1387
  %v1389 = vpop.f32.mrb[0].mxu0
  %v1390 = vadd.f32 %v1267, %v1389
  %v1391 = vpop.f32.mrb[0].mxu0
  %v1392 = vand.u32 %v820, 4294901760
  %v1393 = vsub.f32 %v820, %v1392
  %v1394 = vand.u32 %v1393, 4294901760
  %1395 = vmatprep.mubr.f32.mxu0 %v1394
  %v1396 = vand.u32 %v712, 4294901760
  %v1397 = vsub.f32 %v712, %v1396
  %v1398 = vand.u32 %v1397, 4294901760
  %1399 = vmatmul.mubr.f32.gmra.mrb[0].mxu0 %v1398
  %v1400 = vpop.f32.mrb[0].mxu0
  %v1401 = vadd.f32 %v1276, %v1400
  %v1402 = vpop.f32.mrb[0].mxu0
  %v1403 = vand.u32 %v823, 4294901760
  %v1404 = vsub.f32 %v823, %v1403
  %v1405 = vand.u32 %v1404, 4294901760
  %1406 = vmatprep.mubr.f32.mxu0 %v1405
  %v1407 = vand.u32 %v714, 4294901760
  %v1408 = vsub.f32 %v714, %v1407
  %v1409 = vand.u32 %v1408, 4294901760
  %1410 = vmatmul.mubr.f32.gmra.mrb[0].mxu0 %v1409
  %v1411 = vpop.f32.mrb[0].mxu0
  %v1412 = vadd.f32 %v1285, %v1411
  %v1413 = vpop.f32.mrb[0].mxu0
  %1414 = vdwg.mxu0
  %1415 = vmatprep.subr.mxu0 0.0
  %v1416 = vand.u32 %v724, 4294901760
  %v1417 = vsub.f32 %v724, %v1416
  %v1418 = vand.u32 %v1417, 4294901760
  %1419 = vmatpush1.msra.mxu0 %v1418
  %1420 = vmatprep.subr.mxu0 0.0
  %v1421 = vand.u32 %v725, 4294901760
  %v1422 = vsub.f32 %v725, %v1421
  %v1423 = vand.u32 %v1422, 4294901760
  %1424 = vmatpush1.msra.mxu0 %v1423
  %1425 = vmatprep.subr.mxu0 0.0
  %v1426 = vand.u32 %v732, 4294901760
  %v1427 = vsub.f32 %v732, %v1426
  %v1428 = vand.u32 %v1427, 4294901760
  %1429 = vmatpush1.msra.mxu0 %v1428
  %1430 = vmatprep.subr.mxu0 0.0
  %v1431 = vand.u32 %v733, 4294901760
  %v1432 = vsub.f32 %v733, %v1431
  %v1433 = vand.u32 %v1432, 4294901760
  %1434 = vmatpush1.msra.mxu0 %v1433
  %1435 = vmatprep.subr.mxu0 0.0
  %v1436 = vand.u32 %v746, 4294901760
  %v1437 = vsub.f32 %v746, %v1436
  %v1438 = vand.u32 %v1437, 4294901760
  %1439 = vmatpush1.msra.mxu0 %v1438
  %1440 = vmatprep.subr.mxu0 0.0
  %v1441 = vand.u32 %v747, 4294901760
  %v1442 = vsub.f32 %v747, %v1441
  %v1443 = vand.u32 %v1442, 4294901760
  %1444 = vmatpush1.msra.mxu0 %v1443
  %1445 = vmatprep.subr.mxu0 0.0
  %v1446 = vand.u32 %v754, 4294901760
  %v1447 = vsub.f32 %v754, %v1446
  %v1448 = vand.u32 %v1447, 4294901760
  %1449 = vmatpush1.msra.mxu0 %v1448
  %1450 = vmatprep.subr.mxu0 0.0
  %v1451 = vand.u32 %v755, 4294901760
  %v1452 = vsub.f32 %v755, %v1451
  %v1453 = vand.u32 %v1452, 4294901760
  %1454 = vmatpush1.msra.mxu0 %v1453
  %1455 = vmatprep.subr.mxu0 0.0
  %v1456 = vand.u32 %v706, 4294901760
  %v1457 = vsub.f32 %v706, %v1456
  %v1458 = vand.u32 %v1457, 4294901760
  %1459 = vmatpush1.msra.mxu0 %v1458
  %1460 = vmatprep.subr.mxu0 0.0
  %v1461 = vand.u32 %v707, 4294901760
  %v1462 = vsub.f32 %v707, %v1461
  %v1463 = vand.u32 %v1462, 4294901760
  %1464 = vmatpush1.msra.mxu0 %v1463
  %1465 = vmatprep.subr.mxu0 0.0
  %v1466 = vand.u32 %v768, 4294901760
  %v1467 = vsub.f32 %v768, %v1466
  %v1468 = vand.u32 %v1467, 4294901760
  %1469 = vmatpush1.msra.mxu0 %v1468
  %1470 = vmatprep.subr.mxu0 0.0
  %v1471 = vand.u32 %v769, 4294901760
  %v1472 = vsub.f32 %v769, %v1471
  %v1473 = vand.u32 %v1472, 4294901760
  %1474 = vmatpush1.msra.mxu0 %v1473
  %1475 = vmatprep.subr.mxu0 0.0
  %v1476 = vand.u32 %v782, 4294901760
  %v1477 = vsub.f32 %v782, %v1476
  %v1478 = vand.u32 %v1477, 4294901760
  %1479 = vmatpush1.msra.mxu0 %v1478
  %1480 = vmatprep.subr.mxu0 0.0
  %v1481 = vand.u32 %v783, 4294901760
  %v1482 = vsub.f32 %v783, %v1481
  %v1483 = vand.u32 %v1482, 4294901760
  %1484 = vmatpush1.msra.mxu0 %v1483
  %1485 = vmatprep.subr.mxu0 0.0
  %v1486 = vand.u32 %v796, 4294901760
  %v1487 = vsub.f32 %v796, %v1486
  %v1488 = vand.u32 %v1487, 4294901760
  %1489 = vmatpush1.msra.mxu0 %v1488
  %1490 = vmatprep.subr.mxu0 0.0
  %v1491 = vand.u32 %v797, 4294901760
  %v1492 = vsub.f32 %v797, %v1491
  %v1493 = vand.u32 %v1492, 4294901760
  %1494 = vmatpush1.msra.mxu0 %v1493
  %1495 = vmatprep.subr.mxu0 0.0
  %v1496 = vand.u32 %v810, 4294901760
  %v1497 = vsub.f32 %v810, %v1496
  %v1498 = vand.u32 %v1497, 4294901760
  %1499 = vmatpush1.msra.mxu0 %v1498
  %1500 = vmatprep.subr.mxu0 0.0
  %v1501 = vand.u32 %v811, 4294901760
  %v1502 = vsub.f32 %v811, %v1501
  %v1503 = vand.u32 %v1502, 4294901760
  %1504 = vmatpush1.msra.mxu0 %v1503
  %1505 = vmatprep.subr.mxu0 0.0
  %1506 = vmatpush1.msra.mxu0 0.0
  %1507 = vmatprep.subr.mxu0 0.0
  %1508 = vmatpush1.msra.mxu0 0.0
  %1509 = vmatprep.subr.mxu0 0.0
  %1510 = vmatpush1.msra.mxu0 0.0
  %1511 = vmatprep.subr.mxu0 0.0
  %1512 = vmatpush1.msra.mxu0 0.0
  %1513 = vmatprep.subr.mxu0 0.0
  %1514 = vmatpush1.msra.mxu0 0.0
  %1515 = vmatprep.subr.mxu0 0.0
  %1516 = vmatpush1.msra.mxu0 0.0
  %1517 = vmatprep.subr.mxu0 0.0
  %1518 = vmatpush1.msra.mxu0 0.0
  %1519 = vmatprep.subr.mxu0 0.0
  %1520 = vmatpush1.msra.mxu0 0.0
  %1521 = vmatprep.subr.mxu0 0.0
  %1522 = vmatpush1.msra.mxu0 0.0
  %1523 = vmatprep.subr.mxu0 0.0
  %1524 = vmatpush1.msra.mxu0 0.0
  %1525 = vmatprep.subr.mxu0 0.0
  %1526 = vmatpush1.msra.mxu0 0.0
  %1527 = vmatprep.subr.mxu0 0.0
  %1528 = vmatpush1.msra.mxu0 0.0
  %1529 = vmatprep.subr.mxu0 0.0
  %1530 = vmatpush1.msra.mxu0 0.0
  %1531 = vmatprep.subr.mxu0 0.0
  %1532 = vmatpush1.msra.mxu0 0.0
  %v1533 = vand.u32 %v814, 4294901760
  %1534 = vmatprep.mubr.f32.mxu0 %v1533
  %v1535 = vand.u32 %v708, 4294901760
  %1536 = vmatmul.mubr.f32.gmra.mrb[0].mxu0 %v1535
  %v1537 = vpop.f32.mrb[0].mxu0
  %v1538 = vadd.f32 %v1379, %v1537
  %v1539 = vpop.f32.mrb[0].mxu0
  %v1540 = vand.u32 %v817, 4294901760
  %1541 = vmatprep.mubr.f32.mxu0 %v1540
  %v1542 = vand.u32 %v710, 4294901760
  %1543 = vmatmul.mubr.f32.gmra.mrb[0].mxu0 %v1542
  %v1544 = vpop.f32.mrb[0].mxu0
  %v1545 = vadd.f32 %v1390, %v1544
  %v1546 = vpop.f32.mrb[0].mxu0
  %v1547 = vand.u32 %v820, 4294901760
  %1548 = vmatprep.mubr.f32.mxu0 %v1547
  %v1549 = vand.u32 %v712, 4294901760
  %1550 = vmatmul.mubr.f32.gmra.mrb[0].mxu0 %v1549
  %v1551 = vpop.f32.mrb[0].mxu0
  %v1552 = vadd.f32 %v1401, %v1551
  %v1553 = vpop.f32.mrb[0].mxu0
  %v1554 = vand.u32 %v823, 4294901760
  %1555 = vmatprep.mubr.f32.mxu0 %v1554
  %v1556 = vand.u32 %v714, 4294901760
  %1557 = vmatmul.mubr.f32.gmra.mrb[0].mxu0 %v1556
  %v1558 = vpop.f32.mrb[0].mxu0
  %v1559 = vadd.f32 %v1412, %v1558
  %v1560 = vpop.f32.mrb[0].mxu0
  %1561 = vdwg.mxu0
  %1562 = vmatprep.subr.mxu0 0.0
  %v1563 = vand.u32 %v724, 4294901760
  %1564 = vmatpush1.msra.mxu0 %v1563
  %1565 = vmatprep.subr.mxu0 0.0
  %v1566 = vand.u32 %v725, 4294901760
  %1567 = vmatpush1.msra.mxu0 %v1566
  %1568 = vmatprep.subr.mxu0 0.0
  %v1569 = vand.u32 %v732, 4294901760
  %1570 = vmatpush1.msra.mxu0 %v1569
  %1571 = vmatprep.subr.mxu0 0.0
  %v1572 = vand.u32 %v733, 4294901760
  %1573 = vmatpush1.msra.mxu0 %v1572
  %1574 = vmatprep.subr.mxu0 0.0
  %v1575 = vand.u32 %v746, 4294901760
  %1576 = vmatpush1.msra.mxu0 %v1575
  %1577 = vmatprep.subr.mxu0 0.0
  %v1578 = vand.u32 %v747, 4294901760
  %1579 = vmatpush1.msra.mxu0 %v1578
  %1580 = vmatprep.subr.mxu0 0.0
  %v1581 = vand.u32 %v754, 4294901760
  %1582 = vmatpush1.msra.mxu0 %v1581
  %1583 = vmatprep.subr.mxu0 0.0
  %v1584 = vand.u32 %v755, 4294901760
  %1585 = vmatpush1.msra.mxu0 %v1584
  %1586 = vmatprep.subr.mxu0 0.0
  %v1587 = vand.u32 %v706, 4294901760
  %1588 = vmatpush1.msra.mxu0 %v1587
  %1589 = vmatprep.subr.mxu0 0.0
  %v1590 = vand.u32 %v707, 4294901760
  %1591 = vmatpush1.msra.mxu0 %v1590
  %1592 = vmatprep.subr.mxu0 0.0
  %v1593 = vand.u32 %v768, 4294901760
  %1594 = vmatpush1.msra.mxu0 %v1593
  %1595 = vmatprep.subr.mxu0 0.0
  %v1596 = vand.u32 %v769, 4294901760
  %1597 = vmatpush1.msra.mxu0 %v1596
  %1598 = vmatprep.subr.mxu0 0.0
  %v1599 = vand.u32 %v782, 4294901760
  %1600 = vmatpush1.msra.mxu0 %v1599
  %1601 = vmatprep.subr.mxu0 0.0
  %v1602 = vand.u32 %v783, 4294901760
  %1603 = vmatpush1.msra.mxu0 %v1602
  %1604 = vmatprep.subr.mxu0 0.0
  %v1605 = vand.u32 %v796, 4294901760
  %1606 = vmatpush1.msra.mxu0 %v1605
  %1607 = vmatprep.subr.mxu0 0.0
  %v1608 = vand.u32 %v797, 4294901760
  %1609 = vmatpush1.msra.mxu0 %v1608
  %1610 = vmatprep.subr.mxu0 0.0
  %v1611 = vand.u32 %v810, 4294901760
  %1612 = vmatpush1.msra.mxu0 %v1611
  %1613 = vmatprep.subr.mxu0 0.0
  %v1614 = vand.u32 %v811, 4294901760
  %1615 = vmatpush1.msra.mxu0 %v1614
  %1616 = vmatprep.subr.mxu0 0.0
  %1617 = vmatpush1.msra.mxu0 0.0
  %1618 = vmatprep.subr.mxu0 0.0
  %1619 = vmatpush1.msra.mxu0 0.0
  %1620 = vmatprep.subr.mxu0 0.0
  %1621 = vmatpush1.msra.mxu0 0.0
  %1622 = vmatprep.subr.mxu0 0.0
  %1623 = vmatpush1.msra.mxu0 0.0
  %1624 = vmatprep.subr.mxu0 0.0
  %1625 = vmatpush1.msra.mxu0 0.0
  %1626 = vmatprep.subr.mxu0 0.0
  %1627 = vmatpush1.msra.mxu0 0.0
  %1628 = vmatprep.subr.mxu0 0.0
  %1629 = vmatpush1.msra.mxu0 0.0
  %1630 = vmatprep.subr.mxu0 0.0
  %1631 = vmatpush1.msra.mxu0 0.0
  %1632 = vmatprep.subr.mxu0 0.0
  %1633 = vmatpush1.msra.mxu0 0.0
  %1634 = vmatprep.subr.mxu0 0.0
  %1635 = vmatpush1.msra.mxu0 0.0
  %1636 = vmatprep.subr.mxu0 0.0
  %1637 = vmatpush1.msra.mxu0 0.0
  %1638 = vmatprep.subr.mxu0 0.0
  %1639 = vmatpush1.msra.mxu0 0.0
  %1640 = vmatprep.subr.mxu0 0.0
  %1641 = vmatpush1.msra.mxu0 0.0
  %1642 = vmatprep.subr.mxu0 0.0
  %1643 = vmatpush1.msra.mxu0 0.0
  %v1644 = vand.u32 %v814, 4294901760
  %1645 = vmatprep.mubr.f32.mxu0 %v1644
  %v1646 = vand.u32 %v708, 4294901760
  %1647 = vmatmul.mubr.f32.gmra.mrb[0].mxu0 %v1646
  %v1648 = vpop.f32.mrb[0].mxu0
  %v1649 = vadd.f32 %v1538, %v1648
  %v1650 = vpop.f32.mrb[0].mxu0
  %v1651 = vand.u32 %v817, 4294901760
  %1652 = vmatprep.mubr.f32.mxu0 %v1651
  %v1653 = vand.u32 %v710, 4294901760
  %1654 = vmatmul.mubr.f32.gmra.mrb[0].mxu0 %v1653
  %v1655 = vpop.f32.mrb[0].mxu0
  %v1656 = vadd.f32 %v1545, %v1655
  %v1657 = vpop.f32.mrb[0].mxu0
  %v1658 = vand.u32 %v820, 4294901760
  %1659 = vmatprep.mubr.f32.mxu0 %v1658
  %v1660 = vand.u32 %v712, 4294901760
  %1661 = vmatmul.mubr.f32.gmra.mrb[0].mxu0 %v1660
  %v1662 = vpop.f32.mrb[0].mxu0
  %v1663 = vadd.f32 %v1552, %v1662
  %v1664 = vpop.f32.mrb[0].mxu0
  %v1665 = vand.u32 %v823, 4294901760
  %1666 = vmatprep.mubr.f32.mxu0 %v1665
  %v1667 = vand.u32 %v714, 4294901760
  %1668 = vmatmul.mubr.f32.gmra.mrb[0].mxu0 %v1667
  %v1669 = vpop.f32.mrb[0].mxu0
  %v1670 = vadd.f32 %v1559, %v1669
  %v1671 = vpop.f32.mrb[0].mxu0
  %1672 = vdwg.mxu0
  %1673 = vadd.xlane.f32.xlu0 %v1649
  %v1674 = vpop.xlane.xlu0 %1673
  %1675 = vadd.xlane.f32.xlu0 %v1656
  %v1676 = vpop.xlane.xlu0 %1675
  %1677 = vadd.xlane.f32.xlu0 %v1663
  %v1678 = vpop.xlane.xlu0 %1677
  %1679 = vadd.xlane.f32.xlu0 %v1670
  %v1680 = vpop.xlane.xlu0 %1679
  %v1681 = vmul.f32 %v1674, 0.0078125
  %v1682 = vmul.f32 %v1676, 0.0078125
  %v1683 = vmul.f32 %v1678, 0.0078125
  %v1684 = vmul.f32 %v1680, 0.0078125
  %v1685 = vsub.f32 %v1649, %v1681
  %v1686 = vsub.f32 %v1656, %v1682
  %v1687 = vsub.f32 %v1663, %v1683
  %v1688 = vsub.f32 %v1670, %v1684
  %v1689 = vmul.f32 %v1685, %v1685
  %v1690 = vmul.f32 %v1686, %v1686
  %v1691 = vmul.f32 %v1687, %v1687
  %v1692 = vmul.f32 %v1688, %v1688
  %1693 = vadd.xlane.f32.xlu0 %v1689
  %v1694 = vpop.xlane.xlu0 %1693
  %1695 = vadd.xlane.f32.xlu0 %v1690
  %v1696 = vpop.xlane.xlu0 %1695
  %1697 = vadd.xlane.f32.xlu0 %v1691
  %v1698 = vpop.xlane.xlu0 %1697
  %1699 = vadd.xlane.f32.xlu0 %v1692
  %v1700 = vpop.xlane.xlu0 %1699
  %v1701 = vmul.f32 %v1694, 0.0078125
  %v1702 = vmul.f32 %v1696, 0.0078125
  %v1703 = vmul.f32 %v1698, 0.0078125
  %v1704 = vmul.f32 %v1700, 0.0078125
  %v1705 = vadd.f32 %v1701, 1e-05
  %v1706 = vadd.f32 %v1702, 1e-05
  %v1707 = vadd.f32 %v1703, 1e-05
  %v1708 = vadd.f32 %v1704, 1e-05
  %v1709 = vrsqrt.pop %v1705
  %v1710 = vrsqrt.pop %v1706
  %v1711 = vrsqrt.pop %v1707
  %v1712 = vrsqrt.pop %v1708
  %v1713 = vmul.f32 %v39, %v1709
  %v1714 = vmul.f32 %v40, %v1710
  %v1715 = vmul.f32 %v41, %v1711
  %v1716 = vmul.f32 %v42, %v1712
  %1718 = vset.pattern.permute.xlu0 2
  %1719 = vperm.xlu0 %1718, %v1713
  %v1720 = vpop.permute.xlu0 %1719
  %1723 = vset.pattern.permute.xlu0 2
  %1724 = vperm.xlu0 %1723, %v1714
  %v1725 = vpop.permute.xlu0 %1724
  %1728 = vset.pattern.permute.xlu0 2
  %1729 = vperm.xlu0 %1728, %v1715
  %v1730 = vpop.permute.xlu0 %1729
  %1733 = vset.pattern.permute.xlu0 2
  %1734 = vperm.xlu0 %1733, %v1716
  %v1735 = vpop.permute.xlu0 %1734
  %v1737 = vmul.f32 %v1685, %v1720
  %v1738 = vmul.f32 %v1686, %v1725
  %v1739 = vmul.f32 %v1687, %v1730
  %v1740 = vmul.f32 %v1688, %v1735
  %1741 = vset.pattern.permute.xlu0 3
  %1742 = vperm.xlu0 %1741, %v39
  %v1743 = vpop.permute.xlu0 %1742
  %1745 = vset.pattern.permute.xlu0 3
  %1746 = vperm.xlu0 %1745, %v40
  %v1747 = vpop.permute.xlu0 %1746
  %1750 = vset.pattern.permute.xlu0 3
  %1751 = vperm.xlu0 %1750, %v41
  %v1752 = vpop.permute.xlu0 %1751
  %1755 = vset.pattern.permute.xlu0 3
  %1756 = vperm.xlu0 %1755, %v42
  %v1757 = vpop.permute.xlu0 %1756
  %v1759 = vadd.f32 %v1737, %v1743
  %v1760 = vadd.f32 %v1738, %v1747
  %v1761 = vadd.f32 %v1739, %v1752
  %v1762 = vadd.f32 %v1740, %v1757
  %v1763 = vmax.f32 %v1759, 0.0
  %v1764 = vmax.f32 %v1760, 0.0
  %v1765 = vmax.f32 %v1761, 0.0
  %v1766 = vmax.f32 %v1762, 0.0
  %v1767 = vld [vmem:[%s4] sm:$0xff]
  %v1768 = vld [vmem:[%s4 + $0x8] sm:$0xff]
  %v1769 = vld [vmem:[%s4 + $0x10] sm:$0xff]
  %v1770 = vld [vmem:[%s4 + $0x18] sm:$0xff]
  %v1771 = vld [vmem:[%s4 + $0x20] sm:$0xff]
  %v1772 = vld [vmem:[%s4 + $0x28] sm:$0xff]
  %v1773 = vld [vmem:[%s4 + $0x30] sm:$0xff]
  %v1774 = vld [vmem:[%s4 + $0x38] sm:$0xff]
  %v1775 = vld [vmem:[%s4 + $0x40] sm:$0xff]
  %v1776 = vld [vmem:[%s4 + $0x48] sm:$0xff]
  %v1777 = vld [vmem:[%s4 + $0x50] sm:$0xff]
  %v1778 = vld [vmem:[%s4 + $0x58] sm:$0xff]
  %1783 = vrot.lane.b32.xlu0 %v1763, 9
  %v1784 = vpop.permute.xlu0 %1783
  %1785 = vrot.lane.b32.xlu0 %v1764, 9
  %v1786 = vpop.permute.xlu0 %1785
  %1787 = vrot.lane.b32.xlu0 %v1765, 9
  %v1788 = vpop.permute.xlu0 %1787
  %1789 = vrot.lane.b32.xlu0 %v1766, 9
  %v1790 = vpop.permute.xlu0 %1789
  %v1795 = vsel %vm54, %v1784, 0.0
  %v1796 = vsel %vm54, %v1786, 0.0
  %v1797 = vsel %vm54, %v1788, 0.0
  %v1798 = vsel %vm54, %v1790, 0.0
  %1799 = vrot.lane.b32.xlu0 %v1763, 8
  %v1800 = vpop.permute.xlu0 %1799
  %1801 = vrot.lane.b32.xlu0 %v1764, 8
  %v1802 = vpop.permute.xlu0 %1801
  %1803 = vrot.lane.b32.xlu0 %v1765, 8
  %v1804 = vpop.permute.xlu0 %1803
  %1805 = vrot.lane.b32.xlu0 %v1766, 8
  %v1806 = vpop.permute.xlu0 %1805
  %v1811 = vsel %vm68, %v1800, 0.0
  %v1812 = vsel %vm68, %v1802, 0.0
  %v1813 = vsel %vm68, %v1804, 0.0
  %v1814 = vsel %vm68, %v1806, 0.0
  %1815 = vrot.lane.b32.xlu0 %v1763, 7
  %v1816 = vpop.permute.xlu0 %1815
  %1817 = vrot.lane.b32.xlu0 %v1764, 7
  %v1818 = vpop.permute.xlu0 %1817
  %1819 = vrot.lane.b32.xlu0 %v1765, 7
  %v1820 = vpop.permute.xlu0 %1819
  %1821 = vrot.lane.b32.xlu0 %v1766, 7
  %v1822 = vpop.permute.xlu0 %1821
  %v1827 = vsel %vm745, %v1816, 0.0
  %v1828 = vsel %vm745, %v1818, 0.0
  %v1829 = vsel %vm745, %v1820, 0.0
  %v1830 = vsel %vm745, %v1822, 0.0
  %1831 = vrot.lane.b32.xlu0 %v1763, 1
  %v1832 = vpop.permute.xlu0 %1831
  %1833 = vrot.lane.b32.xlu0 %v1764, 1
  %v1834 = vpop.permute.xlu0 %1833
  %1835 = vrot.lane.b32.xlu0 %v1765, 1
  %v1836 = vpop.permute.xlu0 %1835
  %1837 = vrot.lane.b32.xlu0 %v1766, 1
  %v1838 = vpop.permute.xlu0 %1837
  %v1843 = vsel %vm79, %v1832, 0.0
  %v1844 = vsel %vm79, %v1834, 0.0
  %v1845 = vsel %vm79, %v1836, 0.0
  %v1846 = vsel %vm79, %v1838, 0.0
  %1847 = vrot.lane.b32.xlu0 %v1763, 127
  %v1848 = vpop.permute.xlu0 %1847
  %1849 = vrot.lane.b32.xlu0 %v1764, 127
  %v1850 = vpop.permute.xlu0 %1849
  %1851 = vrot.lane.b32.xlu0 %v1765, 127
  %v1852 = vpop.permute.xlu0 %1851
  %1853 = vrot.lane.b32.xlu0 %v1766, 127
  %v1854 = vpop.permute.xlu0 %1853
  %v1859 = vsel %vm767, %v1848, 0.0
  %v1860 = vsel %vm767, %v1850, 0.0
  %v1861 = vsel %vm767, %v1852, 0.0
  %v1862 = vsel %vm767, %v1854, 0.0
  %1863 = vrot.lane.b32.xlu0 %v1763, 121
  %v1864 = vpop.permute.xlu0 %1863
  %1865 = vrot.lane.b32.xlu0 %v1764, 121
  %v1866 = vpop.permute.xlu0 %1865
  %1867 = vrot.lane.b32.xlu0 %v1765, 121
  %v1868 = vpop.permute.xlu0 %1867
  %1869 = vrot.lane.b32.xlu0 %v1766, 121
  %v1870 = vpop.permute.xlu0 %1869
  %v1875 = vsel %vm781, %v1864, 0.0
  %v1876 = vsel %vm781, %v1866, 0.0
  %v1877 = vsel %vm781, %v1868, 0.0
  %v1878 = vsel %vm781, %v1870, 0.0
  %1879 = vrot.lane.b32.xlu0 %v1763, 120
  %v1880 = vpop.permute.xlu0 %1879
  %1881 = vrot.lane.b32.xlu0 %v1764, 120
  %v1882 = vpop.permute.xlu0 %1881
  %1883 = vrot.lane.b32.xlu0 %v1765, 120
  %v1884 = vpop.permute.xlu0 %1883
  %1885 = vrot.lane.b32.xlu0 %v1766, 120
  %v1886 = vpop.permute.xlu0 %1885
  %v1891 = vsel %vm795, %v1880, 0.0
  %v1892 = vsel %vm795, %v1882, 0.0
  %v1893 = vsel %vm795, %v1884, 0.0
  %v1894 = vsel %vm795, %v1886, 0.0
  %1895 = vrot.lane.b32.xlu0 %v1763, 119
  %v1896 = vpop.permute.xlu0 %1895
  %1897 = vrot.lane.b32.xlu0 %v1764, 119
  %v1898 = vpop.permute.xlu0 %1897
  %1899 = vrot.lane.b32.xlu0 %v1765, 119
  %v1900 = vpop.permute.xlu0 %1899
  %1901 = vrot.lane.b32.xlu0 %v1766, 119
  %v1902 = vpop.permute.xlu0 %1901
  %v1907 = vsel %vm809, %v1896, 0.0
  %v1908 = vsel %vm809, %v1898, 0.0
  %v1909 = vsel %vm809, %v1900, 0.0
  %v1910 = vsel %vm809, %v1902, 0.0
  %vm1911 = vcmask 261120
  %v1913 = vsel %vm1911, %v1769, 0
  %v1916 = vsel %vm1911, %v1772, 0
  %v1919 = vsel %vm1911, %v1775, 0
  %v1922 = vsel %vm1911, %v1778, 0
  %1924 = vmatprep.subr.mxu0 0.0
  %v1925 = vand.u32 %v1795, 4294901760
  %1926 = vmatpush1.msra.mxu0 %v1925
  %1927 = vmatprep.subr.mxu0 0.0
  %v1928 = vand.u32 %v1796, 4294901760
  %1929 = vmatpush1.msra.mxu0 %v1928
  %1930 = vmatprep.subr.mxu0 0.0
  %v1931 = vand.u32 %v1797, 4294901760
  %1932 = vmatpush1.msra.mxu0 %v1931
  %1933 = vmatprep.subr.mxu0 0.0
  %v1934 = vand.u32 %v1798, 4294901760
  %1935 = vmatpush1.msra.mxu0 %v1934
  %1936 = vmatprep.subr.mxu0 0.0
  %v1937 = vand.u32 %v1811, 4294901760
  %1938 = vmatpush1.msra.mxu0 %v1937
  %1939 = vmatprep.subr.mxu0 0.0
  %v1940 = vand.u32 %v1812, 4294901760
  %1941 = vmatpush1.msra.mxu0 %v1940
  %1942 = vmatprep.subr.mxu0 0.0
  %v1943 = vand.u32 %v1813, 4294901760
  %1944 = vmatpush1.msra.mxu0 %v1943
  %1945 = vmatprep.subr.mxu0 0.0
  %v1946 = vand.u32 %v1814, 4294901760
  %1947 = vmatpush1.msra.mxu0 %v1946
  %1948 = vmatprep.subr.mxu0 0.0
  %v1949 = vand.u32 %v1827, 4294901760
  %1950 = vmatpush1.msra.mxu0 %v1949
  %1951 = vmatprep.subr.mxu0 0.0
  %v1952 = vand.u32 %v1828, 4294901760
  %1953 = vmatpush1.msra.mxu0 %v1952
  %1954 = vmatprep.subr.mxu0 0.0
  %v1955 = vand.u32 %v1829, 4294901760
  %1956 = vmatpush1.msra.mxu0 %v1955
  %1957 = vmatprep.subr.mxu0 0.0
  %v1958 = vand.u32 %v1830, 4294901760
  %1959 = vmatpush1.msra.mxu0 %v1958
  %1960 = vmatprep.subr.mxu0 0.0
  %v1961 = vand.u32 %v1843, 4294901760
  %1962 = vmatpush1.msra.mxu0 %v1961
  %1963 = vmatprep.subr.mxu0 0.0
  %v1964 = vand.u32 %v1844, 4294901760
  %1965 = vmatpush1.msra.mxu0 %v1964
  %1966 = vmatprep.subr.mxu0 0.0
  %v1967 = vand.u32 %v1845, 4294901760
  %1968 = vmatpush1.msra.mxu0 %v1967
  %1969 = vmatprep.subr.mxu0 0.0
  %v1970 = vand.u32 %v1846, 4294901760
  %1971 = vmatpush1.msra.mxu0 %v1970
  %1972 = vmatprep.subr.mxu0 0.0
  %v1973 = vand.u32 %v1763, 4294901760
  %1974 = vmatpush1.msra.mxu0 %v1973
  %1975 = vmatprep.subr.mxu0 0.0
  %v1976 = vand.u32 %v1764, 4294901760
  %1977 = vmatpush1.msra.mxu0 %v1976
  %1978 = vmatprep.subr.mxu0 0.0
  %v1979 = vand.u32 %v1765, 4294901760
  %1980 = vmatpush1.msra.mxu0 %v1979
  %1981 = vmatprep.subr.mxu0 0.0
  %v1982 = vand.u32 %v1766, 4294901760
  %1983 = vmatpush1.msra.mxu0 %v1982
  %1984 = vmatprep.subr.mxu0 0.0
  %v1985 = vand.u32 %v1859, 4294901760
  %1986 = vmatpush1.msra.mxu0 %v1985
  %1987 = vmatprep.subr.mxu0 0.0
  %v1988 = vand.u32 %v1860, 4294901760
  %1989 = vmatpush1.msra.mxu0 %v1988
  %1990 = vmatprep.subr.mxu0 0.0
  %v1991 = vand.u32 %v1861, 4294901760
  %1992 = vmatpush1.msra.mxu0 %v1991
  %1993 = vmatprep.subr.mxu0 0.0
  %v1994 = vand.u32 %v1862, 4294901760
  %1995 = vmatpush1.msra.mxu0 %v1994
  %1996 = vmatprep.subr.mxu0 0.0
  %v1997 = vand.u32 %v1875, 4294901760
  %1998 = vmatpush1.msra.mxu0 %v1997
  %1999 = vmatprep.subr.mxu0 0.0
  %v2000 = vand.u32 %v1876, 4294901760
  %2001 = vmatpush1.msra.mxu0 %v2000
  %2002 = vmatprep.subr.mxu0 0.0
  %v2003 = vand.u32 %v1877, 4294901760
  %2004 = vmatpush1.msra.mxu0 %v2003
  %2005 = vmatprep.subr.mxu0 0.0
  %v2006 = vand.u32 %v1878, 4294901760
  %2007 = vmatpush1.msra.mxu0 %v2006
  %2008 = vmatprep.subr.mxu0 0.0
  %v2009 = vand.u32 %v1891, 4294901760
  %2010 = vmatpush1.msra.mxu0 %v2009
  %2011 = vmatprep.subr.mxu0 0.0
  %v2012 = vand.u32 %v1892, 4294901760
  %2013 = vmatpush1.msra.mxu0 %v2012
  %2014 = vmatprep.subr.mxu0 0.0
  %v2015 = vand.u32 %v1893, 4294901760
  %2016 = vmatpush1.msra.mxu0 %v2015
  %2017 = vmatprep.subr.mxu0 0.0
  %v2018 = vand.u32 %v1894, 4294901760
  %2019 = vmatpush1.msra.mxu0 %v2018
  %v2020 = vand.u32 %v1768, 4294901760
  %v2021 = vsub.f32 %v1768, %v2020
  %v2022 = vand.u32 %v2021, 4294901760
  %v2023 = vsub.f32 %v2021, %v2022
  %v2024 = vand.u32 %v2023, 4294901760
  %2025 = vmatprep.mubr.f32.mxu0 %v2024
  %v2026 = vand.u32 %v1767, 4294901760
  %v2027 = vsub.f32 %v1767, %v2026
  %v2028 = vand.u32 %v2027, 4294901760
  %v2029 = vsub.f32 %v2027, %v2028
  %v2030 = vand.u32 %v2029, 4294901760
  %2031 = vmatmul.mubr.f32.gmra.mrb[0].mxu0 %v2030
  %v2032 = vpop.f32.mrb[0].mxu0
  %v2033 = vadd.f32 0.0, %v2032
  %v2034 = vpop.f32.mrb[0].mxu0
  %v2035 = vand.u32 %v1771, 4294901760
  %v2036 = vsub.f32 %v1771, %v2035
  %v2037 = vand.u32 %v2036, 4294901760
  %v2038 = vsub.f32 %v2036, %v2037
  %v2039 = vand.u32 %v2038, 4294901760
  %2040 = vmatprep.mubr.f32.mxu0 %v2039
  %v2041 = vand.u32 %v1770, 4294901760
  %v2042 = vsub.f32 %v1770, %v2041
  %v2043 = vand.u32 %v2042, 4294901760
  %v2044 = vsub.f32 %v2042, %v2043
  %v2045 = vand.u32 %v2044, 4294901760
  %2046 = vmatmul.mubr.f32.gmra.mrb[0].mxu0 %v2045
  %v2047 = vpop.f32.mrb[0].mxu0
  %v2048 = vadd.f32 0.0, %v2047
  %v2049 = vpop.f32.mrb[0].mxu0
  %v2050 = vand.u32 %v1774, 4294901760
  %v2051 = vsub.f32 %v1774, %v2050
  %v2052 = vand.u32 %v2051, 4294901760
  %v2053 = vsub.f32 %v2051, %v2052
  %v2054 = vand.u32 %v2053, 4294901760
  %2055 = vmatprep.mubr.f32.mxu0 %v2054
  %v2056 = vand.u32 %v1773, 4294901760
  %v2057 = vsub.f32 %v1773, %v2056
  %v2058 = vand.u32 %v2057, 4294901760
  %v2059 = vsub.f32 %v2057, %v2058
  %v2060 = vand.u32 %v2059, 4294901760
  %2061 = vmatmul.mubr.f32.gmra.mrb[0].mxu0 %v2060
  %v2062 = vpop.f32.mrb[0].mxu0
  %v2063 = vadd.f32 0.0, %v2062
  %v2064 = vpop.f32.mrb[0].mxu0
  %v2065 = vand.u32 %v1777, 4294901760
  %v2066 = vsub.f32 %v1777, %v2065
  %v2067 = vand.u32 %v2066, 4294901760
  %v2068 = vsub.f32 %v2066, %v2067
  %v2069 = vand.u32 %v2068, 4294901760
  %2070 = vmatprep.mubr.f32.mxu0 %v2069
  %v2071 = vand.u32 %v1776, 4294901760
  %v2072 = vsub.f32 %v1776, %v2071
  %v2073 = vand.u32 %v2072, 4294901760
  %v2074 = vsub.f32 %v2072, %v2073
  %v2075 = vand.u32 %v2074, 4294901760
  %2076 = vmatmul.mubr.f32.gmra.mrb[0].mxu0 %v2075
  %v2077 = vpop.f32.mrb[0].mxu0
  %v2078 = vadd.f32 0.0, %v2077
  %v2079 = vpop.f32.mrb[0].mxu0
  %2080 = vdwg.mxu0
  %2081 = vmatprep.subr.mxu0 0.0
  %v2082 = vand.u32 %v1795, 4294901760
  %v2083 = vsub.f32 %v1795, %v2082
  %v2084 = vand.u32 %v2083, 4294901760
  %v2085 = vsub.f32 %v2083, %v2084
  %v2086 = vand.u32 %v2085, 4294901760
  %2087 = vmatpush1.msra.mxu0 %v2086
  %2088 = vmatprep.subr.mxu0 0.0
  %v2089 = vand.u32 %v1796, 4294901760
  %v2090 = vsub.f32 %v1796, %v2089
  %v2091 = vand.u32 %v2090, 4294901760
  %v2092 = vsub.f32 %v2090, %v2091
  %v2093 = vand.u32 %v2092, 4294901760
  %2094 = vmatpush1.msra.mxu0 %v2093
  %2095 = vmatprep.subr.mxu0 0.0
  %v2096 = vand.u32 %v1797, 4294901760
  %v2097 = vsub.f32 %v1797, %v2096
  %v2098 = vand.u32 %v2097, 4294901760
  %v2099 = vsub.f32 %v2097, %v2098
  %v2100 = vand.u32 %v2099, 4294901760
  %2101 = vmatpush1.msra.mxu0 %v2100
  %2102 = vmatprep.subr.mxu0 0.0
  %v2103 = vand.u32 %v1798, 4294901760
  %v2104 = vsub.f32 %v1798, %v2103
  %v2105 = vand.u32 %v2104, 4294901760
  %v2106 = vsub.f32 %v2104, %v2105
  %v2107 = vand.u32 %v2106, 4294901760
  %2108 = vmatpush1.msra.mxu0 %v2107
  %2109 = vmatprep.subr.mxu0 0.0
  %v2110 = vand.u32 %v1811, 4294901760
  %v2111 = vsub.f32 %v1811, %v2110
  %v2112 = vand.u32 %v2111, 4294901760
  %v2113 = vsub.f32 %v2111, %v2112
  %v2114 = vand.u32 %v2113, 4294901760
  %2115 = vmatpush1.msra.mxu0 %v2114
  %2116 = vmatprep.subr.mxu0 0.0
  %v2117 = vand.u32 %v1812, 4294901760
  %v2118 = vsub.f32 %v1812, %v2117
  %v2119 = vand.u32 %v2118, 4294901760
  %v2120 = vsub.f32 %v2118, %v2119
  %v2121 = vand.u32 %v2120, 4294901760
  %2122 = vmatpush1.msra.mxu0 %v2121
  %2123 = vmatprep.subr.mxu0 0.0
  %v2124 = vand.u32 %v1813, 4294901760
  %v2125 = vsub.f32 %v1813, %v2124
  %v2126 = vand.u32 %v2125, 4294901760
  %v2127 = vsub.f32 %v2125, %v2126
  %v2128 = vand.u32 %v2127, 4294901760
  %2129 = vmatpush1.msra.mxu0 %v2128
  %2130 = vmatprep.subr.mxu0 0.0
  %v2131 = vand.u32 %v1814, 4294901760
  %v2132 = vsub.f32 %v1814, %v2131
  %v2133 = vand.u32 %v2132, 4294901760
  %v2134 = vsub.f32 %v2132, %v2133
  %v2135 = vand.u32 %v2134, 4294901760
  %2136 = vmatpush1.msra.mxu0 %v2135
  %2137 = vmatprep.subr.mxu0 0.0
  %v2138 = vand.u32 %v1827, 4294901760
  %v2139 = vsub.f32 %v1827, %v2138
  %v2140 = vand.u32 %v2139, 4294901760
  %v2141 = vsub.f32 %v2139, %v2140
  %v2142 = vand.u32 %v2141, 4294901760
  %2143 = vmatpush1.msra.mxu0 %v2142
  %2144 = vmatprep.subr.mxu0 0.0
  %v2145 = vand.u32 %v1828, 4294901760
  %v2146 = vsub.f32 %v1828, %v2145
  %v2147 = vand.u32 %v2146, 4294901760
  %v2148 = vsub.f32 %v2146, %v2147
  %v2149 = vand.u32 %v2148, 4294901760
  %2150 = vmatpush1.msra.mxu0 %v2149
  %2151 = vmatprep.subr.mxu0 0.0
  %v2152 = vand.u32 %v1829, 4294901760
  %v2153 = vsub.f32 %v1829, %v2152
  %v2154 = vand.u32 %v2153, 4294901760
  %v2155 = vsub.f32 %v2153, %v2154
  %v2156 = vand.u32 %v2155, 4294901760
  %2157 = vmatpush1.msra.mxu0 %v2156
  %2158 = vmatprep.subr.mxu0 0.0
  %v2159 = vand.u32 %v1830, 4294901760
  %v2160 = vsub.f32 %v1830, %v2159
  %v2161 = vand.u32 %v2160, 4294901760
  %v2162 = vsub.f32 %v2160, %v2161
  %v2163 = vand.u32 %v2162, 4294901760
  %2164 = vmatpush1.msra.mxu0 %v2163
  %2165 = vmatprep.subr.mxu0 0.0
  %v2166 = vand.u32 %v1843, 4294901760
  %v2167 = vsub.f32 %v1843, %v2166
  %v2168 = vand.u32 %v2167, 4294901760
  %v2169 = vsub.f32 %v2167, %v2168
  %v2170 = vand.u32 %v2169, 4294901760
  %2171 = vmatpush1.msra.mxu0 %v2170
  %2172 = vmatprep.subr.mxu0 0.0
  %v2173 = vand.u32 %v1844, 4294901760
  %v2174 = vsub.f32 %v1844, %v2173
  %v2175 = vand.u32 %v2174, 4294901760
  %v2176 = vsub.f32 %v2174, %v2175
  %v2177 = vand.u32 %v2176, 4294901760
  %2178 = vmatpush1.msra.mxu0 %v2177
  %2179 = vmatprep.subr.mxu0 0.0
  %v2180 = vand.u32 %v1845, 4294901760
  %v2181 = vsub.f32 %v1845, %v2180
  %v2182 = vand.u32 %v2181, 4294901760
  %v2183 = vsub.f32 %v2181, %v2182
  %v2184 = vand.u32 %v2183, 4294901760
  %2185 = vmatpush1.msra.mxu0 %v2184
  %2186 = vmatprep.subr.mxu0 0.0
  %v2187 = vand.u32 %v1846, 4294901760
  %v2188 = vsub.f32 %v1846, %v2187
  %v2189 = vand.u32 %v2188, 4294901760
  %v2190 = vsub.f32 %v2188, %v2189
  %v2191 = vand.u32 %v2190, 4294901760
  %2192 = vmatpush1.msra.mxu0 %v2191
  %2193 = vmatprep.subr.mxu0 0.0
  %v2194 = vand.u32 %v1763, 4294901760
  %v2195 = vsub.f32 %v1763, %v2194
  %v2196 = vand.u32 %v2195, 4294901760
  %v2197 = vsub.f32 %v2195, %v2196
  %v2198 = vand.u32 %v2197, 4294901760
  %2199 = vmatpush1.msra.mxu0 %v2198
  %2200 = vmatprep.subr.mxu0 0.0
  %v2201 = vand.u32 %v1764, 4294901760
  %v2202 = vsub.f32 %v1764, %v2201
  %v2203 = vand.u32 %v2202, 4294901760
  %v2204 = vsub.f32 %v2202, %v2203
  %v2205 = vand.u32 %v2204, 4294901760
  %2206 = vmatpush1.msra.mxu0 %v2205
  %2207 = vmatprep.subr.mxu0 0.0
  %v2208 = vand.u32 %v1765, 4294901760
  %v2209 = vsub.f32 %v1765, %v2208
  %v2210 = vand.u32 %v2209, 4294901760
  %v2211 = vsub.f32 %v2209, %v2210
  %v2212 = vand.u32 %v2211, 4294901760
  %2213 = vmatpush1.msra.mxu0 %v2212
  %2214 = vmatprep.subr.mxu0 0.0
  %v2215 = vand.u32 %v1766, 4294901760
  %v2216 = vsub.f32 %v1766, %v2215
  %v2217 = vand.u32 %v2216, 4294901760
  %v2218 = vsub.f32 %v2216, %v2217
  %v2219 = vand.u32 %v2218, 4294901760
  %2220 = vmatpush1.msra.mxu0 %v2219
  %2221 = vmatprep.subr.mxu0 0.0
  %v2222 = vand.u32 %v1859, 4294901760
  %v2223 = vsub.f32 %v1859, %v2222
  %v2224 = vand.u32 %v2223, 4294901760
  %v2225 = vsub.f32 %v2223, %v2224
  %v2226 = vand.u32 %v2225, 4294901760
  %2227 = vmatpush1.msra.mxu0 %v2226
  %2228 = vmatprep.subr.mxu0 0.0
  %v2229 = vand.u32 %v1860, 4294901760
  %v2230 = vsub.f32 %v1860, %v2229
  %v2231 = vand.u32 %v2230, 4294901760
  %v2232 = vsub.f32 %v2230, %v2231
  %v2233 = vand.u32 %v2232, 4294901760
  %2234 = vmatpush1.msra.mxu0 %v2233
  %2235 = vmatprep.subr.mxu0 0.0
  %v2236 = vand.u32 %v1861, 4294901760
  %v2237 = vsub.f32 %v1861, %v2236
  %v2238 = vand.u32 %v2237, 4294901760
  %v2239 = vsub.f32 %v2237, %v2238
  %v2240 = vand.u32 %v2239, 4294901760
  %2241 = vmatpush1.msra.mxu0 %v2240
  %2242 = vmatprep.subr.mxu0 0.0
  %v2243 = vand.u32 %v1862, 4294901760
  %v2244 = vsub.f32 %v1862, %v2243
  %v2245 = vand.u32 %v2244, 4294901760
  %v2246 = vsub.f32 %v2244, %v2245
  %v2247 = vand.u32 %v2246, 4294901760
  %2248 = vmatpush1.msra.mxu0 %v2247
  %2249 = vmatprep.subr.mxu0 0.0
  %v2250 = vand.u32 %v1875, 4294901760
  %v2251 = vsub.f32 %v1875, %v2250
  %v2252 = vand.u32 %v2251, 4294901760
  %v2253 = vsub.f32 %v2251, %v2252
  %v2254 = vand.u32 %v2253, 4294901760
  %2255 = vmatpush1.msra.mxu0 %v2254
  %2256 = vmatprep.subr.mxu0 0.0
  %v2257 = vand.u32 %v1876, 4294901760
  %v2258 = vsub.f32 %v1876, %v2257
  %v2259 = vand.u32 %v2258, 4294901760
  %v2260 = vsub.f32 %v2258, %v2259
  %v2261 = vand.u32 %v2260, 4294901760
  %2262 = vmatpush1.msra.mxu0 %v2261
  %2263 = vmatprep.subr.mxu0 0.0
  %v2264 = vand.u32 %v1877, 4294901760
  %v2265 = vsub.f32 %v1877, %v2264
  %v2266 = vand.u32 %v2265, 4294901760
  %v2267 = vsub.f32 %v2265, %v2266
  %v2268 = vand.u32 %v2267, 4294901760
  %2269 = vmatpush1.msra.mxu0 %v2268
  %2270 = vmatprep.subr.mxu0 0.0
  %v2271 = vand.u32 %v1878, 4294901760
  %v2272 = vsub.f32 %v1878, %v2271
  %v2273 = vand.u32 %v2272, 4294901760
  %v2274 = vsub.f32 %v2272, %v2273
  %v2275 = vand.u32 %v2274, 4294901760
  %2276 = vmatpush1.msra.mxu0 %v2275
  %2277 = vmatprep.subr.mxu0 0.0
  %v2278 = vand.u32 %v1891, 4294901760
  %v2279 = vsub.f32 %v1891, %v2278
  %v2280 = vand.u32 %v2279, 4294901760
  %v2281 = vsub.f32 %v2279, %v2280
  %v2282 = vand.u32 %v2281, 4294901760
  %2283 = vmatpush1.msra.mxu0 %v2282
  %2284 = vmatprep.subr.mxu0 0.0
  %v2285 = vand.u32 %v1892, 4294901760
  %v2286 = vsub.f32 %v1892, %v2285
  %v2287 = vand.u32 %v2286, 4294901760
  %v2288 = vsub.f32 %v2286, %v2287
  %v2289 = vand.u32 %v2288, 4294901760
  %2290 = vmatpush1.msra.mxu0 %v2289
  %2291 = vmatprep.subr.mxu0 0.0
  %v2292 = vand.u32 %v1893, 4294901760
  %v2293 = vsub.f32 %v1893, %v2292
  %v2294 = vand.u32 %v2293, 4294901760
  %v2295 = vsub.f32 %v2293, %v2294
  %v2296 = vand.u32 %v2295, 4294901760
  %2297 = vmatpush1.msra.mxu0 %v2296
  %2298 = vmatprep.subr.mxu0 0.0
  %v2299 = vand.u32 %v1894, 4294901760
  %v2300 = vsub.f32 %v1894, %v2299
  %v2301 = vand.u32 %v2300, 4294901760
  %v2302 = vsub.f32 %v2300, %v2301
  %v2303 = vand.u32 %v2302, 4294901760
  %2304 = vmatpush1.msra.mxu0 %v2303
  %v2305 = vand.u32 %v1768, 4294901760
  %2306 = vmatprep.mubr.f32.mxu0 %v2305
  %v2307 = vand.u32 %v1767, 4294901760
  %2308 = vmatmul.mubr.f32.gmra.mrb[0].mxu0 %v2307
  %v2309 = vpop.f32.mrb[0].mxu0
  %v2310 = vadd.f32 %v2033, %v2309
  %v2311 = vpop.f32.mrb[0].mxu0
  %v2312 = vand.u32 %v1771, 4294901760
  %2313 = vmatprep.mubr.f32.mxu0 %v2312
  %v2314 = vand.u32 %v1770, 4294901760
  %2315 = vmatmul.mubr.f32.gmra.mrb[0].mxu0 %v2314
  %v2316 = vpop.f32.mrb[0].mxu0
  %v2317 = vadd.f32 %v2048, %v2316
  %v2318 = vpop.f32.mrb[0].mxu0
  %v2319 = vand.u32 %v1774, 4294901760
  %2320 = vmatprep.mubr.f32.mxu0 %v2319
  %v2321 = vand.u32 %v1773, 4294901760
  %2322 = vmatmul.mubr.f32.gmra.mrb[0].mxu0 %v2321
  %v2323 = vpop.f32.mrb[0].mxu0
  %v2324 = vadd.f32 %v2063, %v2323
  %v2325 = vpop.f32.mrb[0].mxu0
  %v2326 = vand.u32 %v1777, 4294901760
  %2327 = vmatprep.mubr.f32.mxu0 %v2326
  %v2328 = vand.u32 %v1776, 4294901760
  %2329 = vmatmul.mubr.f32.gmra.mrb[0].mxu0 %v2328
  %v2330 = vpop.f32.mrb[0].mxu0
  %v2331 = vadd.f32 %v2078, %v2330
  %v2332 = vpop.f32.mrb[0].mxu0
  %2333 = vdwg.mxu0
  %2334 = vmatprep.subr.mxu0 0.0
  %v2335 = vand.u32 %v1795, 4294901760
  %v2336 = vsub.f32 %v1795, %v2335
  %2337 = vmatpush1.msra.mxu0 %v2336
  %2338 = vmatprep.subr.mxu0 0.0
  %v2339 = vand.u32 %v1796, 4294901760
  %v2340 = vsub.f32 %v1796, %v2339
  %2341 = vmatpush1.msra.mxu0 %v2340
  %2342 = vmatprep.subr.mxu0 0.0
  %v2343 = vand.u32 %v1797, 4294901760
  %v2344 = vsub.f32 %v1797, %v2343
  %2345 = vmatpush1.msra.mxu0 %v2344
  %2346 = vmatprep.subr.mxu0 0.0
  %v2347 = vand.u32 %v1798, 4294901760
  %v2348 = vsub.f32 %v1798, %v2347
  %2349 = vmatpush1.msra.mxu0 %v2348
  %2350 = vmatprep.subr.mxu0 0.0
  %v2351 = vand.u32 %v1811, 4294901760
  %v2352 = vsub.f32 %v1811, %v2351
  %2353 = vmatpush1.msra.mxu0 %v2352
  %2354 = vmatprep.subr.mxu0 0.0
  %v2355 = vand.u32 %v1812, 4294901760
  %v2356 = vsub.f32 %v1812, %v2355
  %2357 = vmatpush1.msra.mxu0 %v2356
  %2358 = vmatprep.subr.mxu0 0.0
  %v2359 = vand.u32 %v1813, 4294901760
  %v2360 = vsub.f32 %v1813, %v2359
  %2361 = vmatpush1.msra.mxu0 %v2360
  %2362 = vmatprep.subr.mxu0 0.0
  %v2363 = vand.u32 %v1814, 4294901760
  %v2364 = vsub.f32 %v1814, %v2363
  %2365 = vmatpush1.msra.mxu0 %v2364
  %2366 = vmatprep.subr.mxu0 0.0
  %v2367 = vand.u32 %v1827, 4294901760
  %v2368 = vsub.f32 %v1827, %v2367
  %2369 = vmatpush1.msra.mxu0 %v2368
  %2370 = vmatprep.subr.mxu0 0.0
  %v2371 = vand.u32 %v1828, 4294901760
  %v2372 = vsub.f32 %v1828, %v2371
  %2373 = vmatpush1.msra.mxu0 %v2372
  %2374 = vmatprep.subr.mxu0 0.0
  %v2375 = vand.u32 %v1829, 4294901760
  %v2376 = vsub.f32 %v1829, %v2375
  %2377 = vmatpush1.msra.mxu0 %v2376
  %2378 = vmatprep.subr.mxu0 0.0
  %v2379 = vand.u32 %v1830, 4294901760
  %v2380 = vsub.f32 %v1830, %v2379
  %2381 = vmatpush1.msra.mxu0 %v2380
  %2382 = vmatprep.subr.mxu0 0.0
  %v2383 = vand.u32 %v1843, 4294901760
  %v2384 = vsub.f32 %v1843, %v2383
  %2385 = vmatpush1.msra.mxu0 %v2384
  %2386 = vmatprep.subr.mxu0 0.0
  %v2387 = vand.u32 %v1844, 4294901760
  %v2388 = vsub.f32 %v1844, %v2387
  %2389 = vmatpush1.msra.mxu0 %v2388
  %2390 = vmatprep.subr.mxu0 0.0
  %v2391 = vand.u32 %v1845, 4294901760
  %v2392 = vsub.f32 %v1845, %v2391
  %2393 = vmatpush1.msra.mxu0 %v2392
  %2394 = vmatprep.subr.mxu0 0.0
  %v2395 = vand.u32 %v1846, 4294901760
  %v2396 = vsub.f32 %v1846, %v2395
  %2397 = vmatpush1.msra.mxu0 %v2396
  %2398 = vmatprep.subr.mxu0 0.0
  %v2399 = vand.u32 %v1763, 4294901760
  %v2400 = vsub.f32 %v1763, %v2399
  %2401 = vmatpush1.msra.mxu0 %v2400
  %2402 = vmatprep.subr.mxu0 0.0
  %v2403 = vand.u32 %v1764, 4294901760
  %v2404 = vsub.f32 %v1764, %v2403
  %2405 = vmatpush1.msra.mxu0 %v2404
  %2406 = vmatprep.subr.mxu0 0.0
  %v2407 = vand.u32 %v1765, 4294901760
  %v2408 = vsub.f32 %v1765, %v2407
  %2409 = vmatpush1.msra.mxu0 %v2408
  %2410 = vmatprep.subr.mxu0 0.0
  %v2411 = vand.u32 %v1766, 4294901760
  %v2412 = vsub.f32 %v1766, %v2411
  %2413 = vmatpush1.msra.mxu0 %v2412
  %2414 = vmatprep.subr.mxu0 0.0
  %v2415 = vand.u32 %v1859, 4294901760
  %v2416 = vsub.f32 %v1859, %v2415
  %2417 = vmatpush1.msra.mxu0 %v2416
  %2418 = vmatprep.subr.mxu0 0.0
  %v2419 = vand.u32 %v1860, 4294901760
  %v2420 = vsub.f32 %v1860, %v2419
  %2421 = vmatpush1.msra.mxu0 %v2420
  %2422 = vmatprep.subr.mxu0 0.0
  %v2423 = vand.u32 %v1861, 4294901760
  %v2424 = vsub.f32 %v1861, %v2423
  %2425 = vmatpush1.msra.mxu0 %v2424
  %2426 = vmatprep.subr.mxu0 0.0
  %v2427 = vand.u32 %v1862, 4294901760
  %v2428 = vsub.f32 %v1862, %v2427
  %2429 = vmatpush1.msra.mxu0 %v2428
  %2430 = vmatprep.subr.mxu0 0.0
  %v2431 = vand.u32 %v1875, 4294901760
  %v2432 = vsub.f32 %v1875, %v2431
  %2433 = vmatpush1.msra.mxu0 %v2432
  %2434 = vmatprep.subr.mxu0 0.0
  %v2435 = vand.u32 %v1876, 4294901760
  %v2436 = vsub.f32 %v1876, %v2435
  %2437 = vmatpush1.msra.mxu0 %v2436
  %2438 = vmatprep.subr.mxu0 0.0
  %v2439 = vand.u32 %v1877, 4294901760
  %v2440 = vsub.f32 %v1877, %v2439
  %2441 = vmatpush1.msra.mxu0 %v2440
  %2442 = vmatprep.subr.mxu0 0.0
  %v2443 = vand.u32 %v1878, 4294901760
  %v2444 = vsub.f32 %v1878, %v2443
  %2445 = vmatpush1.msra.mxu0 %v2444
  %2446 = vmatprep.subr.mxu0 0.0
  %v2447 = vand.u32 %v1891, 4294901760
  %v2448 = vsub.f32 %v1891, %v2447
  %2449 = vmatpush1.msra.mxu0 %v2448
  %2450 = vmatprep.subr.mxu0 0.0
  %v2451 = vand.u32 %v1892, 4294901760
  %v2452 = vsub.f32 %v1892, %v2451
  %2453 = vmatpush1.msra.mxu0 %v2452
  %2454 = vmatprep.subr.mxu0 0.0
  %v2455 = vand.u32 %v1893, 4294901760
  %v2456 = vsub.f32 %v1893, %v2455
  %2457 = vmatpush1.msra.mxu0 %v2456
  %2458 = vmatprep.subr.mxu0 0.0
  %v2459 = vand.u32 %v1894, 4294901760
  %v2460 = vsub.f32 %v1894, %v2459
  %2461 = vmatpush1.msra.mxu0 %v2460
  %v2462 = vand.u32 %v1768, 4294901760
  %v2463 = vsub.f32 %v1768, %v2462
  %2464 = vmatprep.mubr.f32.mxu0 %v2463
  %v2465 = vand.u32 %v1767, 4294901760
  %v2466 = vsub.f32 %v1767, %v2465
  %2467 = vmatmul.mubr.f32.gmra.mrb[0].mxu0 %v2466
  %v2468 = vpop.f32.mrb[0].mxu0
  %v2469 = vadd.f32 %v2310, %v2468
  %v2470 = vpop.f32.mrb[0].mxu0
  %v2471 = vand.u32 %v1771, 4294901760
  %v2472 = vsub.f32 %v1771, %v2471
  %2473 = vmatprep.mubr.f32.mxu0 %v2472
  %v2474 = vand.u32 %v1770, 4294901760
  %v2475 = vsub.f32 %v1770, %v2474
  %2476 = vmatmul.mubr.f32.gmra.mrb[0].mxu0 %v2475
  %v2477 = vpop.f32.mrb[0].mxu0
  %v2478 = vadd.f32 %v2317, %v2477
  %v2479 = vpop.f32.mrb[0].mxu0
  %v2480 = vand.u32 %v1774, 4294901760
  %v2481 = vsub.f32 %v1774, %v2480
  %2482 = vmatprep.mubr.f32.mxu0 %v2481
  %v2483 = vand.u32 %v1773, 4294901760
  %v2484 = vsub.f32 %v1773, %v2483
  %2485 = vmatmul.mubr.f32.gmra.mrb[0].mxu0 %v2484
  %v2486 = vpop.f32.mrb[0].mxu0
  %v2487 = vadd.f32 %v2324, %v2486
  %v2488 = vpop.f32.mrb[0].mxu0
  %v2489 = vand.u32 %v1777, 4294901760
  %v2490 = vsub.f32 %v1777, %v2489
  %2491 = vmatprep.mubr.f32.mxu0 %v2490
  %v2492 = vand.u32 %v1776, 4294901760
  %v2493 = vsub.f32 %v1776, %v2492
  %2494 = vmatmul.mubr.f32.gmra.mrb[0].mxu0 %v2493
  %v2495 = vpop.f32.mrb[0].mxu0
  %v2496 = vadd.f32 %v2331, %v2495
  %v2497 = vpop.f32.mrb[0].mxu0
  %2498 = vdwg.mxu0
  %2499 = vmatprep.subr.mxu0 0.0
  %v2500 = vand.u32 %v1795, 4294901760
  %2501 = vmatpush1.msra.mxu0 %v2500
  %2502 = vmatprep.subr.mxu0 0.0
  %v2503 = vand.u32 %v1796, 4294901760
  %2504 = vmatpush1.msra.mxu0 %v2503
  %2505 = vmatprep.subr.mxu0 0.0
  %v2506 = vand.u32 %v1797, 4294901760
  %2507 = vmatpush1.msra.mxu0 %v2506
  %2508 = vmatprep.subr.mxu0 0.0
  %v2509 = vand.u32 %v1798, 4294901760
  %2510 = vmatpush1.msra.mxu0 %v2509
  %2511 = vmatprep.subr.mxu0 0.0
  %v2512 = vand.u32 %v1811, 4294901760
  %2513 = vmatpush1.msra.mxu0 %v2512
  %2514 = vmatprep.subr.mxu0 0.0
  %v2515 = vand.u32 %v1812, 4294901760
  %2516 = vmatpush1.msra.mxu0 %v2515
  %2517 = vmatprep.subr.mxu0 0.0
  %v2518 = vand.u32 %v1813, 4294901760
  %2519 = vmatpush1.msra.mxu0 %v2518
  %2520 = vmatprep.subr.mxu0 0.0
  %v2521 = vand.u32 %v1814, 4294901760
  %2522 = vmatpush1.msra.mxu0 %v2521
  %2523 = vmatprep.subr.mxu0 0.0
  %v2524 = vand.u32 %v1827, 4294901760
  %2525 = vmatpush1.msra.mxu0 %v2524
  %2526 = vmatprep.subr.mxu0 0.0
  %v2527 = vand.u32 %v1828, 4294901760
  %2528 = vmatpush1.msra.mxu0 %v2527
  %2529 = vmatprep.subr.mxu0 0.0
  %v2530 = vand.u32 %v1829, 4294901760
  %2531 = vmatpush1.msra.mxu0 %v2530
  %2532 = vmatprep.subr.mxu0 0.0
  %v2533 = vand.u32 %v1830, 4294901760
  %2534 = vmatpush1.msra.mxu0 %v2533
  %2535 = vmatprep.subr.mxu0 0.0
  %v2536 = vand.u32 %v1843, 4294901760
  %2537 = vmatpush1.msra.mxu0 %v2536
  %2538 = vmatprep.subr.mxu0 0.0
  %v2539 = vand.u32 %v1844, 4294901760
  %2540 = vmatpush1.msra.mxu0 %v2539
  %2541 = vmatprep.subr.mxu0 0.0
  %v2542 = vand.u32 %v1845, 4294901760
  %2543 = vmatpush1.msra.mxu0 %v2542
  %2544 = vmatprep.subr.mxu0 0.0
  %v2545 = vand.u32 %v1846, 4294901760
  %2546 = vmatpush1.msra.mxu0 %v2545
  %2547 = vmatprep.subr.mxu0 0.0
  %v2548 = vand.u32 %v1763, 4294901760
  %2549 = vmatpush1.msra.mxu0 %v2548
  %2550 = vmatprep.subr.mxu0 0.0
  %v2551 = vand.u32 %v1764, 4294901760
  %2552 = vmatpush1.msra.mxu0 %v2551
  %2553 = vmatprep.subr.mxu0 0.0
  %v2554 = vand.u32 %v1765, 4294901760
  %2555 = vmatpush1.msra.mxu0 %v2554
  %2556 = vmatprep.subr.mxu0 0.0
  %v2557 = vand.u32 %v1766, 4294901760
  %2558 = vmatpush1.msra.mxu0 %v2557
  %2559 = vmatprep.subr.mxu0 0.0
  %v2560 = vand.u32 %v1859, 4294901760
  %2561 = vmatpush1.msra.mxu0 %v2560
  %2562 = vmatprep.subr.mxu0 0.0
  %v2563 = vand.u32 %v1860, 4294901760
  %2564 = vmatpush1.msra.mxu0 %v2563
  %2565 = vmatprep.subr.mxu0 0.0
  %v2566 = vand.u32 %v1861, 4294901760
  %2567 = vmatpush1.msra.mxu0 %v2566
  %2568 = vmatprep.subr.mxu0 0.0
  %v2569 = vand.u32 %v1862, 4294901760
  %2570 = vmatpush1.msra.mxu0 %v2569
  %2571 = vmatprep.subr.mxu0 0.0
  %v2572 = vand.u32 %v1875, 4294901760
  %2573 = vmatpush1.msra.mxu0 %v2572
  %2574 = vmatprep.subr.mxu0 0.0
  %v2575 = vand.u32 %v1876, 4294901760
  %2576 = vmatpush1.msra.mxu0 %v2575
  %2577 = vmatprep.subr.mxu0 0.0
  %v2578 = vand.u32 %v1877, 4294901760
  %2579 = vmatpush1.msra.mxu0 %v2578
  %2580 = vmatprep.subr.mxu0 0.0
  %v2581 = vand.u32 %v1878, 4294901760
  %2582 = vmatpush1.msra.mxu0 %v2581
  %2583 = vmatprep.subr.mxu0 0.0
  %v2584 = vand.u32 %v1891, 4294901760
  %2585 = vmatpush1.msra.mxu0 %v2584
  %2586 = vmatprep.subr.mxu0 0.0
  %v2587 = vand.u32 %v1892, 4294901760
  %2588 = vmatpush1.msra.mxu0 %v2587
  %2589 = vmatprep.subr.mxu0 0.0
  %v2590 = vand.u32 %v1893, 4294901760
  %2591 = vmatpush1.msra.mxu0 %v2590
  %2592 = vmatprep.subr.mxu0 0.0
  %v2593 = vand.u32 %v1894, 4294901760
  %2594 = vmatpush1.msra.mxu0 %v2593
  %v2595 = vand.u32 %v1768, 4294901760
  %v2596 = vsub.f32 %v1768, %v2595
  %v2597 = vand.u32 %v2596, 4294901760
  %2598 = vmatprep.mubr.f32.mxu0 %v2597
  %v2599 = vand.u32 %v1767, 4294901760
  %v2600 = vsub.f32 %v1767, %v2599
  %v2601 = vand.u32 %v2600, 4294901760
  %2602 = vmatmul.mubr.f32.gmra.mrb[0].mxu0 %v2601
  %v2603 = vpop.f32.mrb[0].mxu0
  %v2604 = vadd.f32 %v2469, %v2603
  %v2605 = vpop.f32.mrb[0].mxu0
  %v2606 = vand.u32 %v1771, 4294901760
  %v2607 = vsub.f32 %v1771, %v2606
  %v2608 = vand.u32 %v2607, 4294901760
  %2609 = vmatprep.mubr.f32.mxu0 %v2608
  %v2610 = vand.u32 %v1770, 4294901760
  %v2611 = vsub.f32 %v1770, %v2610
  %v2612 = vand.u32 %v2611, 4294901760
  %2613 = vmatmul.mubr.f32.gmra.mrb[0].mxu0 %v2612
  %v2614 = vpop.f32.mrb[0].mxu0
  %v2615 = vadd.f32 %v2478, %v2614
  %v2616 = vpop.f32.mrb[0].mxu0
  %v2617 = vand.u32 %v1774, 4294901760
  %v2618 = vsub.f32 %v1774, %v2617
  %v2619 = vand.u32 %v2618, 4294901760
  %2620 = vmatprep.mubr.f32.mxu0 %v2619
  %v2621 = vand.u32 %v1773, 4294901760
  %v2622 = vsub.f32 %v1773, %v2621
  %v2623 = vand.u32 %v2622, 4294901760
  %2624 = vmatmul.mubr.f32.gmra.mrb[0].mxu0 %v2623
  %v2625 = vpop.f32.mrb[0].mxu0
  %v2626 = vadd.f32 %v2487, %v2625
  %v2627 = vpop.f32.mrb[0].mxu0
  %v2628 = vand.u32 %v1777, 4294901760
  %v2629 = vsub.f32 %v1777, %v2628
  %v2630 = vand.u32 %v2629, 4294901760
  %2631 = vmatprep.mubr.f32.mxu0 %v2630
  %v2632 = vand.u32 %v1776, 4294901760
  %v2633 = vsub.f32 %v1776, %v2632
  %v2634 = vand.u32 %v2633, 4294901760
  %2635 = vmatmul.mubr.f32.gmra.mrb[0].mxu0 %v2634
  %v2636 = vpop.f32.mrb[0].mxu0
  %v2637 = vadd.f32 %v2496, %v2636
  %v2638 = vpop.f32.mrb[0].mxu0
  %2639 = vdwg.mxu0
  %2640 = vmatprep.subr.mxu0 0.0
  %v2641 = vand.u32 %v1795, 4294901760
  %v2642 = vsub.f32 %v1795, %v2641
  %v2643 = vand.u32 %v2642, 4294901760
  %2644 = vmatpush1.msra.mxu0 %v2643
  %2645 = vmatprep.subr.mxu0 0.0
  %v2646 = vand.u32 %v1796, 4294901760
  %v2647 = vsub.f32 %v1796, %v2646
  %v2648 = vand.u32 %v2647, 4294901760
  %2649 = vmatpush1.msra.mxu0 %v2648
  %2650 = vmatprep.subr.mxu0 0.0
  %v2651 = vand.u32 %v1797, 4294901760
  %v2652 = vsub.f32 %v1797, %v2651
  %v2653 = vand.u32 %v2652, 4294901760
  %2654 = vmatpush1.msra.mxu0 %v2653
  %2655 = vmatprep.subr.mxu0 0.0
  %v2656 = vand.u32 %v1798, 4294901760
  %v2657 = vsub.f32 %v1798, %v2656
  %v2658 = vand.u32 %v2657, 4294901760
  %2659 = vmatpush1.msra.mxu0 %v2658
  %2660 = vmatprep.subr.mxu0 0.0
  %v2661 = vand.u32 %v1811, 4294901760
  %v2662 = vsub.f32 %v1811, %v2661
  %v2663 = vand.u32 %v2662, 4294901760
  %2664 = vmatpush1.msra.mxu0 %v2663
  %2665 = vmatprep.subr.mxu0 0.0
  %v2666 = vand.u32 %v1812, 4294901760
  %v2667 = vsub.f32 %v1812, %v2666
  %v2668 = vand.u32 %v2667, 4294901760
  %2669 = vmatpush1.msra.mxu0 %v2668
  %2670 = vmatprep.subr.mxu0 0.0
  %v2671 = vand.u32 %v1813, 4294901760
  %v2672 = vsub.f32 %v1813, %v2671
  %v2673 = vand.u32 %v2672, 4294901760
  %2674 = vmatpush1.msra.mxu0 %v2673
  %2675 = vmatprep.subr.mxu0 0.0
  %v2676 = vand.u32 %v1814, 4294901760
  %v2677 = vsub.f32 %v1814, %v2676
  %v2678 = vand.u32 %v2677, 4294901760
  %2679 = vmatpush1.msra.mxu0 %v2678
  %2680 = vmatprep.subr.mxu0 0.0
  %v2681 = vand.u32 %v1827, 4294901760
  %v2682 = vsub.f32 %v1827, %v2681
  %v2683 = vand.u32 %v2682, 4294901760
  %2684 = vmatpush1.msra.mxu0 %v2683
  %2685 = vmatprep.subr.mxu0 0.0
  %v2686 = vand.u32 %v1828, 4294901760
  %v2687 = vsub.f32 %v1828, %v2686
  %v2688 = vand.u32 %v2687, 4294901760
  %2689 = vmatpush1.msra.mxu0 %v2688
  %2690 = vmatprep.subr.mxu0 0.0
  %v2691 = vand.u32 %v1829, 4294901760
  %v2692 = vsub.f32 %v1829, %v2691
  %v2693 = vand.u32 %v2692, 4294901760
  %2694 = vmatpush1.msra.mxu0 %v2693
  %2695 = vmatprep.subr.mxu0 0.0
  %v2696 = vand.u32 %v1830, 4294901760
  %v2697 = vsub.f32 %v1830, %v2696
  %v2698 = vand.u32 %v2697, 4294901760
  %2699 = vmatpush1.msra.mxu0 %v2698
  %2700 = vmatprep.subr.mxu0 0.0
  %v2701 = vand.u32 %v1843, 4294901760
  %v2702 = vsub.f32 %v1843, %v2701
  %v2703 = vand.u32 %v2702, 4294901760
  %2704 = vmatpush1.msra.mxu0 %v2703
  %2705 = vmatprep.subr.mxu0 0.0
  %v2706 = vand.u32 %v1844, 4294901760
  %v2707 = vsub.f32 %v1844, %v2706
  %v2708 = vand.u32 %v2707, 4294901760
  %2709 = vmatpush1.msra.mxu0 %v2708
  %2710 = vmatprep.subr.mxu0 0.0
  %v2711 = vand.u32 %v1845, 4294901760
  %v2712 = vsub.f32 %v1845, %v2711
  %v2713 = vand.u32 %v2712, 4294901760
  %2714 = vmatpush1.msra.mxu0 %v2713
  %2715 = vmatprep.subr.mxu0 0.0
  %v2716 = vand.u32 %v1846, 4294901760
  %v2717 = vsub.f32 %v1846, %v2716
  %v2718 = vand.u32 %v2717, 4294901760
  %2719 = vmatpush1.msra.mxu0 %v2718
  %2720 = vmatprep.subr.mxu0 0.0
  %v2721 = vand.u32 %v1763, 4294901760
  %v2722 = vsub.f32 %v1763, %v2721
  %v2723 = vand.u32 %v2722, 4294901760
  %2724 = vmatpush1.msra.mxu0 %v2723
  %2725 = vmatprep.subr.mxu0 0.0
  %v2726 = vand.u32 %v1764, 4294901760
  %v2727 = vsub.f32 %v1764, %v2726
  %v2728 = vand.u32 %v2727, 4294901760
  %2729 = vmatpush1.msra.mxu0 %v2728
  %2730 = vmatprep.subr.mxu0 0.0
  %v2731 = vand.u32 %v1765, 4294901760
  %v2732 = vsub.f32 %v1765, %v2731
  %v2733 = vand.u32 %v2732, 4294901760
  %2734 = vmatpush1.msra.mxu0 %v2733
  %2735 = vmatprep.subr.mxu0 0.0
  %v2736 = vand.u32 %v1766, 4294901760
  %v2737 = vsub.f32 %v1766, %v2736
  %v2738 = vand.u32 %v2737, 4294901760
  %2739 = vmatpush1.msra.mxu0 %v2738
  %2740 = vmatprep.subr.mxu0 0.0
  %v2741 = vand.u32 %v1859, 4294901760
  %v2742 = vsub.f32 %v1859, %v2741
  %v2743 = vand.u32 %v2742, 4294901760
  %2744 = vmatpush1.msra.mxu0 %v2743
  %2745 = vmatprep.subr.mxu0 0.0
  %v2746 = vand.u32 %v1860, 4294901760
  %v2747 = vsub.f32 %v1860, %v2746
  %v2748 = vand.u32 %v2747, 4294901760
  %2749 = vmatpush1.msra.mxu0 %v2748
  %2750 = vmatprep.subr.mxu0 0.0
  %v2751 = vand.u32 %v1861, 4294901760
  %v2752 = vsub.f32 %v1861, %v2751
  %v2753 = vand.u32 %v2752, 4294901760
  %2754 = vmatpush1.msra.mxu0 %v2753
  %2755 = vmatprep.subr.mxu0 0.0
  %v2756 = vand.u32 %v1862, 4294901760
  %v2757 = vsub.f32 %v1862, %v2756
  %v2758 = vand.u32 %v2757, 4294901760
  %2759 = vmatpush1.msra.mxu0 %v2758
  %2760 = vmatprep.subr.mxu0 0.0
  %v2761 = vand.u32 %v1875, 4294901760
  %v2762 = vsub.f32 %v1875, %v2761
  %v2763 = vand.u32 %v2762, 4294901760
  %2764 = vmatpush1.msra.mxu0 %v2763
  %2765 = vmatprep.subr.mxu0 0.0
  %v2766 = vand.u32 %v1876, 4294901760
  %v2767 = vsub.f32 %v1876, %v2766
  %v2768 = vand.u32 %v2767, 4294901760
  %2769 = vmatpush1.msra.mxu0 %v2768
  %2770 = vmatprep.subr.mxu0 0.0
  %v2771 = vand.u32 %v1877, 4294901760
  %v2772 = vsub.f32 %v1877, %v2771
  %v2773 = vand.u32 %v2772, 4294901760
  %2774 = vmatpush1.msra.mxu0 %v2773
  %2775 = vmatprep.subr.mxu0 0.0
  %v2776 = vand.u32 %v1878, 4294901760
  %v2777 = vsub.f32 %v1878, %v2776
  %v2778 = vand.u32 %v2777, 4294901760
  %2779 = vmatpush1.msra.mxu0 %v2778
  %2780 = vmatprep.subr.mxu0 0.0
  %v2781 = vand.u32 %v1891, 4294901760
  %v2782 = vsub.f32 %v1891, %v2781
  %v2783 = vand.u32 %v2782, 4294901760
  %2784 = vmatpush1.msra.mxu0 %v2783
  %2785 = vmatprep.subr.mxu0 0.0
  %v2786 = vand.u32 %v1892, 4294901760
  %v2787 = vsub.f32 %v1892, %v2786
  %v2788 = vand.u32 %v2787, 4294901760
  %2789 = vmatpush1.msra.mxu0 %v2788
  %2790 = vmatprep.subr.mxu0 0.0
  %v2791 = vand.u32 %v1893, 4294901760
  %v2792 = vsub.f32 %v1893, %v2791
  %v2793 = vand.u32 %v2792, 4294901760
  %2794 = vmatpush1.msra.mxu0 %v2793
  %2795 = vmatprep.subr.mxu0 0.0
  %v2796 = vand.u32 %v1894, 4294901760
  %v2797 = vsub.f32 %v1894, %v2796
  %v2798 = vand.u32 %v2797, 4294901760
  %2799 = vmatpush1.msra.mxu0 %v2798
  %v2800 = vand.u32 %v1768, 4294901760
  %2801 = vmatprep.mubr.f32.mxu0 %v2800
  %v2802 = vand.u32 %v1767, 4294901760
  %2803 = vmatmul.mubr.f32.gmra.mrb[0].mxu0 %v2802
  %v2804 = vpop.f32.mrb[0].mxu0
  %v2805 = vadd.f32 %v2604, %v2804
  %v2806 = vpop.f32.mrb[0].mxu0
  %v2807 = vand.u32 %v1771, 4294901760
  %2808 = vmatprep.mubr.f32.mxu0 %v2807
  %v2809 = vand.u32 %v1770, 4294901760
  %2810 = vmatmul.mubr.f32.gmra.mrb[0].mxu0 %v2809
  %v2811 = vpop.f32.mrb[0].mxu0
  %v2812 = vadd.f32 %v2615, %v2811
  %v2813 = vpop.f32.mrb[0].mxu0
  %v2814 = vand.u32 %v1774, 4294901760
  %2815 = vmatprep.mubr.f32.mxu0 %v2814
  %v2816 = vand.u32 %v1773, 4294901760
  %2817 = vmatmul.mubr.f32.gmra.mrb[0].mxu0 %v2816
  %v2818 = vpop.f32.mrb[0].mxu0
  %v2819 = vadd.f32 %v2626, %v2818
  %v2820 = vpop.f32.mrb[0].mxu0
  %v2821 = vand.u32 %v1777, 4294901760
  %2822 = vmatprep.mubr.f32.mxu0 %v2821
  %v2823 = vand.u32 %v1776, 4294901760
  %2824 = vmatmul.mubr.f32.gmra.mrb[0].mxu0 %v2823
  %v2825 = vpop.f32.mrb[0].mxu0
  %v2826 = vadd.f32 %v2637, %v2825
  %v2827 = vpop.f32.mrb[0].mxu0
  %2828 = vdwg.mxu0
  %2829 = vmatprep.subr.mxu0 0.0
  %v2830 = vand.u32 %v1795, 4294901760
  %2831 = vmatpush1.msra.mxu0 %v2830
  %2832 = vmatprep.subr.mxu0 0.0
  %v2833 = vand.u32 %v1796, 4294901760
  %2834 = vmatpush1.msra.mxu0 %v2833
  %2835 = vmatprep.subr.mxu0 0.0
  %v2836 = vand.u32 %v1797, 4294901760
  %2837 = vmatpush1.msra.mxu0 %v2836
  %2838 = vmatprep.subr.mxu0 0.0
  %v2839 = vand.u32 %v1798, 4294901760
  %2840 = vmatpush1.msra.mxu0 %v2839
  %2841 = vmatprep.subr.mxu0 0.0
  %v2842 = vand.u32 %v1811, 4294901760
  %2843 = vmatpush1.msra.mxu0 %v2842
  %2844 = vmatprep.subr.mxu0 0.0
  %v2845 = vand.u32 %v1812, 4294901760
  %2846 = vmatpush1.msra.mxu0 %v2845
  %2847 = vmatprep.subr.mxu0 0.0
  %v2848 = vand.u32 %v1813, 4294901760
  %2849 = vmatpush1.msra.mxu0 %v2848
  %2850 = vmatprep.subr.mxu0 0.0
  %v2851 = vand.u32 %v1814, 4294901760
  %2852 = vmatpush1.msra.mxu0 %v2851
  %2853 = vmatprep.subr.mxu0 0.0
  %v2854 = vand.u32 %v1827, 4294901760
  %2855 = vmatpush1.msra.mxu0 %v2854
  %2856 = vmatprep.subr.mxu0 0.0
  %v2857 = vand.u32 %v1828, 4294901760
  %2858 = vmatpush1.msra.mxu0 %v2857
  %2859 = vmatprep.subr.mxu0 0.0
  %v2860 = vand.u32 %v1829, 4294901760
  %2861 = vmatpush1.msra.mxu0 %v2860
  %2862 = vmatprep.subr.mxu0 0.0
  %v2863 = vand.u32 %v1830, 4294901760
  %2864 = vmatpush1.msra.mxu0 %v2863
  %2865 = vmatprep.subr.mxu0 0.0
  %v2866 = vand.u32 %v1843, 4294901760
  %2867 = vmatpush1.msra.mxu0 %v2866
  %2868 = vmatprep.subr.mxu0 0.0
  %v2869 = vand.u32 %v1844, 4294901760
  %2870 = vmatpush1.msra.mxu0 %v2869
  %2871 = vmatprep.subr.mxu0 0.0
  %v2872 = vand.u32 %v1845, 4294901760
  %2873 = vmatpush1.msra.mxu0 %v2872
  %2874 = vmatprep.subr.mxu0 0.0
  %v2875 = vand.u32 %v1846, 4294901760
  %2876 = vmatpush1.msra.mxu0 %v2875
  %2877 = vmatprep.subr.mxu0 0.0
  %v2878 = vand.u32 %v1763, 4294901760
  %2879 = vmatpush1.msra.mxu0 %v2878
  %2880 = vmatprep.subr.mxu0 0.0
  %v2881 = vand.u32 %v1764, 4294901760
  %2882 = vmatpush1.msra.mxu0 %v2881
  %2883 = vmatprep.subr.mxu0 0.0
  %v2884 = vand.u32 %v1765, 4294901760
  %2885 = vmatpush1.msra.mxu0 %v2884
  %2886 = vmatprep.subr.mxu0 0.0
  %v2887 = vand.u32 %v1766, 4294901760
  %2888 = vmatpush1.msra.mxu0 %v2887
  %2889 = vmatprep.subr.mxu0 0.0
  %v2890 = vand.u32 %v1859, 4294901760
  %2891 = vmatpush1.msra.mxu0 %v2890
  %2892 = vmatprep.subr.mxu0 0.0
  %v2893 = vand.u32 %v1860, 4294901760
  %2894 = vmatpush1.msra.mxu0 %v2893
  %2895 = vmatprep.subr.mxu0 0.0
  %v2896 = vand.u32 %v1861, 4294901760
  %2897 = vmatpush1.msra.mxu0 %v2896
  %2898 = vmatprep.subr.mxu0 0.0
  %v2899 = vand.u32 %v1862, 4294901760
  %2900 = vmatpush1.msra.mxu0 %v2899
  %2901 = vmatprep.subr.mxu0 0.0
  %v2902 = vand.u32 %v1875, 4294901760
  %2903 = vmatpush1.msra.mxu0 %v2902
  %2904 = vmatprep.subr.mxu0 0.0
  %v2905 = vand.u32 %v1876, 4294901760
  %2906 = vmatpush1.msra.mxu0 %v2905
  %2907 = vmatprep.subr.mxu0 0.0
  %v2908 = vand.u32 %v1877, 4294901760
  %2909 = vmatpush1.msra.mxu0 %v2908
  %2910 = vmatprep.subr.mxu0 0.0
  %v2911 = vand.u32 %v1878, 4294901760
  %2912 = vmatpush1.msra.mxu0 %v2911
  %2913 = vmatprep.subr.mxu0 0.0
  %v2914 = vand.u32 %v1891, 4294901760
  %2915 = vmatpush1.msra.mxu0 %v2914
  %2916 = vmatprep.subr.mxu0 0.0
  %v2917 = vand.u32 %v1892, 4294901760
  %2918 = vmatpush1.msra.mxu0 %v2917
  %2919 = vmatprep.subr.mxu0 0.0
  %v2920 = vand.u32 %v1893, 4294901760
  %2921 = vmatpush1.msra.mxu0 %v2920
  %2922 = vmatprep.subr.mxu0 0.0
  %v2923 = vand.u32 %v1894, 4294901760
  %2924 = vmatpush1.msra.mxu0 %v2923
  %v2925 = vand.u32 %v1768, 4294901760
  %2926 = vmatprep.mubr.f32.mxu0 %v2925
  %v2927 = vand.u32 %v1767, 4294901760
  %2928 = vmatmul.mubr.f32.gmra.mrb[0].mxu0 %v2927
  %v2929 = vpop.f32.mrb[0].mxu0
  %v2930 = vadd.f32 %v2805, %v2929
  %v2931 = vpop.f32.mrb[0].mxu0
  %v2932 = vand.u32 %v1771, 4294901760
  %2933 = vmatprep.mubr.f32.mxu0 %v2932
  %v2934 = vand.u32 %v1770, 4294901760
  %2935 = vmatmul.mubr.f32.gmra.mrb[0].mxu0 %v2934
  %v2936 = vpop.f32.mrb[0].mxu0
  %v2937 = vadd.f32 %v2812, %v2936
  %v2938 = vpop.f32.mrb[0].mxu0
  %v2939 = vand.u32 %v1774, 4294901760
  %2940 = vmatprep.mubr.f32.mxu0 %v2939
  %v2941 = vand.u32 %v1773, 4294901760
  %2942 = vmatmul.mubr.f32.gmra.mrb[0].mxu0 %v2941
  %v2943 = vpop.f32.mrb[0].mxu0
  %v2944 = vadd.f32 %v2819, %v2943
  %v2945 = vpop.f32.mrb[0].mxu0
  %v2946 = vand.u32 %v1777, 4294901760
  %2947 = vmatprep.mubr.f32.mxu0 %v2946
  %v2948 = vand.u32 %v1776, 4294901760
  %2949 = vmatmul.mubr.f32.gmra.mrb[0].mxu0 %v2948
  %v2950 = vpop.f32.mrb[0].mxu0
  %v2951 = vadd.f32 %v2826, %v2950
  %v2952 = vpop.f32.mrb[0].mxu0
  %2953 = vdwg.mxu0
  %2954 = vmatprep.subr.mxu0 0.0
  %v2955 = vand.u32 %v1907, 4294901760
  %2956 = vmatpush1.msra.mxu0 %v2955
  %2957 = vmatprep.subr.mxu0 0.0
  %v2958 = vand.u32 %v1908, 4294901760
  %2959 = vmatpush1.msra.mxu0 %v2958
  %2960 = vmatprep.subr.mxu0 0.0
  %v2961 = vand.u32 %v1909, 4294901760
  %2962 = vmatpush1.msra.mxu0 %v2961
  %2963 = vmatprep.subr.mxu0 0.0
  %v2964 = vand.u32 %v1910, 4294901760
  %2965 = vmatpush1.msra.mxu0 %v2964
  %2966 = vmatprep.subr.mxu0 0.0
  %2967 = vmatpush1.msra.mxu0 0.0
  %2968 = vmatprep.subr.mxu0 0.0
  %2969 = vmatpush1.msra.mxu0 0.0
  %2970 = vmatprep.subr.mxu0 0.0
  %2971 = vmatpush1.msra.mxu0 0.0
  %2972 = vmatprep.subr.mxu0 0.0
  %2973 = vmatpush1.msra.mxu0 0.0
  %2974 = vmatprep.subr.mxu0 0.0
  %2975 = vmatpush1.msra.mxu0 0.0
  %2976 = vmatprep.subr.mxu0 0.0
  %2977 = vmatpush1.msra.mxu0 0.0
  %2978 = vmatprep.subr.mxu0 0.0
  %2979 = vmatpush1.msra.mxu0 0.0
  %2980 = vmatprep.subr.mxu0 0.0
  %2981 = vmatpush1.msra.mxu0 0.0
  %2982 = vmatprep.subr.mxu0 0.0
  %2983 = vmatpush1.msra.mxu0 0.0
  %2984 = vmatprep.subr.mxu0 0.0
  %2985 = vmatpush1.msra.mxu0 0.0
  %2986 = vmatprep.subr.mxu0 0.0
  %2987 = vmatpush1.msra.mxu0 0.0
  %2988 = vmatprep.subr.mxu0 0.0
  %2989 = vmatpush1.msra.mxu0 0.0
  %2990 = vmatprep.subr.mxu0 0.0
  %2991 = vmatpush1.msra.mxu0 0.0
  %2992 = vmatprep.subr.mxu0 0.0
  %2993 = vmatpush1.msra.mxu0 0.0
  %2994 = vmatprep.subr.mxu0 0.0
  %2995 = vmatpush1.msra.mxu0 0.0
  %2996 = vmatprep.subr.mxu0 0.0
  %2997 = vmatpush1.msra.mxu0 0.0
  %2998 = vmatprep.subr.mxu0 0.0
  %2999 = vmatpush1.msra.mxu0 0.0
  %3000 = vmatprep.subr.mxu0 0.0
  %3001 = vmatpush1.msra.mxu0 0.0
  %3002 = vmatprep.subr.mxu0 0.0
  %3003 = vmatpush1.msra.mxu0 0.0
  %3004 = vmatprep.subr.mxu0 0.0
  %3005 = vmatpush1.msra.mxu0 0.0
  %3006 = vmatprep.subr.mxu0 0.0
  %3007 = vmatpush1.msra.mxu0 0.0
  %3008 = vmatprep.subr.mxu0 0.0
  %3009 = vmatpush1.msra.mxu0 0.0
  %3010 = vmatprep.subr.mxu0 0.0
  %3011 = vmatpush1.msra.mxu0 0.0
  %3012 = vmatprep.subr.mxu0 0.0
  %3013 = vmatpush1.msra.mxu0 0.0
  %3014 = vmatprep.subr.mxu0 0.0
  %3015 = vmatpush1.msra.mxu0 0.0
  %3016 = vmatprep.subr.mxu0 0.0
  %3017 = vmatpush1.msra.mxu0 0.0
  %3018 = vmatprep.subr.mxu0 0.0
  %3019 = vmatpush1.msra.mxu0 0.0
  %3020 = vmatprep.subr.mxu0 0.0
  %3021 = vmatpush1.msra.mxu0 0.0
  %3022 = vmatprep.mubr.f32.mxu0 0.0
  %v3023 = vand.u32 %v1913, 4294901760
  %v3024 = vsub.f32 %v1913, %v3023
  %v3025 = vand.u32 %v3024, 4294901760
  %v3026 = vsub.f32 %v3024, %v3025
  %v3027 = vand.u32 %v3026, 4294901760
  %3028 = vmatmul.mubr.f32.gmra.mrb[0].mxu0 %v3027
  %v3029 = vpop.f32.mrb[0].mxu0
  %v3030 = vadd.f32 %v2930, %v3029
  %v3031 = vpop.f32.mrb[0].mxu0
  %3032 = vmatprep.mubr.f32.mxu0 0.0
  %v3033 = vand.u32 %v1916, 4294901760
  %v3034 = vsub.f32 %v1916, %v3033
  %v3035 = vand.u32 %v3034, 4294901760
  %v3036 = vsub.f32 %v3034, %v3035
  %v3037 = vand.u32 %v3036, 4294901760
  %3038 = vmatmul.mubr.f32.gmra.mrb[0].mxu0 %v3037
  %v3039 = vpop.f32.mrb[0].mxu0
  %v3040 = vadd.f32 %v2937, %v3039
  %v3041 = vpop.f32.mrb[0].mxu0
  %3042 = vmatprep.mubr.f32.mxu0 0.0
  %v3043 = vand.u32 %v1919, 4294901760
  %v3044 = vsub.f32 %v1919, %v3043
  %v3045 = vand.u32 %v3044, 4294901760
  %v3046 = vsub.f32 %v3044, %v3045
  %v3047 = vand.u32 %v3046, 4294901760
  %3048 = vmatmul.mubr.f32.gmra.mrb[0].mxu0 %v3047
  %v3049 = vpop.f32.mrb[0].mxu0
  %v3050 = vadd.f32 %v2944, %v3049
  %v3051 = vpop.f32.mrb[0].mxu0
  %3052 = vmatprep.mubr.f32.mxu0 0.0
  %v3053 = vand.u32 %v1922, 4294901760
  %v3054 = vsub.f32 %v1922, %v3053
  %v3055 = vand.u32 %v3054, 4294901760
  %v3056 = vsub.f32 %v3054, %v3055
  %v3057 = vand.u32 %v3056, 4294901760
  %3058 = vmatmul.mubr.f32.gmra.mrb[0].mxu0 %v3057
  %v3059 = vpop.f32.mrb[0].mxu0
  %v3060 = vadd.f32 %v2951, %v3059
  %v3061 = vpop.f32.mrb[0].mxu0
  %3062 = vdwg.mxu0
  %3063 = vmatprep.subr.mxu0 0.0
  %v3064 = vand.u32 %v1907, 4294901760
  %v3065 = vsub.f32 %v1907, %v3064
  %v3066 = vand.u32 %v3065, 4294901760
  %v3067 = vsub.f32 %v3065, %v3066
  %v3068 = vand.u32 %v3067, 4294901760
  %3069 = vmatpush1.msra.mxu0 %v3068
  %3070 = vmatprep.subr.mxu0 0.0
  %v3071 = vand.u32 %v1908, 4294901760
  %v3072 = vsub.f32 %v1908, %v3071
  %v3073 = vand.u32 %v3072, 4294901760
  %v3074 = vsub.f32 %v3072, %v3073
  %v3075 = vand.u32 %v3074, 4294901760
  %3076 = vmatpush1.msra.mxu0 %v3075
  %3077 = vmatprep.subr.mxu0 0.0
  %v3078 = vand.u32 %v1909, 4294901760
  %v3079 = vsub.f32 %v1909, %v3078
  %v3080 = vand.u32 %v3079, 4294901760
  %v3081 = vsub.f32 %v3079, %v3080
  %v3082 = vand.u32 %v3081, 4294901760
  %3083 = vmatpush1.msra.mxu0 %v3082
  %3084 = vmatprep.subr.mxu0 0.0
  %v3085 = vand.u32 %v1910, 4294901760
  %v3086 = vsub.f32 %v1910, %v3085
  %v3087 = vand.u32 %v3086, 4294901760
  %v3088 = vsub.f32 %v3086, %v3087
  %v3089 = vand.u32 %v3088, 4294901760
  %3090 = vmatpush1.msra.mxu0 %v3089
  %3091 = vmatprep.subr.mxu0 0.0
  %3092 = vmatpush1.msra.mxu0 0.0
  %3093 = vmatprep.subr.mxu0 0.0
  %3094 = vmatpush1.msra.mxu0 0.0
  %3095 = vmatprep.subr.mxu0 0.0
  %3096 = vmatpush1.msra.mxu0 0.0
  %3097 = vmatprep.subr.mxu0 0.0
  %3098 = vmatpush1.msra.mxu0 0.0
  %3099 = vmatprep.subr.mxu0 0.0
  %3100 = vmatpush1.msra.mxu0 0.0
  %3101 = vmatprep.subr.mxu0 0.0
  %3102 = vmatpush1.msra.mxu0 0.0
  %3103 = vmatprep.subr.mxu0 0.0
  %3104 = vmatpush1.msra.mxu0 0.0
  %3105 = vmatprep.subr.mxu0 0.0
  %3106 = vmatpush1.msra.mxu0 0.0
  %3107 = vmatprep.subr.mxu0 0.0
  %3108 = vmatpush1.msra.mxu0 0.0
  %3109 = vmatprep.subr.mxu0 0.0
  %3110 = vmatpush1.msra.mxu0 0.0
  %3111 = vmatprep.subr.mxu0 0.0
  %3112 = vmatpush1.msra.mxu0 0.0
  %3113 = vmatprep.subr.mxu0 0.0
  %3114 = vmatpush1.msra.mxu0 0.0
  %3115 = vmatprep.subr.mxu0 0.0
  %3116 = vmatpush1.msra.mxu0 0.0
  %3117 = vmatprep.subr.mxu0 0.0
  %3118 = vmatpush1.msra.mxu0 0.0
  %3119 = vmatprep.subr.mxu0 0.0
  %3120 = vmatpush1.msra.mxu0 0.0
  %3121 = vmatprep.subr.mxu0 0.0
  %3122 = vmatpush1.msra.mxu0 0.0
  %3123 = vmatprep.subr.mxu0 0.0
  %3124 = vmatpush1.msra.mxu0 0.0
  %3125 = vmatprep.subr.mxu0 0.0
  %3126 = vmatpush1.msra.mxu0 0.0
  %3127 = vmatprep.subr.mxu0 0.0
  %3128 = vmatpush1.msra.mxu0 0.0
  %3129 = vmatprep.subr.mxu0 0.0
  %3130 = vmatpush1.msra.mxu0 0.0
  %3131 = vmatprep.subr.mxu0 0.0
  %3132 = vmatpush1.msra.mxu0 0.0
  %3133 = vmatprep.subr.mxu0 0.0
  %3134 = vmatpush1.msra.mxu0 0.0
  %3135 = vmatprep.subr.mxu0 0.0
  %3136 = vmatpush1.msra.mxu0 0.0
  %3137 = vmatprep.subr.mxu0 0.0
  %3138 = vmatpush1.msra.mxu0 0.0
  %3139 = vmatprep.subr.mxu0 0.0
  %3140 = vmatpush1.msra.mxu0 0.0
  %3141 = vmatprep.subr.mxu0 0.0
  %3142 = vmatpush1.msra.mxu0 0.0
  %3143 = vmatprep.subr.mxu0 0.0
  %3144 = vmatpush1.msra.mxu0 0.0
  %3145 = vmatprep.subr.mxu0 0.0
  %3146 = vmatpush1.msra.mxu0 0.0
  %3147 = vmatprep.mubr.f32.mxu0 0.0
  %v3148 = vand.u32 %v1913, 4294901760
  %3149 = vmatmul.mubr.f32.gmra.mrb[0].mxu0 %v3148
  %v3150 = vpop.f32.mrb[0].mxu0
  %v3151 = vadd.f32 %v3030, %v3150
  %v3152 = vpop.f32.mrb[0].mxu0
  %3153 = vmatprep.mubr.f32.mxu0 0.0
  %v3154 = vand.u32 %v1916, 4294901760
  %3155 = vmatmul.mubr.f32.gmra.mrb[0].mxu0 %v3154
  %v3156 = vpop.f32.mrb[0].mxu0
  %v3157 = vadd.f32 %v3040, %v3156
  %v3158 = vpop.f32.mrb[0].mxu0
  %3159 = vmatprep.mubr.f32.mxu0 0.0
  %v3160 = vand.u32 %v1919, 4294901760
  %3161 = vmatmul.mubr.f32.gmra.mrb[0].mxu0 %v3160
  %v3162 = vpop.f32.mrb[0].mxu0
  %v3163 = vadd.f32 %v3050, %v3162
  %v3164 = vpop.f32.mrb[0].mxu0
  %3165 = vmatprep.mubr.f32.mxu0 0.0
  %v3166 = vand.u32 %v1922, 4294901760
  %3167 = vmatmul.mubr.f32.gmra.mrb[0].mxu0 %v3166
  %v3168 = vpop.f32.mrb[0].mxu0
  %v3169 = vadd.f32 %v3060, %v3168
  %v3170 = vpop.f32.mrb[0].mxu0
  %3171 = vdwg.mxu0
  %3172 = vmatprep.subr.mxu0 0.0
  %v3173 = vand.u32 %v1907, 4294901760
  %v3174 = vsub.f32 %v1907, %v3173
  %3175 = vmatpush1.msra.mxu0 %v3174
  %3176 = vmatprep.subr.mxu0 0.0
  %v3177 = vand.u32 %v1908, 4294901760
  %v3178 = vsub.f32 %v1908, %v3177
  %3179 = vmatpush1.msra.mxu0 %v3178
  %3180 = vmatprep.subr.mxu0 0.0
  %v3181 = vand.u32 %v1909, 4294901760
  %v3182 = vsub.f32 %v1909, %v3181
  %3183 = vmatpush1.msra.mxu0 %v3182
  %3184 = vmatprep.subr.mxu0 0.0
  %v3185 = vand.u32 %v1910, 4294901760
  %v3186 = vsub.f32 %v1910, %v3185
  %3187 = vmatpush1.msra.mxu0 %v3186
  %3188 = vmatprep.subr.mxu0 0.0
  %3189 = vmatpush1.msra.mxu0 0.0
  %3190 = vmatprep.subr.mxu0 0.0
  %3191 = vmatpush1.msra.mxu0 0.0
  %3192 = vmatprep.subr.mxu0 0.0
  %3193 = vmatpush1.msra.mxu0 0.0
  %3194 = vmatprep.subr.mxu0 0.0
  %3195 = vmatpush1.msra.mxu0 0.0
  %3196 = vmatprep.subr.mxu0 0.0
  %3197 = vmatpush1.msra.mxu0 0.0
  %3198 = vmatprep.subr.mxu0 0.0
  %3199 = vmatpush1.msra.mxu0 0.0
  %3200 = vmatprep.subr.mxu0 0.0
  %3201 = vmatpush1.msra.mxu0 0.0
  %3202 = vmatprep.subr.mxu0 0.0
  %3203 = vmatpush1.msra.mxu0 0.0
  %3204 = vmatprep.subr.mxu0 0.0
  %3205 = vmatpush1.msra.mxu0 0.0
  %3206 = vmatprep.subr.mxu0 0.0
  %3207 = vmatpush1.msra.mxu0 0.0
  %3208 = vmatprep.subr.mxu0 0.0
  %3209 = vmatpush1.msra.mxu0 0.0
  %3210 = vmatprep.subr.mxu0 0.0
  %3211 = vmatpush1.msra.mxu0 0.0
  %3212 = vmatprep.subr.mxu0 0.0
  %3213 = vmatpush1.msra.mxu0 0.0
  %3214 = vmatprep.subr.mxu0 0.0
  %3215 = vmatpush1.msra.mxu0 0.0
  %3216 = vmatprep.subr.mxu0 0.0
  %3217 = vmatpush1.msra.mxu0 0.0
  %3218 = vmatprep.subr.mxu0 0.0
  %3219 = vmatpush1.msra.mxu0 0.0
  %3220 = vmatprep.subr.mxu0 0.0
  %3221 = vmatpush1.msra.mxu0 0.0
  %3222 = vmatprep.subr.mxu0 0.0
  %3223 = vmatpush1.msra.mxu0 0.0
  %3224 = vmatprep.subr.mxu0 0.0
  %3225 = vmatpush1.msra.mxu0 0.0
  %3226 = vmatprep.subr.mxu0 0.0
  %3227 = vmatpush1.msra.mxu0 0.0
  %3228 = vmatprep.subr.mxu0 0.0
  %3229 = vmatpush1.msra.mxu0 0.0
  %3230 = vmatprep.subr.mxu0 0.0
  %3231 = vmatpush1.msra.mxu0 0.0
  %3232 = vmatprep.subr.mxu0 0.0
  %3233 = vmatpush1.msra.mxu0 0.0
  %3234 = vmatprep.subr.mxu0 0.0
  %3235 = vmatpush1.msra.mxu0 0.0
  %3236 = vmatprep.subr.mxu0 0.0
  %3237 = vmatpush1.msra.mxu0 0.0
  %3238 = vmatprep.subr.mxu0 0.0
  %3239 = vmatpush1.msra.mxu0 0.0
  %3240 = vmatprep.subr.mxu0 0.0
  %3241 = vmatpush1.msra.mxu0 0.0
  %3242 = vmatprep.subr.mxu0 0.0
  %3243 = vmatpush1.msra.mxu0 0.0
  %3244 = vmatprep.mubr.f32.mxu0 0.0
  %v3245 = vand.u32 %v1913, 4294901760
  %v3246 = vsub.f32 %v1913, %v3245
  %3247 = vmatmul.mubr.f32.gmra.mrb[0].mxu0 %v3246
  %v3248 = vpop.f32.mrb[0].mxu0
  %v3249 = vadd.f32 %v3151, %v3248
  %v3250 = vpop.f32.mrb[0].mxu0
  %3251 = vmatprep.mubr.f32.mxu0 0.0
  %v3252 = vand.u32 %v1916, 4294901760
  %v3253 = vsub.f32 %v1916, %v3252
  %3254 = vmatmul.mubr.f32.gmra.mrb[0].mxu0 %v3253
  %v3255 = vpop.f32.mrb[0].mxu0
  %v3256 = vadd.f32 %v3157, %v3255
  %v3257 = vpop.f32.mrb[0].mxu0
  %3258 = vmatprep.mubr.f32.mxu0 0.0
  %v3259 = vand.u32 %v1919, 4294901760
  %v3260 = vsub.f32 %v1919, %v3259
  %3261 = vmatmul.mubr.f32.gmra.mrb[0].mxu0 %v3260
  %v3262 = vpop.f32.mrb[0].mxu0
  %v3263 = vadd.f32 %v3163, %v3262
  %v3264 = vpop.f32.mrb[0].mxu0
  %3265 = vmatprep.mubr.f32.mxu0 0.0
  %v3266 = vand.u32 %v1922, 4294901760
  %v3267 = vsub.f32 %v1922, %v3266
  %3268 = vmatmul.mubr.f32.gmra.mrb[0].mxu0 %v3267
  %v3269 = vpop.f32.mrb[0].mxu0
  %v3270 = vadd.f32 %v3169, %v3269
  %v3271 = vpop.f32.mrb[0].mxu0
  %3272 = vdwg.mxu0
  %3273 = vmatprep.subr.mxu0 0.0
  %v3274 = vand.u32 %v1907, 4294901760
  %3275 = vmatpush1.msra.mxu0 %v3274
  %3276 = vmatprep.subr.mxu0 0.0
  %v3277 = vand.u32 %v1908, 4294901760
  %3278 = vmatpush1.msra.mxu0 %v3277
  %3279 = vmatprep.subr.mxu0 0.0
  %v3280 = vand.u32 %v1909, 4294901760
  %3281 = vmatpush1.msra.mxu0 %v3280
  %3282 = vmatprep.subr.mxu0 0.0
  %v3283 = vand.u32 %v1910, 4294901760
  %3284 = vmatpush1.msra.mxu0 %v3283
  %3285 = vmatprep.subr.mxu0 0.0
  %3286 = vmatpush1.msra.mxu0 0.0
  %3287 = vmatprep.subr.mxu0 0.0
  %3288 = vmatpush1.msra.mxu0 0.0
  %3289 = vmatprep.subr.mxu0 0.0
  %3290 = vmatpush1.msra.mxu0 0.0
  %3291 = vmatprep.subr.mxu0 0.0
  %3292 = vmatpush1.msra.mxu0 0.0
  %3293 = vmatprep.subr.mxu0 0.0
  %3294 = vmatpush1.msra.mxu0 0.0
  %3295 = vmatprep.subr.mxu0 0.0
  %3296 = vmatpush1.msra.mxu0 0.0
  %3297 = vmatprep.subr.mxu0 0.0
  %3298 = vmatpush1.msra.mxu0 0.0
  %3299 = vmatprep.subr.mxu0 0.0
  %3300 = vmatpush1.msra.mxu0 0.0
  %3301 = vmatprep.subr.mxu0 0.0
  %3302 = vmatpush1.msra.mxu0 0.0
  %3303 = vmatprep.subr.mxu0 0.0
  %3304 = vmatpush1.msra.mxu0 0.0
  %3305 = vmatprep.subr.mxu0 0.0
  %3306 = vmatpush1.msra.mxu0 0.0
  %3307 = vmatprep.subr.mxu0 0.0
  %3308 = vmatpush1.msra.mxu0 0.0
  %3309 = vmatprep.subr.mxu0 0.0
  %3310 = vmatpush1.msra.mxu0 0.0
  %3311 = vmatprep.subr.mxu0 0.0
  %3312 = vmatpush1.msra.mxu0 0.0
  %3313 = vmatprep.subr.mxu0 0.0
  %3314 = vmatpush1.msra.mxu0 0.0
  %3315 = vmatprep.subr.mxu0 0.0
  %3316 = vmatpush1.msra.mxu0 0.0
  %3317 = vmatprep.subr.mxu0 0.0
  %3318 = vmatpush1.msra.mxu0 0.0
  %3319 = vmatprep.subr.mxu0 0.0
  %3320 = vmatpush1.msra.mxu0 0.0
  %3321 = vmatprep.subr.mxu0 0.0
  %3322 = vmatpush1.msra.mxu0 0.0
  %3323 = vmatprep.subr.mxu0 0.0
  %3324 = vmatpush1.msra.mxu0 0.0
  %3325 = vmatprep.subr.mxu0 0.0
  %3326 = vmatpush1.msra.mxu0 0.0
  %3327 = vmatprep.subr.mxu0 0.0
  %3328 = vmatpush1.msra.mxu0 0.0
  %3329 = vmatprep.subr.mxu0 0.0
  %3330 = vmatpush1.msra.mxu0 0.0
  %3331 = vmatprep.subr.mxu0 0.0
  %3332 = vmatpush1.msra.mxu0 0.0
  %3333 = vmatprep.subr.mxu0 0.0
  %3334 = vmatpush1.msra.mxu0 0.0
  %3335 = vmatprep.subr.mxu0 0.0
  %3336 = vmatpush1.msra.mxu0 0.0
  %3337 = vmatprep.subr.mxu0 0.0
  %3338 = vmatpush1.msra.mxu0 0.0
  %3339 = vmatprep.subr.mxu0 0.0
  %3340 = vmatpush1.msra.mxu0 0.0
  %3341 = vmatprep.mubr.f32.mxu0 0.0
  %v3342 = vand.u32 %v1913, 4294901760
  %v3343 = vsub.f32 %v1913, %v3342
  %v3344 = vand.u32 %v3343, 4294901760
  %3345 = vmatmul.mubr.f32.gmra.mrb[0].mxu0 %v3344
  %v3346 = vpop.f32.mrb[0].mxu0
  %v3347 = vadd.f32 %v3249, %v3346
  %v3348 = vpop.f32.mrb[0].mxu0
  %3349 = vmatprep.mubr.f32.mxu0 0.0
  %v3350 = vand.u32 %v1916, 4294901760
  %v3351 = vsub.f32 %v1916, %v3350
  %v3352 = vand.u32 %v3351, 4294901760
  %3353 = vmatmul.mubr.f32.gmra.mrb[0].mxu0 %v3352
  %v3354 = vpop.f32.mrb[0].mxu0
  %v3355 = vadd.f32 %v3256, %v3354
  %v3356 = vpop.f32.mrb[0].mxu0
  %3357 = vmatprep.mubr.f32.mxu0 0.0
  %v3358 = vand.u32 %v1919, 4294901760
  %v3359 = vsub.f32 %v1919, %v3358
  %v3360 = vand.u32 %v3359, 4294901760
  %3361 = vmatmul.mubr.f32.gmra.mrb[0].mxu0 %v3360
  %v3362 = vpop.f32.mrb[0].mxu0
  %v3363 = vadd.f32 %v3263, %v3362
  %v3364 = vpop.f32.mrb[0].mxu0
  %3365 = vmatprep.mubr.f32.mxu0 0.0
  %v3366 = vand.u32 %v1922, 4294901760
  %v3367 = vsub.f32 %v1922, %v3366
  %v3368 = vand.u32 %v3367, 4294901760
  %3369 = vmatmul.mubr.f32.gmra.mrb[0].mxu0 %v3368
  %v3370 = vpop.f32.mrb[0].mxu0
  %v3371 = vadd.f32 %v3270, %v3370
  %v3372 = vpop.f32.mrb[0].mxu0
  %3373 = vdwg.mxu0
  %3374 = vmatprep.subr.mxu0 0.0
  %v3375 = vand.u32 %v1907, 4294901760
  %v3376 = vsub.f32 %v1907, %v3375
  %v3377 = vand.u32 %v3376, 4294901760
  %3378 = vmatpush1.msra.mxu0 %v3377
  %3379 = vmatprep.subr.mxu0 0.0
  %v3380 = vand.u32 %v1908, 4294901760
  %v3381 = vsub.f32 %v1908, %v3380
  %v3382 = vand.u32 %v3381, 4294901760
  %3383 = vmatpush1.msra.mxu0 %v3382
  %3384 = vmatprep.subr.mxu0 0.0
  %v3385 = vand.u32 %v1909, 4294901760
  %v3386 = vsub.f32 %v1909, %v3385
  %v3387 = vand.u32 %v3386, 4294901760
  %3388 = vmatpush1.msra.mxu0 %v3387
  %3389 = vmatprep.subr.mxu0 0.0
  %v3390 = vand.u32 %v1910, 4294901760
  %v3391 = vsub.f32 %v1910, %v3390
  %v3392 = vand.u32 %v3391, 4294901760
  %3393 = vmatpush1.msra.mxu0 %v3392
  %3394 = vmatprep.subr.mxu0 0.0
  %3395 = vmatpush1.msra.mxu0 0.0
  %3396 = vmatprep.subr.mxu0 0.0
  %3397 = vmatpush1.msra.mxu0 0.0
  %3398 = vmatprep.subr.mxu0 0.0
  %3399 = vmatpush1.msra.mxu0 0.0
  %3400 = vmatprep.subr.mxu0 0.0
  %3401 = vmatpush1.msra.mxu0 0.0
  %3402 = vmatprep.subr.mxu0 0.0
  %3403 = vmatpush1.msra.mxu0 0.0
  %3404 = vmatprep.subr.mxu0 0.0
  %3405 = vmatpush1.msra.mxu0 0.0
  %3406 = vmatprep.subr.mxu0 0.0
  %3407 = vmatpush1.msra.mxu0 0.0
  %3408 = vmatprep.subr.mxu0 0.0
  %3409 = vmatpush1.msra.mxu0 0.0
  %3410 = vmatprep.subr.mxu0 0.0
  %3411 = vmatpush1.msra.mxu0 0.0
  %3412 = vmatprep.subr.mxu0 0.0
  %3413 = vmatpush1.msra.mxu0 0.0
  %3414 = vmatprep.subr.mxu0 0.0
  %3415 = vmatpush1.msra.mxu0 0.0
  %3416 = vmatprep.subr.mxu0 0.0
  %3417 = vmatpush1.msra.mxu0 0.0
  %3418 = vmatprep.subr.mxu0 0.0
  %3419 = vmatpush1.msra.mxu0 0.0
  %3420 = vmatprep.subr.mxu0 0.0
  %3421 = vmatpush1.msra.mxu0 0.0
  %3422 = vmatprep.subr.mxu0 0.0
  %3423 = vmatpush1.msra.mxu0 0.0
  %3424 = vmatprep.subr.mxu0 0.0
  %3425 = vmatpush1.msra.mxu0 0.0
  %3426 = vmatprep.subr.mxu0 0.0
  %3427 = vmatpush1.msra.mxu0 0.0
  %3428 = vmatprep.subr.mxu0 0.0
  %3429 = vmatpush1.msra.mxu0 0.0
  %3430 = vmatprep.subr.mxu0 0.0
  %3431 = vmatpush1.msra.mxu0 0.0
  %3432 = vmatprep.subr.mxu0 0.0
  %3433 = vmatpush1.msra.mxu0 0.0
  %3434 = vmatprep.subr.mxu0 0.0
  %3435 = vmatpush1.msra.mxu0 0.0
  %3436 = vmatprep.subr.mxu0 0.0
  %3437 = vmatpush1.msra.mxu0 0.0
  %3438 = vmatprep.subr.mxu0 0.0
  %3439 = vmatpush1.msra.mxu0 0.0
  %3440 = vmatprep.subr.mxu0 0.0
  %3441 = vmatpush1.msra.mxu0 0.0
  %3442 = vmatprep.subr.mxu0 0.0
  %3443 = vmatpush1.msra.mxu0 0.0
  %3444 = vmatprep.subr.mxu0 0.0
  %3445 = vmatpush1.msra.mxu0 0.0
  %3446 = vmatprep.subr.mxu0 0.0
  %3447 = vmatpush1.msra.mxu0 0.0
  %3448 = vmatprep.subr.mxu0 0.0
  %3449 = vmatpush1.msra.mxu0 0.0
  %3450 = vmatprep.mubr.f32.mxu0 0.0
  %v3451 = vand.u32 %v1913, 4294901760
  %3452 = vmatmul.mubr.f32.gmra.mrb[0].mxu0 %v3451
  %v3453 = vpop.f32.mrb[0].mxu0
  %v3454 = vadd.f32 %v3347, %v3453
  %v3455 = vpop.f32.mrb[0].mxu0
  %3456 = vmatprep.mubr.f32.mxu0 0.0
  %v3457 = vand.u32 %v1916, 4294901760
  %3458 = vmatmul.mubr.f32.gmra.mrb[0].mxu0 %v3457
  %v3459 = vpop.f32.mrb[0].mxu0
  %v3460 = vadd.f32 %v3355, %v3459
  %v3461 = vpop.f32.mrb[0].mxu0
  %3462 = vmatprep.mubr.f32.mxu0 0.0
  %v3463 = vand.u32 %v1919, 4294901760
  %3464 = vmatmul.mubr.f32.gmra.mrb[0].mxu0 %v3463
  %v3465 = vpop.f32.mrb[0].mxu0
  %v3466 = vadd.f32 %v3363, %v3465
  %v3467 = vpop.f32.mrb[0].mxu0
  %3468 = vmatprep.mubr.f32.mxu0 0.0
  %v3469 = vand.u32 %v1922, 4294901760
  %3470 = vmatmul.mubr.f32.gmra.mrb[0].mxu0 %v3469
  %v3471 = vpop.f32.mrb[0].mxu0
  %v3472 = vadd.f32 %v3371, %v3471
  %v3473 = vpop.f32.mrb[0].mxu0
  %3474 = vdwg.mxu0
  %3475 = vmatprep.subr.mxu0 0.0
  %v3476 = vand.u32 %v1907, 4294901760
  %3477 = vmatpush1.msra.mxu0 %v3476
  %3478 = vmatprep.subr.mxu0 0.0
  %v3479 = vand.u32 %v1908, 4294901760
  %3480 = vmatpush1.msra.mxu0 %v3479
  %3481 = vmatprep.subr.mxu0 0.0
  %v3482 = vand.u32 %v1909, 4294901760
  %3483 = vmatpush1.msra.mxu0 %v3482
  %3484 = vmatprep.subr.mxu0 0.0
  %v3485 = vand.u32 %v1910, 4294901760
  %3486 = vmatpush1.msra.mxu0 %v3485
  %3487 = vmatprep.subr.mxu0 0.0
  %3488 = vmatpush1.msra.mxu0 0.0
  %3489 = vmatprep.subr.mxu0 0.0
  %3490 = vmatpush1.msra.mxu0 0.0
  %3491 = vmatprep.subr.mxu0 0.0
  %3492 = vmatpush1.msra.mxu0 0.0
  %3493 = vmatprep.subr.mxu0 0.0
  %3494 = vmatpush1.msra.mxu0 0.0
  %3495 = vmatprep.subr.mxu0 0.0
  %3496 = vmatpush1.msra.mxu0 0.0
  %3497 = vmatprep.subr.mxu0 0.0
  %3498 = vmatpush1.msra.mxu0 0.0
  %3499 = vmatprep.subr.mxu0 0.0
  %3500 = vmatpush1.msra.mxu0 0.0
  %3501 = vmatprep.subr.mxu0 0.0
  %3502 = vmatpush1.msra.mxu0 0.0
  %3503 = vmatprep.subr.mxu0 0.0
  %3504 = vmatpush1.msra.mxu0 0.0
  %3505 = vmatprep.subr.mxu0 0.0
  %3506 = vmatpush1.msra.mxu0 0.0
  %3507 = vmatprep.subr.mxu0 0.0
  %3508 = vmatpush1.msra.mxu0 0.0
  %3509 = vmatprep.subr.mxu0 0.0
  %3510 = vmatpush1.msra.mxu0 0.0
  %3511 = vmatprep.subr.mxu0 0.0
  %3512 = vmatpush1.msra.mxu0 0.0
  %3513 = vmatprep.subr.mxu0 0.0
  %3514 = vmatpush1.msra.mxu0 0.0
  %3515 = vmatprep.subr.mxu0 0.0
  %3516 = vmatpush1.msra.mxu0 0.0
  %3517 = vmatprep.subr.mxu0 0.0
  %3518 = vmatpush1.msra.mxu0 0.0
  %3519 = vmatprep.subr.mxu0 0.0
  %3520 = vmatpush1.msra.mxu0 0.0
  %3521 = vmatprep.subr.mxu0 0.0
  %3522 = vmatpush1.msra.mxu0 0.0
  %3523 = vmatprep.subr.mxu0 0.0
  %3524 = vmatpush1.msra.mxu0 0.0
  %3525 = vmatprep.subr.mxu0 0.0
  %3526 = vmatpush1.msra.mxu0 0.0
  %3527 = vmatprep.subr.mxu0 0.0
  %3528 = vmatpush1.msra.mxu0 0.0
  %3529 = vmatprep.subr.mxu0 0.0
  %3530 = vmatpush1.msra.mxu0 0.0
  %3531 = vmatprep.subr.mxu0 0.0
  %3532 = vmatpush1.msra.mxu0 0.0
  %3533 = vmatprep.subr.mxu0 0.0
  %3534 = vmatpush1.msra.mxu0 0.0
  %3535 = vmatprep.subr.mxu0 0.0
  %3536 = vmatpush1.msra.mxu0 0.0
  %3537 = vmatprep.subr.mxu0 0.0
  %3538 = vmatpush1.msra.mxu0 0.0
  %3539 = vmatprep.subr.mxu0 0.0
  %3540 = vmatpush1.msra.mxu0 0.0
  %3541 = vmatprep.subr.mxu0 0.0
  %3542 = vmatpush1.msra.mxu0 0.0
  %3543 = vmatprep.mubr.f32.mxu0 0.0
  %v3544 = vand.u32 %v1913, 4294901760
  %3545 = vmatmul.mubr.f32.gmra.mrb[0].mxu0 %v3544
  %v3546 = vpop.f32.mrb[0].mxu0
  %v3547 = vadd.f32 %v3454, %v3546
  %v3548 = vpop.f32.mrb[0].mxu0
  %3549 = vmatprep.mubr.f32.mxu0 0.0
  %v3550 = vand.u32 %v1916, 4294901760
  %3551 = vmatmul.mubr.f32.gmra.mrb[0].mxu0 %v3550
  %v3552 = vpop.f32.mrb[0].mxu0
  %v3553 = vadd.f32 %v3460, %v3552
  %v3554 = vpop.f32.mrb[0].mxu0
  %3555 = vmatprep.mubr.f32.mxu0 0.0
  %v3556 = vand.u32 %v1919, 4294901760
  %3557 = vmatmul.mubr.f32.gmra.mrb[0].mxu0 %v3556
  %v3558 = vpop.f32.mrb[0].mxu0
  %v3559 = vadd.f32 %v3466, %v3558
  %v3560 = vpop.f32.mrb[0].mxu0
  %3561 = vmatprep.mubr.f32.mxu0 0.0
  %v3562 = vand.u32 %v1922, 4294901760
  %3563 = vmatmul.mubr.f32.gmra.mrb[0].mxu0 %v3562
  %v3564 = vpop.f32.mrb[0].mxu0
  %v3565 = vadd.f32 %v3472, %v3564
  %v3566 = vpop.f32.mrb[0].mxu0
  %3567 = vdwg.mxu0
  %3568 = vadd.xlane.f32.xlu0 %v3547
  %v3569 = vpop.xlane.xlu0 %3568
  %3570 = vadd.xlane.f32.xlu0 %v3553
  %v3571 = vpop.xlane.xlu0 %3570
  %3572 = vadd.xlane.f32.xlu0 %v3559
  %v3573 = vpop.xlane.xlu0 %3572
  %3574 = vadd.xlane.f32.xlu0 %v3565
  %v3575 = vpop.xlane.xlu0 %3574
  %v3576 = vmul.f32 %v3569, 0.0078125
  %v3577 = vmul.f32 %v3571, 0.0078125
  %v3578 = vmul.f32 %v3573, 0.0078125
  %v3579 = vmul.f32 %v3575, 0.0078125
  %v3580 = vsub.f32 %v3547, %v3576
  %v3581 = vsub.f32 %v3553, %v3577
  %v3582 = vsub.f32 %v3559, %v3578
  %v3583 = vsub.f32 %v3565, %v3579
  %v3584 = vmul.f32 %v3580, %v3580
  %v3585 = vmul.f32 %v3581, %v3581
  %v3586 = vmul.f32 %v3582, %v3582
  %v3587 = vmul.f32 %v3583, %v3583
  %3588 = vadd.xlane.f32.xlu0 %v3584
  %v3589 = vpop.xlane.xlu0 %3588
  %3590 = vadd.xlane.f32.xlu0 %v3585
  %v3591 = vpop.xlane.xlu0 %3590
  %3592 = vadd.xlane.f32.xlu0 %v3586
  %v3593 = vpop.xlane.xlu0 %3592
  %3594 = vadd.xlane.f32.xlu0 %v3587
  %v3595 = vpop.xlane.xlu0 %3594
  %v3596 = vmul.f32 %v3589, 0.0078125
  %v3597 = vmul.f32 %v3591, 0.0078125
  %v3598 = vmul.f32 %v3593, 0.0078125
  %v3599 = vmul.f32 %v3595, 0.0078125
  %v3600 = vadd.f32 %v3596, 1e-05
  %v3601 = vadd.f32 %v3597, 1e-05
  %v3602 = vadd.f32 %v3598, 1e-05
  %v3603 = vadd.f32 %v3599, 1e-05
  %v3604 = vrsqrt.pop %v3600
  %v3605 = vrsqrt.pop %v3601
  %v3606 = vrsqrt.pop %v3602
  %v3607 = vrsqrt.pop %v3603
  %v3608 = vmul.f32 %v39, %v3604
  %v3609 = vmul.f32 %v40, %v3605
  %v3610 = vmul.f32 %v41, %v3606
  %v3611 = vmul.f32 %v42, %v3607
  %3613 = vset.pattern.permute.xlu0 4
  %3614 = vperm.xlu0 %3613, %v3608
  %v3615 = vpop.permute.xlu0 %3614
  %3618 = vset.pattern.permute.xlu0 4
  %3619 = vperm.xlu0 %3618, %v3609
  %v3620 = vpop.permute.xlu0 %3619
  %3623 = vset.pattern.permute.xlu0 4
  %3624 = vperm.xlu0 %3623, %v3610
  %v3625 = vpop.permute.xlu0 %3624
  %3628 = vset.pattern.permute.xlu0 4
  %3629 = vperm.xlu0 %3628, %v3611
  %v3630 = vpop.permute.xlu0 %3629
  %v3632 = vmul.f32 %v3580, %v3615
  %v3633 = vmul.f32 %v3581, %v3620
  %v3634 = vmul.f32 %v3582, %v3625
  %v3635 = vmul.f32 %v3583, %v3630
  %3636 = vset.pattern.permute.xlu0 5
  %3637 = vperm.xlu0 %3636, %v39
  %v3638 = vpop.permute.xlu0 %3637
  %3640 = vset.pattern.permute.xlu0 5
  %3641 = vperm.xlu0 %3640, %v40
  %v3642 = vpop.permute.xlu0 %3641
  %3644 = vset.pattern.permute.xlu0 5
  %3645 = vperm.xlu0 %3644, %v41
  %v3646 = vpop.permute.xlu0 %3645
  %3648 = vset.pattern.permute.xlu0 5
  %3649 = vperm.xlu0 %3648, %v42
  %v3650 = vpop.permute.xlu0 %3649
  %v3652 = vadd.f32 %v3632, %v3638
  %v3653 = vadd.f32 %v3633, %v3642
  %v3654 = vadd.f32 %v3634, %v3646
  %v3655 = vadd.f32 %v3635, %v3650
  %v3656 = vmax.f32 %v3652, 0.0
  %v3657 = vmax.f32 %v3653, 0.0
  %v3658 = vmax.f32 %v3654, 0.0
  %v3659 = vmax.f32 %v3655, 0.0
  %v3660 = vld [vmem:[%s5] sm:$0xff]
  %v3661 = vld [vmem:[%s5 + $0x8] sm:$0xff]
  %v3662 = vld [vmem:[%s5 + $0x10] sm:$0xff]
  %v3663 = vld [vmem:[%s5 + $0x18] sm:$0xff]
  %3668 = vrot.lane.b32.xlu0 %v3656, 9
  %v3669 = vpop.permute.xlu0 %3668
  %3670 = vrot.lane.b32.xlu0 %v3657, 9
  %v3671 = vpop.permute.xlu0 %3670
  %3672 = vrot.lane.b32.xlu0 %v3658, 9
  %v3673 = vpop.permute.xlu0 %3672
  %3674 = vrot.lane.b32.xlu0 %v3659, 9
  %v3675 = vpop.permute.xlu0 %3674
  %v3680 = vsel %vm54, %v3669, 0.0
  %v3681 = vsel %vm54, %v3671, 0.0
  %v3682 = vsel %vm54, %v3673, 0.0
  %v3683 = vsel %vm54, %v3675, 0.0
  %3685 = vset.pattern.permute.xlu0 0
  %3686 = vperm.xlu0 %3685, %v3660
  %v3687 = vpop.permute.xlu0 %3686
  %3690 = vset.pattern.permute.xlu0 0
  %3691 = vperm.xlu0 %3690, %v3661
  %v3692 = vpop.permute.xlu0 %3691
  %3695 = vset.pattern.permute.xlu0 0
  %3696 = vperm.xlu0 %3695, %v3662
  %v3697 = vpop.permute.xlu0 %3696
  %3700 = vset.pattern.permute.xlu0 0
  %3701 = vperm.xlu0 %3700, %v3663
  %v3702 = vpop.permute.xlu0 %3701
  %v3704 = vmul.f32 %v3680, %v3687
  %v3705 = vmul.f32 %v3681, %v3692
  %v3706 = vmul.f32 %v3682, %v3697
  %v3707 = vmul.f32 %v3683, %v3702
  %3708 = vrot.lane.b32.xlu0 %v3656, 8
  %v3709 = vpop.permute.xlu0 %3708
  %3710 = vrot.lane.b32.xlu0 %v3657, 8
  %v3711 = vpop.permute.xlu0 %3710
  %3712 = vrot.lane.b32.xlu0 %v3658, 8
  %v3713 = vpop.permute.xlu0 %3712
  %3714 = vrot.lane.b32.xlu0 %v3659, 8
  %v3715 = vpop.permute.xlu0 %3714
  %v3720 = vsel %vm68, %v3709, 0.0
  %v3721 = vsel %vm68, %v3711, 0.0
  %v3722 = vsel %vm68, %v3713, 0.0
  %v3723 = vsel %vm68, %v3715, 0.0
  %3724 = vset.pattern.permute.xlu0 1
  %3725 = vperm.xlu0 %3724, %v3660
  %v3726 = vpop.permute.xlu0 %3725
  %3728 = vset.pattern.permute.xlu0 1
  %3729 = vperm.xlu0 %3728, %v3661
  %v3730 = vpop.permute.xlu0 %3729
  %3732 = vset.pattern.permute.xlu0 1
  %3733 = vperm.xlu0 %3732, %v3662
  %v3734 = vpop.permute.xlu0 %3733
  %3736 = vset.pattern.permute.xlu0 1
  %3737 = vperm.xlu0 %3736, %v3663
  %v3738 = vpop.permute.xlu0 %3737
  %v3740 = vmul.f32 %v3720, %v3726
  %v3741 = vmul.f32 %v3721, %v3730
  %v3742 = vmul.f32 %v3722, %v3734
  %v3743 = vmul.f32 %v3723, %v3738
  %v3744 = vadd.f32 %v3704, %v3740
  %v3745 = vadd.f32 %v3705, %v3741
  %v3746 = vadd.f32 %v3706, %v3742
  %v3747 = vadd.f32 %v3707, %v3743
  %3748 = vrot.lane.b32.xlu0 %v3656, 7
  %v3749 = vpop.permute.xlu0 %3748
  %3750 = vrot.lane.b32.xlu0 %v3657, 7
  %v3751 = vpop.permute.xlu0 %3750
  %3752 = vrot.lane.b32.xlu0 %v3658, 7
  %v3753 = vpop.permute.xlu0 %3752
  %3754 = vrot.lane.b32.xlu0 %v3659, 7
  %v3755 = vpop.permute.xlu0 %3754
  %v3760 = vsel %vm745, %v3749, 0.0
  %v3761 = vsel %vm745, %v3751, 0.0
  %v3762 = vsel %vm745, %v3753, 0.0
  %v3763 = vsel %vm745, %v3755, 0.0
  %3764 = vset.pattern.permute.xlu0 2
  %3765 = vperm.xlu0 %3764, %v3660
  %v3766 = vpop.permute.xlu0 %3765
  %3768 = vset.pattern.permute.xlu0 2
  %3769 = vperm.xlu0 %3768, %v3661
  %v3770 = vpop.permute.xlu0 %3769
  %3772 = vset.pattern.permute.xlu0 2
  %3773 = vperm.xlu0 %3772, %v3662
  %v3774 = vpop.permute.xlu0 %3773
  %3776 = vset.pattern.permute.xlu0 2
  %3777 = vperm.xlu0 %3776, %v3663
  %v3778 = vpop.permute.xlu0 %3777
  %v3780 = vmul.f32 %v3760, %v3766
  %v3781 = vmul.f32 %v3761, %v3770
  %v3782 = vmul.f32 %v3762, %v3774
  %v3783 = vmul.f32 %v3763, %v3778
  %v3784 = vadd.f32 %v3744, %v3780
  %v3785 = vadd.f32 %v3745, %v3781
  %v3786 = vadd.f32 %v3746, %v3782
  %v3787 = vadd.f32 %v3747, %v3783
  %3788 = vrot.lane.b32.xlu0 %v3656, 1
  %v3789 = vpop.permute.xlu0 %3788
  %3790 = vrot.lane.b32.xlu0 %v3657, 1
  %v3791 = vpop.permute.xlu0 %3790
  %3792 = vrot.lane.b32.xlu0 %v3658, 1
  %v3793 = vpop.permute.xlu0 %3792
  %3794 = vrot.lane.b32.xlu0 %v3659, 1
  %v3795 = vpop.permute.xlu0 %3794
  %v3800 = vsel %vm79, %v3789, 0.0
  %v3801 = vsel %vm79, %v3791, 0.0
  %v3802 = vsel %vm79, %v3793, 0.0
  %v3803 = vsel %vm79, %v3795, 0.0
  %3804 = vset.pattern.permute.xlu0 3
  %3805 = vperm.xlu0 %3804, %v3660
  %v3806 = vpop.permute.xlu0 %3805
  %3808 = vset.pattern.permute.xlu0 3
  %3809 = vperm.xlu0 %3808, %v3661
  %v3810 = vpop.permute.xlu0 %3809
  %3812 = vset.pattern.permute.xlu0 3
  %3813 = vperm.xlu0 %3812, %v3662
  %v3814 = vpop.permute.xlu0 %3813
  %3816 = vset.pattern.permute.xlu0 3
  %3817 = vperm.xlu0 %3816, %v3663
  %v3818 = vpop.permute.xlu0 %3817
  %v3820 = vmul.f32 %v3800, %v3806
  %v3821 = vmul.f32 %v3801, %v3810
  %v3822 = vmul.f32 %v3802, %v3814
  %v3823 = vmul.f32 %v3803, %v3818
  %v3824 = vadd.f32 %v3784, %v3820
  %v3825 = vadd.f32 %v3785, %v3821
  %v3826 = vadd.f32 %v3786, %v3822
  %v3827 = vadd.f32 %v3787, %v3823
  %3828 = vset.pattern.permute.xlu0 4
  %3829 = vperm.xlu0 %3828, %v3660
  %v3830 = vpop.permute.xlu0 %3829
  %3832 = vset.pattern.permute.xlu0 4
  %3833 = vperm.xlu0 %3832, %v3661
  %v3834 = vpop.permute.xlu0 %3833
  %3836 = vset.pattern.permute.xlu0 4
  %3837 = vperm.xlu0 %3836, %v3662
  %v3838 = vpop.permute.xlu0 %3837
  %3840 = vset.pattern.permute.xlu0 4
  %3841 = vperm.xlu0 %3840, %v3663
  %v3842 = vpop.permute.xlu0 %3841
  %v3844 = vmul.f32 %v3656, %v3830
  %v3845 = vmul.f32 %v3657, %v3834
  %v3846 = vmul.f32 %v3658, %v3838
  %v3847 = vmul.f32 %v3659, %v3842
  %v3848 = vadd.f32 %v3824, %v3844
  %v3849 = vadd.f32 %v3825, %v3845
  %v3850 = vadd.f32 %v3826, %v3846
  %v3851 = vadd.f32 %v3827, %v3847
  %3852 = vrot.lane.b32.xlu0 %v3656, 127
  %v3853 = vpop.permute.xlu0 %3852
  %3854 = vrot.lane.b32.xlu0 %v3657, 127
  %v3855 = vpop.permute.xlu0 %3854
  %3856 = vrot.lane.b32.xlu0 %v3658, 127
  %v3857 = vpop.permute.xlu0 %3856
  %3858 = vrot.lane.b32.xlu0 %v3659, 127
  %v3859 = vpop.permute.xlu0 %3858
  %v3864 = vsel %vm767, %v3853, 0.0
  %v3865 = vsel %vm767, %v3855, 0.0
  %v3866 = vsel %vm767, %v3857, 0.0
  %v3867 = vsel %vm767, %v3859, 0.0
  %3868 = vset.pattern.permute.xlu0 5
  %3869 = vperm.xlu0 %3868, %v3660
  %v3870 = vpop.permute.xlu0 %3869
  %3872 = vset.pattern.permute.xlu0 5
  %3873 = vperm.xlu0 %3872, %v3661
  %v3874 = vpop.permute.xlu0 %3873
  %3876 = vset.pattern.permute.xlu0 5
  %3877 = vperm.xlu0 %3876, %v3662
  %v3878 = vpop.permute.xlu0 %3877
  %3880 = vset.pattern.permute.xlu0 5
  %3881 = vperm.xlu0 %3880, %v3663
  %v3882 = vpop.permute.xlu0 %3881
  %v3884 = vmul.f32 %v3864, %v3870
  %v3885 = vmul.f32 %v3865, %v3874
  %v3886 = vmul.f32 %v3866, %v3878
  %v3887 = vmul.f32 %v3867, %v3882
  %v3888 = vadd.f32 %v3848, %v3884
  %v3889 = vadd.f32 %v3849, %v3885
  %v3890 = vadd.f32 %v3850, %v3886
  %v3891 = vadd.f32 %v3851, %v3887
  %3892 = vrot.lane.b32.xlu0 %v3656, 121
  %v3893 = vpop.permute.xlu0 %3892
  %3894 = vrot.lane.b32.xlu0 %v3657, 121
  %v3895 = vpop.permute.xlu0 %3894
  %3896 = vrot.lane.b32.xlu0 %v3658, 121
  %v3897 = vpop.permute.xlu0 %3896
  %3898 = vrot.lane.b32.xlu0 %v3659, 121
  %v3899 = vpop.permute.xlu0 %3898
  %v3904 = vsel %vm781, %v3893, 0.0
  %v3905 = vsel %vm781, %v3895, 0.0
  %v3906 = vsel %vm781, %v3897, 0.0
  %v3907 = vsel %vm781, %v3899, 0.0
  %3908 = vset.pattern.permute.xlu0 6
  %3909 = vperm.xlu0 %3908, %v3660
  %v3910 = vpop.permute.xlu0 %3909
  %3912 = vset.pattern.permute.xlu0 6
  %3913 = vperm.xlu0 %3912, %v3661
  %v3914 = vpop.permute.xlu0 %3913
  %3916 = vset.pattern.permute.xlu0 6
  %3917 = vperm.xlu0 %3916, %v3662
  %v3918 = vpop.permute.xlu0 %3917
  %3920 = vset.pattern.permute.xlu0 6
  %3921 = vperm.xlu0 %3920, %v3663
  %v3922 = vpop.permute.xlu0 %3921
  %v3924 = vmul.f32 %v3904, %v3910
  %v3925 = vmul.f32 %v3905, %v3914
  %v3926 = vmul.f32 %v3906, %v3918
  %v3927 = vmul.f32 %v3907, %v3922
  %v3928 = vadd.f32 %v3888, %v3924
  %v3929 = vadd.f32 %v3889, %v3925
  %v3930 = vadd.f32 %v3890, %v3926
  %v3931 = vadd.f32 %v3891, %v3927
  %3932 = vrot.lane.b32.xlu0 %v3656, 120
  %v3933 = vpop.permute.xlu0 %3932
  %3934 = vrot.lane.b32.xlu0 %v3657, 120
  %v3935 = vpop.permute.xlu0 %3934
  %3936 = vrot.lane.b32.xlu0 %v3658, 120
  %v3937 = vpop.permute.xlu0 %3936
  %3938 = vrot.lane.b32.xlu0 %v3659, 120
  %v3939 = vpop.permute.xlu0 %3938
  %v3944 = vsel %vm795, %v3933, 0.0
  %v3945 = vsel %vm795, %v3935, 0.0
  %v3946 = vsel %vm795, %v3937, 0.0
  %v3947 = vsel %vm795, %v3939, 0.0
  %3948 = vset.pattern.permute.xlu0 7
  %3949 = vperm.xlu0 %3948, %v3660
  %v3950 = vpop.permute.xlu0 %3949
  %3952 = vset.pattern.permute.xlu0 7
  %3953 = vperm.xlu0 %3952, %v3661
  %v3954 = vpop.permute.xlu0 %3953
  %3956 = vset.pattern.permute.xlu0 7
  %3957 = vperm.xlu0 %3956, %v3662
  %v3958 = vpop.permute.xlu0 %3957
  %3960 = vset.pattern.permute.xlu0 7
  %3961 = vperm.xlu0 %3960, %v3663
  %v3962 = vpop.permute.xlu0 %3961
  %v3964 = vmul.f32 %v3944, %v3950
  %v3965 = vmul.f32 %v3945, %v3954
  %v3966 = vmul.f32 %v3946, %v3958
  %v3967 = vmul.f32 %v3947, %v3962
  %v3968 = vadd.f32 %v3928, %v3964
  %v3969 = vadd.f32 %v3929, %v3965
  %v3970 = vadd.f32 %v3930, %v3966
  %v3971 = vadd.f32 %v3931, %v3967
  %3972 = vrot.lane.b32.xlu0 %v3656, 119
  %v3973 = vpop.permute.xlu0 %3972
  %3974 = vrot.lane.b32.xlu0 %v3657, 119
  %v3975 = vpop.permute.xlu0 %3974
  %3976 = vrot.lane.b32.xlu0 %v3658, 119
  %v3977 = vpop.permute.xlu0 %3976
  %3978 = vrot.lane.b32.xlu0 %v3659, 119
  %v3979 = vpop.permute.xlu0 %3978
  %v3984 = vsel %vm809, %v3973, 0.0
  %v3985 = vsel %vm809, %v3975, 0.0
  %v3986 = vsel %vm809, %v3977, 0.0
  %v3987 = vsel %vm809, %v3979, 0.0
  %3988 = vset.pattern.permute.xlu0 8
  %3989 = vperm.xlu0 %3988, %v3660
  %v3990 = vpop.permute.xlu0 %3989
  %3992 = vset.pattern.permute.xlu0 8
  %3993 = vperm.xlu0 %3992, %v3661
  %v3994 = vpop.permute.xlu0 %3993
  %3996 = vset.pattern.permute.xlu0 8
  %3997 = vperm.xlu0 %3996, %v3662
  %v3998 = vpop.permute.xlu0 %3997
  %4000 = vset.pattern.permute.xlu0 8
  %4001 = vperm.xlu0 %4000, %v3663
  %v4002 = vpop.permute.xlu0 %4001
  %v4004 = vmul.f32 %v3984, %v3990
  %v4005 = vmul.f32 %v3985, %v3994
  %v4006 = vmul.f32 %v3986, %v3998
  %v4007 = vmul.f32 %v3987, %v4002
  %v4008 = vadd.f32 %v3968, %v4004
  %v4009 = vadd.f32 %v3969, %v4005
  %v4010 = vadd.f32 %v3970, %v4006
  %v4011 = vadd.f32 %v3971, %v4007
  %4012 = vadd.xlane.f32.xlu0 %v4008
  %v4013 = vpop.xlane.xlu0 %4012
  %4014 = vadd.xlane.f32.xlu0 %v4009
  %v4015 = vpop.xlane.xlu0 %4014
  %4016 = vadd.xlane.f32.xlu0 %v4010
  %v4017 = vpop.xlane.xlu0 %4016
  %4018 = vadd.xlane.f32.xlu0 %v4011
  %v4019 = vpop.xlane.xlu0 %4018
  %v4020 = vmul.f32 %v4013, 0.0078125
  %v4021 = vmul.f32 %v4015, 0.0078125
  %v4022 = vmul.f32 %v4017, 0.0078125
  %v4023 = vmul.f32 %v4019, 0.0078125
  %v4024 = vsub.f32 %v4008, %v4020
  %v4025 = vsub.f32 %v4009, %v4021
  %v4026 = vsub.f32 %v4010, %v4022
  %v4027 = vsub.f32 %v4011, %v4023
  %v4028 = vmul.f32 %v4024, %v4024
  %v4029 = vmul.f32 %v4025, %v4025
  %v4030 = vmul.f32 %v4026, %v4026
  %v4031 = vmul.f32 %v4027, %v4027
  %4032 = vadd.xlane.f32.xlu0 %v4028
  %v4033 = vpop.xlane.xlu0 %4032
  %4034 = vadd.xlane.f32.xlu0 %v4029
  %v4035 = vpop.xlane.xlu0 %4034
  %4036 = vadd.xlane.f32.xlu0 %v4030
  %v4037 = vpop.xlane.xlu0 %4036
  %4038 = vadd.xlane.f32.xlu0 %v4031
  %v4039 = vpop.xlane.xlu0 %4038
  %v4040 = vmul.f32 %v4033, 0.0078125
  %v4041 = vmul.f32 %v4035, 0.0078125
  %v4042 = vmul.f32 %v4037, 0.0078125
  %v4043 = vmul.f32 %v4039, 0.0078125
  %v4044 = vadd.f32 %v4040, 1e-05
  %v4045 = vadd.f32 %v4041, 1e-05
  %v4046 = vadd.f32 %v4042, 1e-05
  %v4047 = vadd.f32 %v4043, 1e-05
  %v4048 = vrsqrt.pop %v4044
  %v4049 = vrsqrt.pop %v4045
  %v4050 = vrsqrt.pop %v4046
  %v4051 = vrsqrt.pop %v4047
  %v4052 = vmul.f32 %v39, %v4048
  %v4053 = vmul.f32 %v40, %v4049
  %v4054 = vmul.f32 %v41, %v4050
  %v4055 = vmul.f32 %v42, %v4051
  %4057 = vset.pattern.permute.xlu0 6
  %4058 = vperm.xlu0 %4057, %v4052
  %v4059 = vpop.permute.xlu0 %4058
  %4062 = vset.pattern.permute.xlu0 6
  %4063 = vperm.xlu0 %4062, %v4053
  %v4064 = vpop.permute.xlu0 %4063
  %4067 = vset.pattern.permute.xlu0 6
  %4068 = vperm.xlu0 %4067, %v4054
  %v4069 = vpop.permute.xlu0 %4068
  %4072 = vset.pattern.permute.xlu0 6
  %4073 = vperm.xlu0 %4072, %v4055
  %v4074 = vpop.permute.xlu0 %4073
  %v4076 = vmul.f32 %v4024, %v4059
  %v4077 = vmul.f32 %v4025, %v4064
  %v4078 = vmul.f32 %v4026, %v4069
  %v4079 = vmul.f32 %v4027, %v4074
  %4080 = vset.pattern.permute.xlu0 7
  %4081 = vperm.xlu0 %4080, %v39
  %v4082 = vpop.permute.xlu0 %4081
  %4084 = vset.pattern.permute.xlu0 7
  %4085 = vperm.xlu0 %4084, %v40
  %v4086 = vpop.permute.xlu0 %4085
  %4088 = vset.pattern.permute.xlu0 7
  %4089 = vperm.xlu0 %4088, %v41
  %v4090 = vpop.permute.xlu0 %4089
  %4092 = vset.pattern.permute.xlu0 7
  %4093 = vperm.xlu0 %4092, %v42
  %v4094 = vpop.permute.xlu0 %4093
  %v4096 = vadd.f32 %v4076, %v4082
  %v4097 = vadd.f32 %v4077, %v4086
  %v4098 = vadd.f32 %v4078, %v4090
  %v4099 = vadd.f32 %v4079, %v4094
  %v4100 = vmax.f32 %v4096, 0.0
  %v4101 = vmax.f32 %v4097, 0.0
  %v4102 = vmax.f32 %v4098, 0.0
  %v4103 = vmax.f32 %v4099, 0.0
  %v4104 = vld [vmem:[%s6] sm:$0xff]
  %v4105 = vld [vmem:[%s6 + $0x8] sm:$0xff]
  %v4106 = vld [vmem:[%s6 + $0x10] sm:$0xff]
  %v4107 = vld [vmem:[%s6 + $0x18] sm:$0xff]
  %4112 = vrot.lane.b32.xlu0 %v4100, 9
  %v4113 = vpop.permute.xlu0 %4112
  %4114 = vrot.lane.b32.xlu0 %v4101, 9
  %v4115 = vpop.permute.xlu0 %4114
  %4116 = vrot.lane.b32.xlu0 %v4102, 9
  %v4117 = vpop.permute.xlu0 %4116
  %4118 = vrot.lane.b32.xlu0 %v4103, 9
  %v4119 = vpop.permute.xlu0 %4118
  %v4124 = vsel %vm54, %v4113, 0.0
  %v4125 = vsel %vm54, %v4115, 0.0
  %v4126 = vsel %vm54, %v4117, 0.0
  %v4127 = vsel %vm54, %v4119, 0.0
  %4129 = vset.pattern.permute.xlu0 0
  %4130 = vperm.xlu0 %4129, %v4104
  %v4131 = vpop.permute.xlu0 %4130
  %4134 = vset.pattern.permute.xlu0 0
  %4135 = vperm.xlu0 %4134, %v4105
  %v4136 = vpop.permute.xlu0 %4135
  %4139 = vset.pattern.permute.xlu0 0
  %4140 = vperm.xlu0 %4139, %v4106
  %v4141 = vpop.permute.xlu0 %4140
  %4144 = vset.pattern.permute.xlu0 0
  %4145 = vperm.xlu0 %4144, %v4107
  %v4146 = vpop.permute.xlu0 %4145
  %v4148 = vmul.f32 %v4124, %v4131
  %v4149 = vmul.f32 %v4125, %v4136
  %v4150 = vmul.f32 %v4126, %v4141
  %v4151 = vmul.f32 %v4127, %v4146
  %4152 = vrot.lane.b32.xlu0 %v4100, 8
  %v4153 = vpop.permute.xlu0 %4152
  %4154 = vrot.lane.b32.xlu0 %v4101, 8
  %v4155 = vpop.permute.xlu0 %4154
  %4156 = vrot.lane.b32.xlu0 %v4102, 8
  %v4157 = vpop.permute.xlu0 %4156
  %4158 = vrot.lane.b32.xlu0 %v4103, 8
  %v4159 = vpop.permute.xlu0 %4158
  %v4164 = vsel %vm68, %v4153, 0.0
  %v4165 = vsel %vm68, %v4155, 0.0
  %v4166 = vsel %vm68, %v4157, 0.0
  %v4167 = vsel %vm68, %v4159, 0.0
  %4168 = vset.pattern.permute.xlu0 1
  %4169 = vperm.xlu0 %4168, %v4104
  %v4170 = vpop.permute.xlu0 %4169
  %4172 = vset.pattern.permute.xlu0 1
  %4173 = vperm.xlu0 %4172, %v4105
  %v4174 = vpop.permute.xlu0 %4173
  %4176 = vset.pattern.permute.xlu0 1
  %4177 = vperm.xlu0 %4176, %v4106
  %v4178 = vpop.permute.xlu0 %4177
  %4180 = vset.pattern.permute.xlu0 1
  %4181 = vperm.xlu0 %4180, %v4107
  %v4182 = vpop.permute.xlu0 %4181
  %v4184 = vmul.f32 %v4164, %v4170
  %v4185 = vmul.f32 %v4165, %v4174
  %v4186 = vmul.f32 %v4166, %v4178
  %v4187 = vmul.f32 %v4167, %v4182
  %v4188 = vadd.f32 %v4148, %v4184
  %v4189 = vadd.f32 %v4149, %v4185
  %v4190 = vadd.f32 %v4150, %v4186
  %v4191 = vadd.f32 %v4151, %v4187
  %4192 = vrot.lane.b32.xlu0 %v4100, 7
  %v4193 = vpop.permute.xlu0 %4192
  %4194 = vrot.lane.b32.xlu0 %v4101, 7
  %v4195 = vpop.permute.xlu0 %4194
  %4196 = vrot.lane.b32.xlu0 %v4102, 7
  %v4197 = vpop.permute.xlu0 %4196
  %4198 = vrot.lane.b32.xlu0 %v4103, 7
  %v4199 = vpop.permute.xlu0 %4198
  %v4204 = vsel %vm745, %v4193, 0.0
  %v4205 = vsel %vm745, %v4195, 0.0
  %v4206 = vsel %vm745, %v4197, 0.0
  %v4207 = vsel %vm745, %v4199, 0.0
  %4208 = vset.pattern.permute.xlu0 2
  %4209 = vperm.xlu0 %4208, %v4104
  %v4210 = vpop.permute.xlu0 %4209
  %4212 = vset.pattern.permute.xlu0 2
  %4213 = vperm.xlu0 %4212, %v4105
  %v4214 = vpop.permute.xlu0 %4213
  %4216 = vset.pattern.permute.xlu0 2
  %4217 = vperm.xlu0 %4216, %v4106
  %v4218 = vpop.permute.xlu0 %4217
  %4220 = vset.pattern.permute.xlu0 2
  %4221 = vperm.xlu0 %4220, %v4107
  %v4222 = vpop.permute.xlu0 %4221
  %v4224 = vmul.f32 %v4204, %v4210
  %v4225 = vmul.f32 %v4205, %v4214
  %v4226 = vmul.f32 %v4206, %v4218
  %v4227 = vmul.f32 %v4207, %v4222
  %v4228 = vadd.f32 %v4188, %v4224
  %v4229 = vadd.f32 %v4189, %v4225
  %v4230 = vadd.f32 %v4190, %v4226
  %v4231 = vadd.f32 %v4191, %v4227
  %4232 = vrot.lane.b32.xlu0 %v4100, 1
  %v4233 = vpop.permute.xlu0 %4232
  %4234 = vrot.lane.b32.xlu0 %v4101, 1
  %v4235 = vpop.permute.xlu0 %4234
  %4236 = vrot.lane.b32.xlu0 %v4102, 1
  %v4237 = vpop.permute.xlu0 %4236
  %4238 = vrot.lane.b32.xlu0 %v4103, 1
  %v4239 = vpop.permute.xlu0 %4238
  %v4244 = vsel %vm79, %v4233, 0.0
  %v4245 = vsel %vm79, %v4235, 0.0
  %v4246 = vsel %vm79, %v4237, 0.0
  %v4247 = vsel %vm79, %v4239, 0.0
  %4248 = vset.pattern.permute.xlu0 3
  %4249 = vperm.xlu0 %4248, %v4104
  %v4250 = vpop.permute.xlu0 %4249
  %4252 = vset.pattern.permute.xlu0 3
  %4253 = vperm.xlu0 %4252, %v4105
  %v4254 = vpop.permute.xlu0 %4253
  %4256 = vset.pattern.permute.xlu0 3
  %4257 = vperm.xlu0 %4256, %v4106
  %v4258 = vpop.permute.xlu0 %4257
  %4260 = vset.pattern.permute.xlu0 3
  %4261 = vperm.xlu0 %4260, %v4107
  %v4262 = vpop.permute.xlu0 %4261
  %v4264 = vmul.f32 %v4244, %v4250
  %v4265 = vmul.f32 %v4245, %v4254
  %v4266 = vmul.f32 %v4246, %v4258
  %v4267 = vmul.f32 %v4247, %v4262
  %v4268 = vadd.f32 %v4228, %v4264
  %v4269 = vadd.f32 %v4229, %v4265
  %v4270 = vadd.f32 %v4230, %v4266
  %v4271 = vadd.f32 %v4231, %v4267
  %4272 = vset.pattern.permute.xlu0 4
  %4273 = vperm.xlu0 %4272, %v4104
  %v4274 = vpop.permute.xlu0 %4273
  %4276 = vset.pattern.permute.xlu0 4
  %4277 = vperm.xlu0 %4276, %v4105
  %v4278 = vpop.permute.xlu0 %4277
  %4280 = vset.pattern.permute.xlu0 4
  %4281 = vperm.xlu0 %4280, %v4106
  %v4282 = vpop.permute.xlu0 %4281
  %4284 = vset.pattern.permute.xlu0 4
  %4285 = vperm.xlu0 %4284, %v4107
  %v4286 = vpop.permute.xlu0 %4285
  %v4288 = vmul.f32 %v4100, %v4274
  %v4289 = vmul.f32 %v4101, %v4278
  %v4290 = vmul.f32 %v4102, %v4282
  %v4291 = vmul.f32 %v4103, %v4286
  %v4292 = vadd.f32 %v4268, %v4288
  %v4293 = vadd.f32 %v4269, %v4289
  %v4294 = vadd.f32 %v4270, %v4290
  %v4295 = vadd.f32 %v4271, %v4291
  %4296 = vrot.lane.b32.xlu0 %v4100, 127
  %v4297 = vpop.permute.xlu0 %4296
  %4298 = vrot.lane.b32.xlu0 %v4101, 127
  %v4299 = vpop.permute.xlu0 %4298
  %4300 = vrot.lane.b32.xlu0 %v4102, 127
  %v4301 = vpop.permute.xlu0 %4300
  %4302 = vrot.lane.b32.xlu0 %v4103, 127
  %v4303 = vpop.permute.xlu0 %4302
  %v4308 = vsel %vm767, %v4297, 0.0
  %v4309 = vsel %vm767, %v4299, 0.0
  %v4310 = vsel %vm767, %v4301, 0.0
  %v4311 = vsel %vm767, %v4303, 0.0
  %4312 = vset.pattern.permute.xlu0 5
  %4313 = vperm.xlu0 %4312, %v4104
  %v4314 = vpop.permute.xlu0 %4313
  %4316 = vset.pattern.permute.xlu0 5
  %4317 = vperm.xlu0 %4316, %v4105
  %v4318 = vpop.permute.xlu0 %4317
  %4320 = vset.pattern.permute.xlu0 5
  %4321 = vperm.xlu0 %4320, %v4106
  %v4322 = vpop.permute.xlu0 %4321
  %4324 = vset.pattern.permute.xlu0 5
  %4325 = vperm.xlu0 %4324, %v4107
  %v4326 = vpop.permute.xlu0 %4325
  %v4328 = vmul.f32 %v4308, %v4314
  %v4329 = vmul.f32 %v4309, %v4318
  %v4330 = vmul.f32 %v4310, %v4322
  %v4331 = vmul.f32 %v4311, %v4326
  %v4332 = vadd.f32 %v4292, %v4328
  %v4333 = vadd.f32 %v4293, %v4329
  %v4334 = vadd.f32 %v4294, %v4330
  %v4335 = vadd.f32 %v4295, %v4331
  %4336 = vrot.lane.b32.xlu0 %v4100, 121
  %v4337 = vpop.permute.xlu0 %4336
  %4338 = vrot.lane.b32.xlu0 %v4101, 121
  %v4339 = vpop.permute.xlu0 %4338
  %4340 = vrot.lane.b32.xlu0 %v4102, 121
  %v4341 = vpop.permute.xlu0 %4340
  %4342 = vrot.lane.b32.xlu0 %v4103, 121
  %v4343 = vpop.permute.xlu0 %4342
  %v4348 = vsel %vm781, %v4337, 0.0
  %v4349 = vsel %vm781, %v4339, 0.0
  %v4350 = vsel %vm781, %v4341, 0.0
  %v4351 = vsel %vm781, %v4343, 0.0
  %4352 = vset.pattern.permute.xlu0 6
  %4353 = vperm.xlu0 %4352, %v4104
  %v4354 = vpop.permute.xlu0 %4353
  %4356 = vset.pattern.permute.xlu0 6
  %4357 = vperm.xlu0 %4356, %v4105
  %v4358 = vpop.permute.xlu0 %4357
  %4360 = vset.pattern.permute.xlu0 6
  %4361 = vperm.xlu0 %4360, %v4106
  %v4362 = vpop.permute.xlu0 %4361
  %4364 = vset.pattern.permute.xlu0 6
  %4365 = vperm.xlu0 %4364, %v4107
  %v4366 = vpop.permute.xlu0 %4365
  %v4368 = vmul.f32 %v4348, %v4354
  %v4369 = vmul.f32 %v4349, %v4358
  %v4370 = vmul.f32 %v4350, %v4362
  %v4371 = vmul.f32 %v4351, %v4366
  %v4372 = vadd.f32 %v4332, %v4368
  %v4373 = vadd.f32 %v4333, %v4369
  %v4374 = vadd.f32 %v4334, %v4370
  %v4375 = vadd.f32 %v4335, %v4371
  %4376 = vrot.lane.b32.xlu0 %v4100, 120
  %v4377 = vpop.permute.xlu0 %4376
  %4378 = vrot.lane.b32.xlu0 %v4101, 120
  %v4379 = vpop.permute.xlu0 %4378
  %4380 = vrot.lane.b32.xlu0 %v4102, 120
  %v4381 = vpop.permute.xlu0 %4380
  %4382 = vrot.lane.b32.xlu0 %v4103, 120
  %v4383 = vpop.permute.xlu0 %4382
  %v4388 = vsel %vm795, %v4377, 0.0
  %v4389 = vsel %vm795, %v4379, 0.0
  %v4390 = vsel %vm795, %v4381, 0.0
  %v4391 = vsel %vm795, %v4383, 0.0
  %4392 = vset.pattern.permute.xlu0 7
  %4393 = vperm.xlu0 %4392, %v4104
  %v4394 = vpop.permute.xlu0 %4393
  %4396 = vset.pattern.permute.xlu0 7
  %4397 = vperm.xlu0 %4396, %v4105
  %v4398 = vpop.permute.xlu0 %4397
  %4400 = vset.pattern.permute.xlu0 7
  %4401 = vperm.xlu0 %4400, %v4106
  %v4402 = vpop.permute.xlu0 %4401
  %4404 = vset.pattern.permute.xlu0 7
  %4405 = vperm.xlu0 %4404, %v4107
  %v4406 = vpop.permute.xlu0 %4405
  %v4408 = vmul.f32 %v4388, %v4394
  %v4409 = vmul.f32 %v4389, %v4398
  %v4410 = vmul.f32 %v4390, %v4402
  %v4411 = vmul.f32 %v4391, %v4406
  %v4412 = vadd.f32 %v4372, %v4408
  %v4413 = vadd.f32 %v4373, %v4409
  %v4414 = vadd.f32 %v4374, %v4410
  %v4415 = vadd.f32 %v4375, %v4411
  %4416 = vrot.lane.b32.xlu0 %v4100, 119
  %v4417 = vpop.permute.xlu0 %4416
  %4418 = vrot.lane.b32.xlu0 %v4101, 119
  %v4419 = vpop.permute.xlu0 %4418
  %4420 = vrot.lane.b32.xlu0 %v4102, 119
  %v4421 = vpop.permute.xlu0 %4420
  %4422 = vrot.lane.b32.xlu0 %v4103, 119
  %v4423 = vpop.permute.xlu0 %4422
  %v4428 = vsel %vm809, %v4417, 0.0
  %v4429 = vsel %vm809, %v4419, 0.0
  %v4430 = vsel %vm809, %v4421, 0.0
  %v4431 = vsel %vm809, %v4423, 0.0
  %4432 = vset.pattern.permute.xlu0 8
  %4433 = vperm.xlu0 %4432, %v4104
  %v4434 = vpop.permute.xlu0 %4433
  %4436 = vset.pattern.permute.xlu0 8
  %4437 = vperm.xlu0 %4436, %v4105
  %v4438 = vpop.permute.xlu0 %4437
  %4440 = vset.pattern.permute.xlu0 8
  %4441 = vperm.xlu0 %4440, %v4106
  %v4442 = vpop.permute.xlu0 %4441
  %4444 = vset.pattern.permute.xlu0 8
  %4445 = vperm.xlu0 %4444, %v4107
  %v4446 = vpop.permute.xlu0 %4445
  %v4448 = vmul.f32 %v4428, %v4434
  %v4449 = vmul.f32 %v4429, %v4438
  %v4450 = vmul.f32 %v4430, %v4442
  %v4451 = vmul.f32 %v4431, %v4446
  %v4452 = vadd.f32 %v4412, %v4448
  %v4453 = vadd.f32 %v4413, %v4449
  %v4454 = vadd.f32 %v4414, %v4450
  %v4455 = vadd.f32 %v4415, %v4451
  %4456 = vadd.xlane.f32.xlu0 %v4452
  %v4457 = vpop.xlane.xlu0 %4456
  %4458 = vadd.xlane.f32.xlu0 %v4453
  %v4459 = vpop.xlane.xlu0 %4458
  %4460 = vadd.xlane.f32.xlu0 %v4454
  %v4461 = vpop.xlane.xlu0 %4460
  %4462 = vadd.xlane.f32.xlu0 %v4455
  %v4463 = vpop.xlane.xlu0 %4462
  %v4464 = vmul.f32 %v4457, 0.0078125
  %v4465 = vmul.f32 %v4459, 0.0078125
  %v4466 = vmul.f32 %v4461, 0.0078125
  %v4467 = vmul.f32 %v4463, 0.0078125
  %v4468 = vsub.f32 %v4452, %v4464
  %v4469 = vsub.f32 %v4453, %v4465
  %v4470 = vsub.f32 %v4454, %v4466
  %v4471 = vsub.f32 %v4455, %v4467
  %v4472 = vmul.f32 %v4468, %v4468
  %v4473 = vmul.f32 %v4469, %v4469
  %v4474 = vmul.f32 %v4470, %v4470
  %v4475 = vmul.f32 %v4471, %v4471
  %4476 = vadd.xlane.f32.xlu0 %v4472
  %v4477 = vpop.xlane.xlu0 %4476
  %4478 = vadd.xlane.f32.xlu0 %v4473
  %v4479 = vpop.xlane.xlu0 %4478
  %4480 = vadd.xlane.f32.xlu0 %v4474
  %v4481 = vpop.xlane.xlu0 %4480
  %4482 = vadd.xlane.f32.xlu0 %v4475
  %v4483 = vpop.xlane.xlu0 %4482
  %v4484 = vmul.f32 %v4477, 0.0078125
  %v4485 = vmul.f32 %v4479, 0.0078125
  %v4486 = vmul.f32 %v4481, 0.0078125
  %v4487 = vmul.f32 %v4483, 0.0078125
  %v4488 = vadd.f32 %v4484, 1e-05
  %v4489 = vadd.f32 %v4485, 1e-05
  %v4490 = vadd.f32 %v4486, 1e-05
  %v4491 = vadd.f32 %v4487, 1e-05
  %v4492 = vrsqrt.pop %v4488
  %v4493 = vrsqrt.pop %v4489
  %v4494 = vrsqrt.pop %v4490
  %v4495 = vrsqrt.pop %v4491
  %v4496 = vmul.f32 %v39, %v4492
  %v4497 = vmul.f32 %v40, %v4493
  %v4498 = vmul.f32 %v41, %v4494
  %v4499 = vmul.f32 %v42, %v4495
  %4501 = vset.pattern.permute.xlu0 8
  %4502 = vperm.xlu0 %4501, %v4496
  %v4503 = vpop.permute.xlu0 %4502
  %4506 = vset.pattern.permute.xlu0 8
  %4507 = vperm.xlu0 %4506, %v4497
  %v4508 = vpop.permute.xlu0 %4507
  %4511 = vset.pattern.permute.xlu0 8
  %4512 = vperm.xlu0 %4511, %v4498
  %v4513 = vpop.permute.xlu0 %4512
  %4516 = vset.pattern.permute.xlu0 8
  %4517 = vperm.xlu0 %4516, %v4499
  %v4518 = vpop.permute.xlu0 %4517
  %v4520 = vmul.f32 %v4468, %v4503
  %v4521 = vmul.f32 %v4469, %v4508
  %v4522 = vmul.f32 %v4470, %v4513
  %v4523 = vmul.f32 %v4471, %v4518
  %4524 = vset.pattern.permute.xlu0 9
  %4525 = vperm.xlu0 %4524, %v39
  %v4526 = vpop.permute.xlu0 %4525
  %4528 = vset.pattern.permute.xlu0 9
  %4529 = vperm.xlu0 %4528, %v40
  %v4530 = vpop.permute.xlu0 %4529
  %4532 = vset.pattern.permute.xlu0 9
  %4533 = vperm.xlu0 %4532, %v41
  %v4534 = vpop.permute.xlu0 %4533
  %4536 = vset.pattern.permute.xlu0 9
  %4537 = vperm.xlu0 %4536, %v42
  %v4538 = vpop.permute.xlu0 %4537
  %v4540 = vadd.f32 %v4520, %v4526
  %v4541 = vadd.f32 %v4521, %v4530
  %v4542 = vadd.f32 %v4522, %v4534
  %v4543 = vadd.f32 %v4523, %v4538
  %v4544 = vmax.f32 %v4540, 0.0
  %v4545 = vmax.f32 %v4541, 0.0
  %v4546 = vmax.f32 %v4542, 0.0
  %v4547 = vmax.f32 %v4543, 0.0
  %v4548 = vadd.f32 %v4544, %v3656
  %v4549 = vadd.f32 %v4545, %v3657
  %v4550 = vadd.f32 %v4546, %v3658
  %v4551 = vadd.f32 %v4547, %v3659
  %4552 = vst [vmem:[%s8] sm:$0xff] %v4548
  %4553 = vst [vmem:[%s8 + $0x8] sm:$0xff] %v4549
  %4554 = vst [vmem:[%s8 + $0x10] sm:$0xff] %v4550
  %4555 = vst [vmem:[%s8 + $0x18] sm:$0xff] %v4551
  // Predicated region
  $region34: #{stem_forward.1} parent=0 // pred_check
    _
  $region35: #{stem_forward.1} parent=0 // pred_check_branch
    %4557 = sbr.rel (0) target = $region37
  $region36: #{stem_forward.1} parent=0 // pred_region
    _
  $region37: #{stem_forward.1} parent=0 // pred_fallthru
    _
  // Predicated region
  $region38: #{stem_forward.1} parent=0 // pred_check
    _
  $region39: #{stem_forward.1} parent=0 // pred_check_branch
    %4559 = sbr.rel (0) target = $region41
  $region40: #{stem_forward.1} parent=0 // pred_region
    _
  $region41: #{stem_forward.1} parent=0 // pred_fallthru
    _

</llo_original>
